<compile_context>
chip_gen: v6e
topology: v6e:2x2x1
jax: 0.10.0
libtpu: 0.0.40
codegen_flags: <defaults>
</compile_context>

<pallas_src>
import functools

import jax
import jax.numpy as jnp
from jax.experimental import pallas as pl
from jax.experimental.pallas import tpu as pltpu

# ----------------------- synthetic RADIO-like ViT config -----------------------
PATCH = 4                 # radio.model.patch_generator.patch_size
IN_CHANS = 3
EMBED = 32                # radio.model.embed_dim
DEPTH = 4                 # len(radio.model.blocks) -> multilayers = [0,1,2,3], use last
HEADS = 2
HEAD_DIM = EMBED // HEADS
MLP_HIDDEN = 4 * EMBED
NUM_SKIP = 1              # patch_generator.num_skip (cls / summary token)
LN_EPS = 1e-6
IMG = 16                  # example image height/width
NUM_PATCHES = (IMG // PATCH) * (IMG // PATCH)
SEQ = NUM_PATCHES + NUM_SKIP
PDIM = IN_CHANS * PATCH * PATCH


# --------------------------------- helpers ------------------------------------
def _layernorm(x, gamma, beta):
    mu = jnp.mean(x, axis=-1, keepdims=True)
    var = jnp.mean((x - mu) ** 2, axis=-1, keepdims=True)
    return (x - mu) * jax.lax.rsqrt(var + LN_EPS) * gamma + beta


def _gelu(x):
    # TODO(synk): PyTorch nn.GELU defaults to the exact erf form; the tanh
    # approximation is used here (maps cleanly onto the TPU EUP).
    c = 0.7978845608028654  # sqrt(2/pi)
    return 0.5 * x * (1.0 + jnp.tanh(c * (x + 0.044715 * x * x * x)))


def _rep(shape):
    # Replicated (non-batched) operand: full-array block, constant index map.
    n = len(shape)
    return pl.BlockSpec(shape, lambda i, _n=n: (0,) * _n)


# ------------------------------ fused Pallas kernel -----------------------------
def radio_fused_kernel(patches_ref, pw_ref, pb_ref, cls_ref, pos_ref,
                       ln1g_ref, ln1b_ref, wqkv_ref, bqkv_ref,
                       wproj_ref, bproj_ref, ln2g_ref, ln2b_ref,
                       w1_ref, b1_ref, w2_ref, b2_ref,
                       ng_ref, nb_ref, out_ref):
    """Whole forward pass for one batch element; x stays resident on-chip."""
    bf16 = jnp.bfloat16
    f32 = jnp.float32
    D = EMBED

    # ---- patch_generator: linear projection + cls token + pos embed ----
    # patches were zero-padded with one leading row in the wrapper, so this
    # matmul produces a full (S, D) tile in one unmasked slab.
    patches = patches_ref[0]                                           # (S, P)
    emb = jnp.dot(patches.astype(bf16), pw_ref[...],
                  preferred_element_type=f32) + pb_ref[...]            # (S, D)
    row_ids = jax.lax.broadcasted_iota(jnp.int32, (SEQ, D), 0)
    cls_b = jnp.broadcast_to(cls_ref[...], (SEQ, D))
    x = jnp.where(row_ids < NUM_SKIP, cls_b, emb) + pos_ref[...]       # (S, D)

    scale = 1.0 / (HEAD_DIM ** 0.5)

    # ---- transformer blocks (static unroll; stacked weights indexed by layer) ----
    for l in range(DEPTH):
        # -- multi-head self-attention --
        xh = _layernorm(x, ln1g_ref[l], ln1b_ref[l])
        qkv = jnp.dot(xh.astype(bf16), wqkv_ref[l],
                      preferred_element_type=f32) + bqkv_ref[l]        # (S, 3D)

        heads = []
        for h in range(HEADS):
            q = qkv[:, h * HEAD_DIM:(h + 1) * HEAD_DIM]
            k = qkv[:, D + h * HEAD_DIM:D + (h + 1) * HEAD_DIM]
            v = qkv[:, 2 * D + h * HEAD_DIM:2 * D + (h + 1) * HEAD_DIM]
            # scores = q @ k^T (contract last dims, no explicit transpose)
            s = jax.lax.dot_general(q.astype(bf16), k.astype(bf16),
                                    (((1,), (1,)), ((), ())),
                                    preferred_element_type=f32) * scale
            s = s - jnp.max(s, axis=-1, keepdims=True)
            e = jnp.exp(s)
            p = e * pl.reciprocal(jnp.sum(e, axis=-1, keepdims=True), approx=True)
            heads.append(jnp.dot(p.astype(bf16), v.astype(bf16),
                                 preferred_element_type=f32))          # (S, dh)
        o = jnp.concatenate(heads, axis=-1)                            # (S, D)
        attn = jnp.dot(o.astype(bf16), wproj_ref[l],
                       preferred_element_type=f32) + bproj_ref[l]
        x = x + attn

        # -- MLP --
        xh2 = _layernorm(x, ln2g_ref[l], ln2b_ref[l])
        hid = _gelu(jnp.dot(xh2.astype(bf16), w1_ref[l],
                            preferred_element_type=f32) + b1_ref[l])
        mlp = jnp.dot(hid.astype(bf16), w2_ref[l],
                      preferred_element_type=f32) + b2_ref[l]
        x = x + mlp

    # ---- radio.model.norm on the last block's features ----
    out_ref[0] = _layernorm(x, ng_ref[...], nb_ref[...])


# ------------------------------ Pallas wrapper ----------------------------------
def radio_fused(patches, p):
    B, S, P = patches.shape
    D, Dh = EMBED, MLP_HIDDEN
    return pl.pallas_call(
        radio_fused_kernel,
        out_shape=jax.ShapeDtypeStruct((B, S, D), jnp.float32),
        grid=(B,),
        in_specs=[pl.BlockSpec((1, S, P), lambda i: (i, 0, 0)),
                  _rep((P, D)), _rep((1, D)), _rep((1, D)), _rep((S, D)),
                  _rep((DEPTH, 1, D)), _rep((DEPTH, 1, D)),
                  _rep((DEPTH, D, 3 * D)), _rep((DEPTH, 1, 3 * D)),
                  _rep((DEPTH, D, D)), _rep((DEPTH, 1, D)),
                  _rep((DEPTH, 1, D)), _rep((DEPTH, 1, D)),
                  _rep((DEPTH, D, Dh)), _rep((DEPTH, 1, Dh)),
                  _rep((DEPTH, Dh, D)), _rep((DEPTH, 1, D)),
                  _rep((1, D)), _rep((1, D))],
        out_specs=pl.BlockSpec((1, S, D), lambda i: (i, 0, 0)),
        compiler_params=pltpu.CompilerParams(
            dimension_semantics=("parallel",)),   # batch shards across TCs on v7x
    )(patches,
      p['patch_w'], p['patch_b'], p['cls'], p['pos'],
      p['ln1_g'], p['ln1_b'], p['wqkv'], p['bqkv'],
      p['wproj'], p['bproj'], p['ln2_g'], p['ln2_b'],
      p['w1'], p['b1'], p['w2'], p['b2'],
      p['norm_g'], p['norm_b'])


# ------------------------------- JAX glue ---------------------------------------
def center_padding(images, patch_size):
    _, _, h, w = images.shape
    pad_h = (patch_size - h % patch_size) % patch_size
    pad_w = (patch_size - w % patch_size) % patch_size
    top, left = pad_h // 2, pad_w // 2
    return jnp.pad(images, ((0, 0), (0, 0),
                            (top, pad_h - top), (left, pad_w - left)))


def patchify(images, patch_size):
    # (B, C, H, W) -> (B, num_patches, C*ps*ps)   (Conv2d-with-stride=ps equivalent)
    B, C, H, W = images.shape
    h, w = H // patch_size, W // patch_size
    x = images.reshape(B, C, h, patch_size, w, patch_size)
    x = x.transpose(0, 2, 4, 1, 3, 5)
    return x.reshape(B, h * w, C * patch_size * patch_size)


def radio_forward(params, images, output='dense'):
    images = center_padding(images, PATCH)
    B, _, H, W = images.shape
    h, w = H // PATCH, W // PATCH

    patches = patchify(images, PATCH)                       # (B, N, P)
    # Zero "placeholder" row for the cls position: the kernel's patch matmul then
    # emits a full (S, D) slab and swaps in the cls token with a single select.
    patches = jnp.pad(patches, ((0, 0), (NUM_SKIP, 0), (0, 0)))

    # return_multilayer=False -> only the last block's features are used.
    feats = radio_fused(patches, params)                    # (B, S, D) f32

    summary = feats[:, 0]                                   # (B, D)
    patch_tok = feats[:, NUM_SKIP:]                         # (B, h*w, D)
    D = patch_tok.shape[-1]
    dense = patch_tok.reshape(B, h, w, D)                   # NHWC as long as possible
    dense = dense.transpose(0, 3, 1, 2)                     # NCHW only at the very end
    if output == 'dense-cls':
        cls_map = jnp.broadcast_to(summary[:, :, None, None], dense.shape)
        dense = jnp.concatenate([dense, cls_map], axis=1)
    return dense


# -------------------------- deterministic parameter init ------------------------
def init_params(key):
    keys = jax.random.split(key, 8)
    s = 0.02
    bf16 = jnp.bfloat16

    def nrm(k, shape, dtype=jnp.float32):
        return (s * jax.random.normal(k, shape, dtype=jnp.float32)).astype(dtype)

    # Weight matrices stored bf16 (MXU inputs), biases / LN / embeddings in f32.
    params = {
        'patch_w': nrm(keys[0], (PDIM, EMBED), bf16),
        'patch_b': jnp.zeros((1, EMBED), jnp.float32),
        'cls': nrm(keys[1], (1, EMBED)),
        'pos': nrm(keys[2], (SEQ, EMBED)),
        'norm_g': jnp.ones((1, EMBED), jnp.float32),
        'norm_b': jnp.zeros((1, EMBED), jnp.float32),
        'ln1_g': jnp.ones((DEPTH, 1, EMBED), jnp.float32),
        'ln1_b': jnp.zeros((DEPTH, 1, EMBED), jnp.float32),
        'wqkv': nrm(keys[3], (DEPTH, EMBED, 3 * EMBED), bf16),
        'bqkv': jnp.zeros((DEPTH, 1, 3 * EMBED), jnp.float32),
        'wproj': nrm(keys[4], (DEPTH, EMBED, EMBED), bf16),
        'bproj': jnp.zeros((DEPTH, 1, EMBED), jnp.float32),
        'ln2_g': jnp.ones((DEPTH, 1, EMBED), jnp.float32),
        'ln2_b': jnp.zeros((DEPTH, 1, EMBED), jnp.float32),
        'w1': nrm(keys[5], (DEPTH, EMBED, MLP_HIDDEN), bf16),
        'b1': jnp.zeros((DEPTH, 1, MLP_HIDDEN), jnp.float32),
        'w2': nrm(keys[6], (DEPTH, MLP_HIDDEN, EMBED), bf16),
        'b2': jnp.zeros((DEPTH, 1, EMBED), jnp.float32),
    }
    return params


# ------------------------------------ main ---------------------------------------
if __name__ == "__main__":
    root = jax.random.PRNGKey(0)
    k_params, k_img = jax.random.split(root)

    params = init_params(k_params)
    images = jax.random.normal(k_img, (2, IN_CHANS, IMG, IMG), dtype=jnp.float32)

    fwd = jax.jit(functools.partial(radio_forward, output='dense'))
    out = fwd(params, images)
    out = jax.block_until_ready(out)

    expected_shape = (2, EMBED, IMG // PATCH, IMG // PATCH)
    assert out.shape == expected_shape, (out.shape, expected_shape)
    assert bool(jnp.all(jnp.isfinite(out)))
    print("KERNEL_OK")
</pallas_src>

<mosaic_0001>
module attributes {stable_mosaic.version = 11 : i64} {
  func.func @radio_fused_kernel(%arg0: i32, %arg1: memref<1x17x48xf32, #tpu.memory_space<vmem>>, %arg2: memref<48x32xbf16, #tpu.memory_space<vmem>>, %arg3: memref<1x32xf32, #tpu.memory_space<vmem>>, %arg4: memref<1x32xf32, #tpu.memory_space<vmem>>, %arg5: memref<17x32xf32, #tpu.memory_space<vmem>>, %arg6: memref<4x1x32xf32, #tpu.memory_space<vmem>>, %arg7: memref<4x1x32xf32, #tpu.memory_space<vmem>>, %arg8: memref<4x32x96xbf16, #tpu.memory_space<vmem>>, %arg9: memref<4x1x96xf32, #tpu.memory_space<vmem>>, %arg10: memref<4x32x32xbf16, #tpu.memory_space<vmem>>, %arg11: memref<4x1x32xf32, #tpu.memory_space<vmem>>, %arg12: memref<4x1x32xf32, #tpu.memory_space<vmem>>, %arg13: memref<4x1x32xf32, #tpu.memory_space<vmem>>, %arg14: memref<4x32x128xbf16, #tpu.memory_space<vmem>>, %arg15: memref<4x1x128xf32, #tpu.memory_space<vmem>>, %arg16: memref<4x128x32xbf16, #tpu.memory_space<vmem>>, %arg17: memref<4x1x32xf32, #tpu.memory_space<vmem>>, %arg18: memref<1x32xf32, #tpu.memory_space<vmem>>, %arg19: memref<1x32xf32, #tpu.memory_space<vmem>>, %arg20: memref<1x17x32xf32, #tpu.memory_space<vmem>>) attributes {dimension_semantics = [#tpu.dimension_semantics<parallel>], iteration_bounds = array<i64: 2>, scalar_prefetch = 0 : i64, scratch_operands = 0 : i64, tpu.core_type = #tpu.core_type<tc>, window_params = [{transform_indices = @transform_0, window_bounds = array<i64: 1, 17, 48>}, {pipeline_mode = #tpu.pipeline_mode<synchronous>, transform_indices = @transform_1, window_bounds = array<i64: 48, 32>}, {pipeline_mode = #tpu.pipeline_mode<synchronous>, transform_indices = @transform_2, window_bounds = array<i64: 1, 32>}, {pipeline_mode = #tpu.pipeline_mode<synchronous>, transform_indices = @transform_3, window_bounds = array<i64: 1, 32>}, {pipeline_mode = #tpu.pipeline_mode<synchronous>, transform_indices = @transform_4, window_bounds = array<i64: 17, 32>}, {pipeline_mode = #tpu.pipeline_mode<synchronous>, transform_indices = @transform_5, window_bounds = array<i64: 4, 1, 32>}, {pipeline_mode = #tpu.pipeline_mode<synchronous>, transform_indices = @transform_6, window_bounds = array<i64: 4, 1, 32>}, {pipeline_mode = #tpu.pipeline_mode<synchronous>, transform_indices = @transform_7, window_bounds = array<i64: 4, 32, 96>}, {pipeline_mode = #tpu.pipeline_mode<synchronous>, transform_indices = @transform_8, window_bounds = array<i64: 4, 1, 96>}, {pipeline_mode = #tpu.pipeline_mode<synchronous>, transform_indices = @transform_9, window_bounds = array<i64: 4, 32, 32>}, {pipeline_mode = #tpu.pipeline_mode<synchronous>, transform_indices = @transform_10, window_bounds = array<i64: 4, 1, 32>}, {pipeline_mode = #tpu.pipeline_mode<synchronous>, transform_indices = @transform_11, window_bounds = array<i64: 4, 1, 32>}, {pipeline_mode = #tpu.pipeline_mode<synchronous>, transform_indices = @transform_12, window_bounds = array<i64: 4, 1, 32>}, {pipeline_mode = #tpu.pipeline_mode<synchronous>, transform_indices = @transform_13, window_bounds = array<i64: 4, 32, 128>}, {pipeline_mode = #tpu.pipeline_mode<synchronous>, transform_indices = @transform_14, window_bounds = array<i64: 4, 1, 128>}, {pipeline_mode = #tpu.pipeline_mode<synchronous>, transform_indices = @transform_15, window_bounds = array<i64: 4, 128, 32>}, {pipeline_mode = #tpu.pipeline_mode<synchronous>, transform_indices = @transform_16, window_bounds = array<i64: 4, 1, 32>}, {pipeline_mode = #tpu.pipeline_mode<synchronous>, transform_indices = @transform_17, window_bounds = array<i64: 1, 32>}, {pipeline_mode = #tpu.pipeline_mode<synchronous>, transform_indices = @transform_18, window_bounds = array<i64: 1, 32>}, {transform_indices = @transform_19, window_bounds = array<i64: 1, 17, 32>}]} {
    %c0 = arith.constant 0 : index
    %c0_0 = arith.constant 0 : index
    %c0_1 = arith.constant 0 : index
    %0 = vector.load %arg1[%c0, %c0_0, %c0_1] : memref<1x17x48xf32, #tpu.memory_space<vmem>>, vector<1x17x48xf32>
    %1 = vector.shape_cast %0 : vector<1x17x48xf32> to vector<17x48xf32>
    %2 = arith.truncf %1 : vector<17x48xf32> to vector<17x48xbf16>
    %c0_2 = arith.constant 0 : index
    %c0_3 = arith.constant 0 : index
    %3 = vector.load %arg2[%c0_2, %c0_3] : memref<48x32xbf16, #tpu.memory_space<vmem>>, vector<48x32xbf16>
    %cst = arith.constant dense<0.000000e+00> : vector<17x32xf32>
    %4 = tpu.matmul %2, %3, %cst {dimension_numbers = #tpu.dot_dimension_numbers<[1], [0], [0], [1], [0, 0, 1, 1], [], []>} : vector<17x48xbf16>, vector<48x32xbf16>, vector<17x32xf32> -> vector<17x32xf32>
    %c0_4 = arith.constant 0 : index
    %c0_5 = arith.constant 0 : index
    %5 = vector.load %arg3[%c0_4, %c0_5] : memref<1x32xf32, #tpu.memory_space<vmem>>, vector<1x32xf32>
    %6 = vector.broadcast %5 : vector<1x32xf32> to vector<17x32xf32>
    %7 = arith.addf %4, %6 : vector<17x32xf32>
    %8 = tpu.iota {dimensions = array<i32: 0>} : vector<17x32xi32>
    %c0_6 = arith.constant 0 : index
    %c0_7 = arith.constant 0 : index
    %9 = vector.load %arg4[%c0_6, %c0_7] : memref<1x32xf32, #tpu.memory_space<vmem>>, vector<1x32xf32>
    %10 = vector.shape_cast %9 : vector<1x32xf32> to vector<1x32xf32>
    %11 = vector.broadcast %10 : vector<1x32xf32> to vector<17x32xf32>
    %c1_i32 = arith.constant 1 : i32
    %12 = vector.broadcast %c1_i32 : i32 to vector<17x32xi32>
    %13 = arith.cmpi slt, %8, %12 : vector<17x32xi32>
    %14 = arith.select %13, %11, %7 : vector<17x32xi1>, vector<17x32xf32>
    %c0_8 = arith.constant 0 : index
    %c0_9 = arith.constant 0 : index
    %15 = vector.load %arg5[%c0_8, %c0_9] : memref<17x32xf32, #tpu.memory_space<vmem>>, vector<17x32xf32>
    %16 = arith.addf %14, %15 : vector<17x32xf32>
    %c0_10 = arith.constant 0 : index
    %c0_11 = arith.constant 0 : index
    %c0_12 = arith.constant 0 : index
    %17 = vector.load %arg6[%c0_10, %c0_11, %c0_12] : memref<4x1x32xf32, #tpu.memory_space<vmem>>, vector<1x1x32xf32>
    %18 = vector.shape_cast %17 : vector<1x1x32xf32> to vector<1x32xf32>
    %c0_13 = arith.constant 0 : index
    %c0_14 = arith.constant 0 : index
    %c0_15 = arith.constant 0 : index
    %19 = vector.load %arg7[%c0_13, %c0_14, %c0_15] : memref<4x1x32xf32, #tpu.memory_space<vmem>>, vector<1x1x32xf32>
    %20 = vector.shape_cast %19 : vector<1x1x32xf32> to vector<1x32xf32>
    %cst_16 = arith.constant dense<0.000000e+00> : vector<17xf32>
    %21 = vector.multi_reduction <add>, %16, %cst_16 [1] : vector<17x32xf32> to vector<17xf32>
    %22 = vector.shape_cast %21 : vector<17xf32> to vector<17x1xf32>
    %cst_17 = arith.constant 3.200000e+01 : f32
    %23 = vector.broadcast %cst_17 : f32 to vector<17x1xf32>
    %24 = arith.divf %22, %23 : vector<17x1xf32>
    %25 = vector.broadcast %24 : vector<17x1xf32> to vector<17x32xf32>
    %26 = arith.subf %16, %25 : vector<17x32xf32>
    %27 = arith.mulf %26, %26 : vector<17x32xf32>
    %cst_18 = arith.constant dense<0.000000e+00> : vector<17xf32>
    %28 = vector.multi_reduction <add>, %27, %cst_18 [1] : vector<17x32xf32> to vector<17xf32>
    %29 = vector.shape_cast %28 : vector<17xf32> to vector<17x1xf32>
    %cst_19 = arith.constant 3.200000e+01 : f32
    %30 = vector.broadcast %cst_19 : f32 to vector<17x1xf32>
    %31 = arith.divf %29, %30 : vector<17x1xf32>
    %32 = vector.broadcast %24 : vector<17x1xf32> to vector<17x32xf32>
    %33 = arith.subf %16, %32 : vector<17x32xf32>
    %cst_20 = arith.constant 9.99999997E-7 : f32
    %34 = vector.broadcast %cst_20 : f32 to vector<17x1xf32>
    %35 = arith.addf %31, %34 : vector<17x1xf32>
    %36 = math.rsqrt %35 : vector<17x1xf32>
    %37 = vector.broadcast %36 : vector<17x1xf32> to vector<17x32xf32>
    %38 = arith.mulf %33, %37 : vector<17x32xf32>
    %39 = vector.broadcast %18 : vector<1x32xf32> to vector<17x32xf32>
    %40 = arith.mulf %38, %39 : vector<17x32xf32>
    %41 = vector.broadcast %20 : vector<1x32xf32> to vector<17x32xf32>
    %42 = arith.addf %40, %41 : vector<17x32xf32>
    %43 = arith.truncf %42 : vector<17x32xf32> to vector<17x32xbf16>
    %c0_21 = arith.constant 0 : index
    %c0_22 = arith.constant 0 : index
    %c0_23 = arith.constant 0 : index
    %44 = vector.load %arg8[%c0_21, %c0_22, %c0_23] : memref<4x32x96xbf16, #tpu.memory_space<vmem>>, vector<1x32x96xbf16>
    %45 = vector.shape_cast %44 : vector<1x32x96xbf16> to vector<32x96xbf16>
    %cst_24 = arith.constant dense<0.000000e+00> : vector<17x96xf32>
    %46 = tpu.matmul %43, %45, %cst_24 {dimension_numbers = #tpu.dot_dimension_numbers<[1], [0], [0], [1], [0, 0, 1, 1], [], []>} : vector<17x32xbf16>, vector<32x96xbf16>, vector<17x96xf32> -> vector<17x96xf32>
    %c0_25 = arith.constant 0 : index
    %c0_26 = arith.constant 0 : index
    %c0_27 = arith.constant 0 : index
    %47 = vector.load %arg9[%c0_25, %c0_26, %c0_27] : memref<4x1x96xf32, #tpu.memory_space<vmem>>, vector<1x1x96xf32>
    %48 = vector.shape_cast %47 : vector<1x1x96xf32> to vector<1x96xf32>
    %49 = vector.broadcast %48 : vector<1x96xf32> to vector<17x96xf32>
    %50 = arith.addf %46, %49 : vector<17x96xf32>
    %51 = vector.extract_strided_slice %50 {offsets = [0, 0], sizes = [17, 16], strides = [1, 1]} : vector<17x96xf32> to vector<17x16xf32>
    %52 = vector.extract_strided_slice %50 {offsets = [0, 32], sizes = [17, 16], strides = [1, 1]} : vector<17x96xf32> to vector<17x16xf32>
    %53 = vector.extract_strided_slice %50 {offsets = [0, 64], sizes = [17, 16], strides = [1, 1]} : vector<17x96xf32> to vector<17x16xf32>
    %54 = arith.truncf %51 : vector<17x16xf32> to vector<17x16xbf16>
    %55 = arith.truncf %52 : vector<17x16xf32> to vector<17x16xbf16>
    %cst_28 = arith.constant dense<0.000000e+00> : vector<17x17xf32>
    %56 = tpu.matmul %54, %55, %cst_28 {dimension_numbers = #tpu.dot_dimension_numbers<[1], [1], [0], [0], [0, 0, 1, 0], [], []>} : vector<17x16xbf16>, vector<17x16xbf16>, vector<17x17xf32> -> vector<17x17xf32>
    %cst_29 = arith.constant 2.500000e-01 : f32
    %57 = vector.broadcast %cst_29 : f32 to vector<17x17xf32>
    %58 = arith.mulf %56, %57 : vector<17x17xf32>
    %cst_30 = arith.constant dense<0xFF800000> : vector<17xf32>
    %59 = vector.multi_reduction <maximumf>, %58, %cst_30 [1] : vector<17x17xf32> to vector<17xf32>
    %60 = vector.shape_cast %59 : vector<17xf32> to vector<17x1xf32>
    %61 = vector.broadcast %60 : vector<17x1xf32> to vector<17x17xf32>
    %62 = arith.subf %58, %61 : vector<17x17xf32>
    %63 = math.exp %62 : vector<17x17xf32>
    %cst_31 = arith.constant dense<0.000000e+00> : vector<17xf32>
    %64 = vector.multi_reduction <add>, %63, %cst_31 [1] : vector<17x17xf32> to vector<17xf32>
    %65 = vector.shape_cast %64 : vector<17xf32> to vector<17x1xf32>
    %66 = tpu.reciprocal %65 {approx = true} : vector<17x1xf32> -> vector<17x1xf32>
    %67 = vector.broadcast %66 : vector<17x1xf32> to vector<17x17xf32>
    %68 = arith.mulf %63, %67 : vector<17x17xf32>
    %69 = arith.truncf %68 : vector<17x17xf32> to vector<17x17xbf16>
    %70 = arith.truncf %53 : vector<17x16xf32> to vector<17x16xbf16>
    %cst_32 = arith.constant dense<0.000000e+00> : vector<17x16xf32>
    %71 = tpu.matmul %69, %70, %cst_32 {dimension_numbers = #tpu.dot_dimension_numbers<[1], [0], [0], [1], [0, 0, 1, 1], [], []>} : vector<17x17xbf16>, vector<17x16xbf16>, vector<17x16xf32> -> vector<17x16xf32>
    %72 = vector.extract_strided_slice %50 {offsets = [0, 16], sizes = [17, 16], strides = [1, 1]} : vector<17x96xf32> to vector<17x16xf32>
    %73 = vector.extract_strided_slice %50 {offsets = [0, 48], sizes = [17, 16], strides = [1, 1]} : vector<17x96xf32> to vector<17x16xf32>
    %74 = vector.extract_strided_slice %50 {offsets = [0, 80], sizes = [17, 16], strides = [1, 1]} : vector<17x96xf32> to vector<17x16xf32>
    %75 = arith.truncf %72 : vector<17x16xf32> to vector<17x16xbf16>
    %76 = arith.truncf %73 : vector<17x16xf32> to vector<17x16xbf16>
    %cst_33 = arith.constant dense<0.000000e+00> : vector<17x17xf32>
    %77 = tpu.matmul %75, %76, %cst_33 {dimension_numbers = #tpu.dot_dimension_numbers<[1], [1], [0], [0], [0, 0, 1, 0], [], []>} : vector<17x16xbf16>, vector<17x16xbf16>, vector<17x17xf32> -> vector<17x17xf32>
    %cst_34 = arith.constant 2.500000e-01 : f32
    %78 = vector.broadcast %cst_34 : f32 to vector<17x17xf32>
    %79 = arith.mulf %77, %78 : vector<17x17xf32>
    %cst_35 = arith.constant dense<0xFF800000> : vector<17xf32>
    %80 = vector.multi_reduction <maximumf>, %79, %cst_35 [1] : vector<17x17xf32> to vector<17xf32>
    %81 = vector.shape_cast %80 : vector<17xf32> to vector<17x1xf32>
    %82 = vector.broadcast %81 : vector<17x1xf32> to vector<17x17xf32>
    %83 = arith.subf %79, %82 : vector<17x17xf32>
    %84 = math.exp %83 : vector<17x17xf32>
    %cst_36 = arith.constant dense<0.000000e+00> : vector<17xf32>
    %85 = vector.multi_reduction <add>, %84, %cst_36 [1] : vector<17x17xf32> to vector<17xf32>
    %86 = vector.shape_cast %85 : vector<17xf32> to vector<17x1xf32>
    %87 = tpu.reciprocal %86 {approx = true} : vector<17x1xf32> -> vector<17x1xf32>
    %88 = vector.broadcast %87 : vector<17x1xf32> to vector<17x17xf32>
    %89 = arith.mulf %84, %88 : vector<17x17xf32>
    %90 = arith.truncf %89 : vector<17x17xf32> to vector<17x17xbf16>
    %91 = arith.truncf %74 : vector<17x16xf32> to vector<17x16xbf16>
    %cst_37 = arith.constant dense<0.000000e+00> : vector<17x16xf32>
    %92 = tpu.matmul %90, %91, %cst_37 {dimension_numbers = #tpu.dot_dimension_numbers<[1], [0], [0], [1], [0, 0, 1, 1], [], []>} : vector<17x17xbf16>, vector<17x16xbf16>, vector<17x16xf32> -> vector<17x16xf32>
    %93 = tpu.concatenate %71, %92 in 1 : vector<17x16xf32>, vector<17x16xf32> -> vector<17x32xf32>
    %94 = arith.truncf %93 : vector<17x32xf32> to vector<17x32xbf16>
    %c0_38 = arith.constant 0 : index
    %c0_39 = arith.constant 0 : index
    %c0_40 = arith.constant 0 : index
    %95 = vector.load %arg10[%c0_38, %c0_39, %c0_40] : memref<4x32x32xbf16, #tpu.memory_space<vmem>>, vector<1x32x32xbf16>
    %96 = vector.shape_cast %95 : vector<1x32x32xbf16> to vector<32x32xbf16>
    %cst_41 = arith.constant dense<0.000000e+00> : vector<17x32xf32>
    %97 = tpu.matmul %94, %96, %cst_41 {dimension_numbers = #tpu.dot_dimension_numbers<[1], [0], [0], [1], [0, 0, 1, 1], [], []>} : vector<17x32xbf16>, vector<32x32xbf16>, vector<17x32xf32> -> vector<17x32xf32>
    %c0_42 = arith.constant 0 : index
    %c0_43 = arith.constant 0 : index
    %c0_44 = arith.constant 0 : index
    %98 = vector.load %arg11[%c0_42, %c0_43, %c0_44] : memref<4x1x32xf32, #tpu.memory_space<vmem>>, vector<1x1x32xf32>
    %99 = vector.shape_cast %98 : vector<1x1x32xf32> to vector<1x32xf32>
    %100 = vector.broadcast %99 : vector<1x32xf32> to vector<17x32xf32>
    %101 = arith.addf %97, %100 : vector<17x32xf32>
    %102 = arith.addf %16, %101 : vector<17x32xf32>
    %c0_45 = arith.constant 0 : index
    %c0_46 = arith.constant 0 : index
    %c0_47 = arith.constant 0 : index
    %103 = vector.load %arg12[%c0_45, %c0_46, %c0_47] : memref<4x1x32xf32, #tpu.memory_space<vmem>>, vector<1x1x32xf32>
    %104 = vector.shape_cast %103 : vector<1x1x32xf32> to vector<1x32xf32>
    %c0_48 = arith.constant 0 : index
    %c0_49 = arith.constant 0 : index
    %c0_50 = arith.constant 0 : index
    %105 = vector.load %arg13[%c0_48, %c0_49, %c0_50] : memref<4x1x32xf32, #tpu.memory_space<vmem>>, vector<1x1x32xf32>
    %106 = vector.shape_cast %105 : vector<1x1x32xf32> to vector<1x32xf32>
    %cst_51 = arith.constant dense<0.000000e+00> : vector<17xf32>
    %107 = vector.multi_reduction <add>, %102, %cst_51 [1] : vector<17x32xf32> to vector<17xf32>
    %108 = vector.shape_cast %107 : vector<17xf32> to vector<17x1xf32>
    %cst_52 = arith.constant 3.200000e+01 : f32
    %109 = vector.broadcast %cst_52 : f32 to vector<17x1xf32>
    %110 = arith.divf %108, %109 : vector<17x1xf32>
    %111 = vector.broadcast %110 : vector<17x1xf32> to vector<17x32xf32>
    %112 = arith.subf %102, %111 : vector<17x32xf32>
    %113 = arith.mulf %112, %112 : vector<17x32xf32>
    %cst_53 = arith.constant dense<0.000000e+00> : vector<17xf32>
    %114 = vector.multi_reduction <add>, %113, %cst_53 [1] : vector<17x32xf32> to vector<17xf32>
    %115 = vector.shape_cast %114 : vector<17xf32> to vector<17x1xf32>
    %cst_54 = arith.constant 3.200000e+01 : f32
    %116 = vector.broadcast %cst_54 : f32 to vector<17x1xf32>
    %117 = arith.divf %115, %116 : vector<17x1xf32>
    %118 = vector.broadcast %110 : vector<17x1xf32> to vector<17x32xf32>
    %119 = arith.subf %102, %118 : vector<17x32xf32>
    %cst_55 = arith.constant 9.99999997E-7 : f32
    %120 = vector.broadcast %cst_55 : f32 to vector<17x1xf32>
    %121 = arith.addf %117, %120 : vector<17x1xf32>
    %122 = math.rsqrt %121 : vector<17x1xf32>
    %123 = vector.broadcast %122 : vector<17x1xf32> to vector<17x32xf32>
    %124 = arith.mulf %119, %123 : vector<17x32xf32>
    %125 = vector.broadcast %104 : vector<1x32xf32> to vector<17x32xf32>
    %126 = arith.mulf %124, %125 : vector<17x32xf32>
    %127 = vector.broadcast %106 : vector<1x32xf32> to vector<17x32xf32>
    %128 = arith.addf %126, %127 : vector<17x32xf32>
    %129 = arith.truncf %128 : vector<17x32xf32> to vector<17x32xbf16>
    %c0_56 = arith.constant 0 : index
    %c0_57 = arith.constant 0 : index
    %c0_58 = arith.constant 0 : index
    %130 = vector.load %arg14[%c0_56, %c0_57, %c0_58] : memref<4x32x128xbf16, #tpu.memory_space<vmem>>, vector<1x32x128xbf16>
    %131 = vector.shape_cast %130 : vector<1x32x128xbf16> to vector<32x128xbf16>
    %cst_59 = arith.constant dense<0.000000e+00> : vector<17x128xf32>
    %132 = tpu.matmul %129, %131, %cst_59 {dimension_numbers = #tpu.dot_dimension_numbers<[1], [0], [0], [1], [0, 0, 1, 1], [], []>} : vector<17x32xbf16>, vector<32x128xbf16>, vector<17x128xf32> -> vector<17x128xf32>
    %c0_60 = arith.constant 0 : index
    %c0_61 = arith.constant 0 : index
    %c0_62 = arith.constant 0 : index
    %133 = vector.load %arg15[%c0_60, %c0_61, %c0_62] : memref<4x1x128xf32, #tpu.memory_space<vmem>>, vector<1x1x128xf32>
    %134 = vector.shape_cast %133 : vector<1x1x128xf32> to vector<1x128xf32>
    %135 = vector.broadcast %134 : vector<1x128xf32> to vector<17x128xf32>
    %136 = arith.addf %132, %135 : vector<17x128xf32>
    %cst_63 = arith.constant 5.000000e-01 : f32
    %137 = vector.broadcast %cst_63 : f32 to vector<17x128xf32>
    %138 = arith.mulf %137, %136 : vector<17x128xf32>
    %cst_64 = arith.constant 4.471500e-02 : f32
    %139 = vector.broadcast %cst_64 : f32 to vector<17x128xf32>
    %140 = arith.mulf %139, %136 : vector<17x128xf32>
    %141 = arith.mulf %140, %136 : vector<17x128xf32>
    %142 = arith.mulf %141, %136 : vector<17x128xf32>
    %143 = arith.addf %136, %142 : vector<17x128xf32>
    %cst_65 = arith.constant 0.797884583 : f32
    %144 = vector.broadcast %cst_65 : f32 to vector<17x128xf32>
    %145 = arith.mulf %144, %143 : vector<17x128xf32>
    %146 = math.tanh %145 : vector<17x128xf32>
    %cst_66 = arith.constant 1.000000e+00 : f32
    %147 = vector.broadcast %cst_66 : f32 to vector<17x128xf32>
    %148 = arith.addf %147, %146 : vector<17x128xf32>
    %149 = arith.mulf %138, %148 : vector<17x128xf32>
    %150 = arith.truncf %149 : vector<17x128xf32> to vector<17x128xbf16>
    %c0_67 = arith.constant 0 : index
    %c0_68 = arith.constant 0 : index
    %c0_69 = arith.constant 0 : index
    %151 = vector.load %arg16[%c0_67, %c0_68, %c0_69] : memref<4x128x32xbf16, #tpu.memory_space<vmem>>, vector<1x128x32xbf16>
    %152 = vector.shape_cast %151 : vector<1x128x32xbf16> to vector<128x32xbf16>
    %cst_70 = arith.constant dense<0.000000e+00> : vector<17x32xf32>
    %153 = tpu.matmul %150, %152, %cst_70 {dimension_numbers = #tpu.dot_dimension_numbers<[1], [0], [0], [1], [0, 0, 1, 1], [], []>} : vector<17x128xbf16>, vector<128x32xbf16>, vector<17x32xf32> -> vector<17x32xf32>
    %c0_71 = arith.constant 0 : index
    %c0_72 = arith.constant 0 : index
    %c0_73 = arith.constant 0 : index
    %154 = vector.load %arg17[%c0_71, %c0_72, %c0_73] : memref<4x1x32xf32, #tpu.memory_space<vmem>>, vector<1x1x32xf32>
    %155 = vector.shape_cast %154 : vector<1x1x32xf32> to vector<1x32xf32>
    %156 = vector.broadcast %155 : vector<1x32xf32> to vector<17x32xf32>
    %157 = arith.addf %153, %156 : vector<17x32xf32>
    %158 = arith.addf %102, %157 : vector<17x32xf32>
    %c1 = arith.constant 1 : index
    %c0_74 = arith.constant 0 : index
    %c0_75 = arith.constant 0 : index
    %159 = vector.load %arg6[%c1, %c0_74, %c0_75] : memref<4x1x32xf32, #tpu.memory_space<vmem>>, vector<1x1x32xf32>
    %160 = vector.shape_cast %159 : vector<1x1x32xf32> to vector<1x32xf32>
    %c1_76 = arith.constant 1 : index
    %c0_77 = arith.constant 0 : index
    %c0_78 = arith.constant 0 : index
    %161 = vector.load %arg7[%c1_76, %c0_77, %c0_78] : memref<4x1x32xf32, #tpu.memory_space<vmem>>, vector<1x1x32xf32>
    %162 = vector.shape_cast %161 : vector<1x1x32xf32> to vector<1x32xf32>
    %cst_79 = arith.constant dense<0.000000e+00> : vector<17xf32>
    %163 = vector.multi_reduction <add>, %158, %cst_79 [1] : vector<17x32xf32> to vector<17xf32>
    %164 = vector.shape_cast %163 : vector<17xf32> to vector<17x1xf32>
    %cst_80 = arith.constant 3.200000e+01 : f32
    %165 = vector.broadcast %cst_80 : f32 to vector<17x1xf32>
    %166 = arith.divf %164, %165 : vector<17x1xf32>
    %167 = vector.broadcast %166 : vector<17x1xf32> to vector<17x32xf32>
    %168 = arith.subf %158, %167 : vector<17x32xf32>
    %169 = arith.mulf %168, %168 : vector<17x32xf32>
    %cst_81 = arith.constant dense<0.000000e+00> : vector<17xf32>
    %170 = vector.multi_reduction <add>, %169, %cst_81 [1] : vector<17x32xf32> to vector<17xf32>
    %171 = vector.shape_cast %170 : vector<17xf32> to vector<17x1xf32>
    %cst_82 = arith.constant 3.200000e+01 : f32
    %172 = vector.broadcast %cst_82 : f32 to vector<17x1xf32>
    %173 = arith.divf %171, %172 : vector<17x1xf32>
    %174 = vector.broadcast %166 : vector<17x1xf32> to vector<17x32xf32>
    %175 = arith.subf %158, %174 : vector<17x32xf32>
    %cst_83 = arith.constant 9.99999997E-7 : f32
    %176 = vector.broadcast %cst_83 : f32 to vector<17x1xf32>
    %177 = arith.addf %173, %176 : vector<17x1xf32>
    %178 = math.rsqrt %177 : vector<17x1xf32>
    %179 = vector.broadcast %178 : vector<17x1xf32> to vector<17x32xf32>
    %180 = arith.mulf %175, %179 : vector<17x32xf32>
    %181 = vector.broadcast %160 : vector<1x32xf32> to vector<17x32xf32>
    %182 = arith.mulf %180, %181 : vector<17x32xf32>
    %183 = vector.broadcast %162 : vector<1x32xf32> to vector<17x32xf32>
    %184 = arith.addf %182, %183 : vector<17x32xf32>
    %185 = arith.truncf %184 : vector<17x32xf32> to vector<17x32xbf16>
    %c1_84 = arith.constant 1 : index
    %c0_85 = arith.constant 0 : index
    %c0_86 = arith.constant 0 : index
    %186 = vector.load %arg8[%c1_84, %c0_85, %c0_86] : memref<4x32x96xbf16, #tpu.memory_space<vmem>>, vector<1x32x96xbf16>
    %187 = vector.shape_cast %186 : vector<1x32x96xbf16> to vector<32x96xbf16>
    %cst_87 = arith.constant dense<0.000000e+00> : vector<17x96xf32>
    %188 = tpu.matmul %185, %187, %cst_87 {dimension_numbers = #tpu.dot_dimension_numbers<[1], [0], [0], [1], [0, 0, 1, 1], [], []>} : vector<17x32xbf16>, vector<32x96xbf16>, vector<17x96xf32> -> vector<17x96xf32>
    %c1_88 = arith.constant 1 : index
    %c0_89 = arith.constant 0 : index
    %c0_90 = arith.constant 0 : index
    %189 = vector.load %arg9[%c1_88, %c0_89, %c0_90] : memref<4x1x96xf32, #tpu.memory_space<vmem>>, vector<1x1x96xf32>
    %190 = vector.shape_cast %189 : vector<1x1x96xf32> to vector<1x96xf32>
    %191 = vector.broadcast %190 : vector<1x96xf32> to vector<17x96xf32>
    %192 = arith.addf %188, %191 : vector<17x96xf32>
    %193 = vector.extract_strided_slice %192 {offsets = [0, 0], sizes = [17, 16], strides = [1, 1]} : vector<17x96xf32> to vector<17x16xf32>
    %194 = vector.extract_strided_slice %192 {offsets = [0, 32], sizes = [17, 16], strides = [1, 1]} : vector<17x96xf32> to vector<17x16xf32>
    %195 = vector.extract_strided_slice %192 {offsets = [0, 64], sizes = [17, 16], strides = [1, 1]} : vector<17x96xf32> to vector<17x16xf32>
    %196 = arith.truncf %193 : vector<17x16xf32> to vector<17x16xbf16>
    %197 = arith.truncf %194 : vector<17x16xf32> to vector<17x16xbf16>
    %cst_91 = arith.constant dense<0.000000e+00> : vector<17x17xf32>
    %198 = tpu.matmul %196, %197, %cst_91 {dimension_numbers = #tpu.dot_dimension_numbers<[1], [1], [0], [0], [0, 0, 1, 0], [], []>} : vector<17x16xbf16>, vector<17x16xbf16>, vector<17x17xf32> -> vector<17x17xf32>
    %cst_92 = arith.constant 2.500000e-01 : f32
    %199 = vector.broadcast %cst_92 : f32 to vector<17x17xf32>
    %200 = arith.mulf %198, %199 : vector<17x17xf32>
    %cst_93 = arith.constant dense<0xFF800000> : vector<17xf32>
    %201 = vector.multi_reduction <maximumf>, %200, %cst_93 [1] : vector<17x17xf32> to vector<17xf32>
    %202 = vector.shape_cast %201 : vector<17xf32> to vector<17x1xf32>
    %203 = vector.broadcast %202 : vector<17x1xf32> to vector<17x17xf32>
    %204 = arith.subf %200, %203 : vector<17x17xf32>
    %205 = math.exp %204 : vector<17x17xf32>
    %cst_94 = arith.constant dense<0.000000e+00> : vector<17xf32>
    %206 = vector.multi_reduction <add>, %205, %cst_94 [1] : vector<17x17xf32> to vector<17xf32>
    %207 = vector.shape_cast %206 : vector<17xf32> to vector<17x1xf32>
    %208 = tpu.reciprocal %207 {approx = true} : vector<17x1xf32> -> vector<17x1xf32>
    %209 = vector.broadcast %208 : vector<17x1xf32> to vector<17x17xf32>
    %210 = arith.mulf %205, %209 : vector<17x17xf32>
    %211 = arith.truncf %210 : vector<17x17xf32> to vector<17x17xbf16>
    %212 = arith.truncf %195 : vector<17x16xf32> to vector<17x16xbf16>
    %cst_95 = arith.constant dense<0.000000e+00> : vector<17x16xf32>
    %213 = tpu.matmul %211, %212, %cst_95 {dimension_numbers = #tpu.dot_dimension_numbers<[1], [0], [0], [1], [0, 0, 1, 1], [], []>} : vector<17x17xbf16>, vector<17x16xbf16>, vector<17x16xf32> -> vector<17x16xf32>
    %214 = vector.extract_strided_slice %192 {offsets = [0, 16], sizes = [17, 16], strides = [1, 1]} : vector<17x96xf32> to vector<17x16xf32>
    %215 = vector.extract_strided_slice %192 {offsets = [0, 48], sizes = [17, 16], strides = [1, 1]} : vector<17x96xf32> to vector<17x16xf32>
    %216 = vector.extract_strided_slice %192 {offsets = [0, 80], sizes = [17, 16], strides = [1, 1]} : vector<17x96xf32> to vector<17x16xf32>
    %217 = arith.truncf %214 : vector<17x16xf32> to vector<17x16xbf16>
    %218 = arith.truncf %215 : vector<17x16xf32> to vector<17x16xbf16>
    %cst_96 = arith.constant dense<0.000000e+00> : vector<17x17xf32>
    %219 = tpu.matmul %217, %218, %cst_96 {dimension_numbers = #tpu.dot_dimension_numbers<[1], [1], [0], [0], [0, 0, 1, 0], [], []>} : vector<17x16xbf16>, vector<17x16xbf16>, vector<17x17xf32> -> vector<17x17xf32>
    %cst_97 = arith.constant 2.500000e-01 : f32
    %220 = vector.broadcast %cst_97 : f32 to vector<17x17xf32>
    %221 = arith.mulf %219, %220 : vector<17x17xf32>
    %cst_98 = arith.constant dense<0xFF800000> : vector<17xf32>
    %222 = vector.multi_reduction <maximumf>, %221, %cst_98 [1] : vector<17x17xf32> to vector<17xf32>
    %223 = vector.shape_cast %222 : vector<17xf32> to vector<17x1xf32>
    %224 = vector.broadcast %223 : vector<17x1xf32> to vector<17x17xf32>
    %225 = arith.subf %221, %224 : vector<17x17xf32>
    %226 = math.exp %225 : vector<17x17xf32>
    %cst_99 = arith.constant dense<0.000000e+00> : vector<17xf32>
    %227 = vector.multi_reduction <add>, %226, %cst_99 [1] : vector<17x17xf32> to vector<17xf32>
    %228 = vector.shape_cast %227 : vector<17xf32> to vector<17x1xf32>
    %229 = tpu.reciprocal %228 {approx = true} : vector<17x1xf32> -> vector<17x1xf32>
    %230 = vector.broadcast %229 : vector<17x1xf32> to vector<17x17xf32>
    %231 = arith.mulf %226, %230 : vector<17x17xf32>
    %232 = arith.truncf %231 : vector<17x17xf32> to vector<17x17xbf16>
    %233 = arith.truncf %216 : vector<17x16xf32> to vector<17x16xbf16>
    %cst_100 = arith.constant dense<0.000000e+00> : vector<17x16xf32>
    %234 = tpu.matmul %232, %233, %cst_100 {dimension_numbers = #tpu.dot_dimension_numbers<[1], [0], [0], [1], [0, 0, 1, 1], [], []>} : vector<17x17xbf16>, vector<17x16xbf16>, vector<17x16xf32> -> vector<17x16xf32>
    %235 = tpu.concatenate %213, %234 in 1 : vector<17x16xf32>, vector<17x16xf32> -> vector<17x32xf32>
    %236 = arith.truncf %235 : vector<17x32xf32> to vector<17x32xbf16>
    %c1_101 = arith.constant 1 : index
    %c0_102 = arith.constant 0 : index
    %c0_103 = arith.constant 0 : index
    %237 = vector.load %arg10[%c1_101, %c0_102, %c0_103] : memref<4x32x32xbf16, #tpu.memory_space<vmem>>, vector<1x32x32xbf16>
    %238 = vector.shape_cast %237 : vector<1x32x32xbf16> to vector<32x32xbf16>
    %cst_104 = arith.constant dense<0.000000e+00> : vector<17x32xf32>
    %239 = tpu.matmul %236, %238, %cst_104 {dimension_numbers = #tpu.dot_dimension_numbers<[1], [0], [0], [1], [0, 0, 1, 1], [], []>} : vector<17x32xbf16>, vector<32x32xbf16>, vector<17x32xf32> -> vector<17x32xf32>
    %c1_105 = arith.constant 1 : index
    %c0_106 = arith.constant 0 : index
    %c0_107 = arith.constant 0 : index
    %240 = vector.load %arg11[%c1_105, %c0_106, %c0_107] : memref<4x1x32xf32, #tpu.memory_space<vmem>>, vector<1x1x32xf32>
    %241 = vector.shape_cast %240 : vector<1x1x32xf32> to vector<1x32xf32>
    %242 = vector.broadcast %241 : vector<1x32xf32> to vector<17x32xf32>
    %243 = arith.addf %239, %242 : vector<17x32xf32>
    %244 = arith.addf %158, %243 : vector<17x32xf32>
    %c1_108 = arith.constant 1 : index
    %c0_109 = arith.constant 0 : index
    %c0_110 = arith.constant 0 : index
    %245 = vector.load %arg12[%c1_108, %c0_109, %c0_110] : memref<4x1x32xf32, #tpu.memory_space<vmem>>, vector<1x1x32xf32>
    %246 = vector.shape_cast %245 : vector<1x1x32xf32> to vector<1x32xf32>
    %c1_111 = arith.constant 1 : index
    %c0_112 = arith.constant 0 : index
    %c0_113 = arith.constant 0 : index
    %247 = vector.load %arg13[%c1_111, %c0_112, %c0_113] : memref<4x1x32xf32, #tpu.memory_space<vmem>>, vector<1x1x32xf32>
    %248 = vector.shape_cast %247 : vector<1x1x32xf32> to vector<1x32xf32>
    %cst_114 = arith.constant dense<0.000000e+00> : vector<17xf32>
    %249 = vector.multi_reduction <add>, %244, %cst_114 [1] : vector<17x32xf32> to vector<17xf32>
    %250 = vector.shape_cast %249 : vector<17xf32> to vector<17x1xf32>
    %cst_115 = arith.constant 3.200000e+01 : f32
    %251 = vector.broadcast %cst_115 : f32 to vector<17x1xf32>
    %252 = arith.divf %250, %251 : vector<17x1xf32>
    %253 = vector.broadcast %252 : vector<17x1xf32> to vector<17x32xf32>
    %254 = arith.subf %244, %253 : vector<17x32xf32>
    %255 = arith.mulf %254, %254 : vector<17x32xf32>
    %cst_116 = arith.constant dense<0.000000e+00> : vector<17xf32>
    %256 = vector.multi_reduction <add>, %255, %cst_116 [1] : vector<17x32xf32> to vector<17xf32>
    %257 = vector.shape_cast %256 : vector<17xf32> to vector<17x1xf32>
    %cst_117 = arith.constant 3.200000e+01 : f32
    %258 = vector.broadcast %cst_117 : f32 to vector<17x1xf32>
    %259 = arith.divf %257, %258 : vector<17x1xf32>
    %260 = vector.broadcast %252 : vector<17x1xf32> to vector<17x32xf32>
    %261 = arith.subf %244, %260 : vector<17x32xf32>
    %cst_118 = arith.constant 9.99999997E-7 : f32
    %262 = vector.broadcast %cst_118 : f32 to vector<17x1xf32>
    %263 = arith.addf %259, %262 : vector<17x1xf32>
    %264 = math.rsqrt %263 : vector<17x1xf32>
    %265 = vector.broadcast %264 : vector<17x1xf32> to vector<17x32xf32>
    %266 = arith.mulf %261, %265 : vector<17x32xf32>
    %267 = vector.broadcast %246 : vector<1x32xf32> to vector<17x32xf32>
    %268 = arith.mulf %266, %267 : vector<17x32xf32>
    %269 = vector.broadcast %248 : vector<1x32xf32> to vector<17x32xf32>
    %270 = arith.addf %268, %269 : vector<17x32xf32>
    %271 = arith.truncf %270 : vector<17x32xf32> to vector<17x32xbf16>
    %c1_119 = arith.constant 1 : index
    %c0_120 = arith.constant 0 : index
    %c0_121 = arith.constant 0 : index
    %272 = vector.load %arg14[%c1_119, %c0_120, %c0_121] : memref<4x32x128xbf16, #tpu.memory_space<vmem>>, vector<1x32x128xbf16>
    %273 = vector.shape_cast %272 : vector<1x32x128xbf16> to vector<32x128xbf16>
    %cst_122 = arith.constant dense<0.000000e+00> : vector<17x128xf32>
    %274 = tpu.matmul %271, %273, %cst_122 {dimension_numbers = #tpu.dot_dimension_numbers<[1], [0], [0], [1], [0, 0, 1, 1], [], []>} : vector<17x32xbf16>, vector<32x128xbf16>, vector<17x128xf32> -> vector<17x128xf32>
    %c1_123 = arith.constant 1 : index
    %c0_124 = arith.constant 0 : index
    %c0_125 = arith.constant 0 : index
    %275 = vector.load %arg15[%c1_123, %c0_124, %c0_125] : memref<4x1x128xf32, #tpu.memory_space<vmem>>, vector<1x1x128xf32>
    %276 = vector.shape_cast %275 : vector<1x1x128xf32> to vector<1x128xf32>
    %277 = vector.broadcast %276 : vector<1x128xf32> to vector<17x128xf32>
    %278 = arith.addf %274, %277 : vector<17x128xf32>
    %cst_126 = arith.constant 5.000000e-01 : f32
    %279 = vector.broadcast %cst_126 : f32 to vector<17x128xf32>
    %280 = arith.mulf %279, %278 : vector<17x128xf32>
    %cst_127 = arith.constant 4.471500e-02 : f32
    %281 = vector.broadcast %cst_127 : f32 to vector<17x128xf32>
    %282 = arith.mulf %281, %278 : vector<17x128xf32>
    %283 = arith.mulf %282, %278 : vector<17x128xf32>
    %284 = arith.mulf %283, %278 : vector<17x128xf32>
    %285 = arith.addf %278, %284 : vector<17x128xf32>
    %cst_128 = arith.constant 0.797884583 : f32
    %286 = vector.broadcast %cst_128 : f32 to vector<17x128xf32>
    %287 = arith.mulf %286, %285 : vector<17x128xf32>
    %288 = math.tanh %287 : vector<17x128xf32>
    %cst_129 = arith.constant 1.000000e+00 : f32
    %289 = vector.broadcast %cst_129 : f32 to vector<17x128xf32>
    %290 = arith.addf %289, %288 : vector<17x128xf32>
    %291 = arith.mulf %280, %290 : vector<17x128xf32>
    %292 = arith.truncf %291 : vector<17x128xf32> to vector<17x128xbf16>
    %c1_130 = arith.constant 1 : index
    %c0_131 = arith.constant 0 : index
    %c0_132 = arith.constant 0 : index
    %293 = vector.load %arg16[%c1_130, %c0_131, %c0_132] : memref<4x128x32xbf16, #tpu.memory_space<vmem>>, vector<1x128x32xbf16>
    %294 = vector.shape_cast %293 : vector<1x128x32xbf16> to vector<128x32xbf16>
    %cst_133 = arith.constant dense<0.000000e+00> : vector<17x32xf32>
    %295 = tpu.matmul %292, %294, %cst_133 {dimension_numbers = #tpu.dot_dimension_numbers<[1], [0], [0], [1], [0, 0, 1, 1], [], []>} : vector<17x128xbf16>, vector<128x32xbf16>, vector<17x32xf32> -> vector<17x32xf32>
    %c1_134 = arith.constant 1 : index
    %c0_135 = arith.constant 0 : index
    %c0_136 = arith.constant 0 : index
    %296 = vector.load %arg17[%c1_134, %c0_135, %c0_136] : memref<4x1x32xf32, #tpu.memory_space<vmem>>, vector<1x1x32xf32>
    %297 = vector.shape_cast %296 : vector<1x1x32xf32> to vector<1x32xf32>
    %298 = vector.broadcast %297 : vector<1x32xf32> to vector<17x32xf32>
    %299 = arith.addf %295, %298 : vector<17x32xf32>
    %300 = arith.addf %244, %299 : vector<17x32xf32>
    %c2 = arith.constant 2 : index
    %c0_137 = arith.constant 0 : index
    %c0_138 = arith.constant 0 : index
    %301 = vector.load %arg6[%c2, %c0_137, %c0_138] : memref<4x1x32xf32, #tpu.memory_space<vmem>>, vector<1x1x32xf32>
    %302 = vector.shape_cast %301 : vector<1x1x32xf32> to vector<1x32xf32>
    %c2_139 = arith.constant 2 : index
    %c0_140 = arith.constant 0 : index
    %c0_141 = arith.constant 0 : index
    %303 = vector.load %arg7[%c2_139, %c0_140, %c0_141] : memref<4x1x32xf32, #tpu.memory_space<vmem>>, vector<1x1x32xf32>
    %304 = vector.shape_cast %303 : vector<1x1x32xf32> to vector<1x32xf32>
    %cst_142 = arith.constant dense<0.000000e+00> : vector<17xf32>
    %305 = vector.multi_reduction <add>, %300, %cst_142 [1] : vector<17x32xf32> to vector<17xf32>
    %306 = vector.shape_cast %305 : vector<17xf32> to vector<17x1xf32>
    %cst_143 = arith.constant 3.200000e+01 : f32
    %307 = vector.broadcast %cst_143 : f32 to vector<17x1xf32>
    %308 = arith.divf %306, %307 : vector<17x1xf32>
    %309 = vector.broadcast %308 : vector<17x1xf32> to vector<17x32xf32>
    %310 = arith.subf %300, %309 : vector<17x32xf32>
    %311 = arith.mulf %310, %310 : vector<17x32xf32>
    %cst_144 = arith.constant dense<0.000000e+00> : vector<17xf32>
    %312 = vector.multi_reduction <add>, %311, %cst_144 [1] : vector<17x32xf32> to vector<17xf32>
    %313 = vector.shape_cast %312 : vector<17xf32> to vector<17x1xf32>
    %cst_145 = arith.constant 3.200000e+01 : f32
    %314 = vector.broadcast %cst_145 : f32 to vector<17x1xf32>
    %315 = arith.divf %313, %314 : vector<17x1xf32>
    %316 = vector.broadcast %308 : vector<17x1xf32> to vector<17x32xf32>
    %317 = arith.subf %300, %316 : vector<17x32xf32>
    %cst_146 = arith.constant 9.99999997E-7 : f32
    %318 = vector.broadcast %cst_146 : f32 to vector<17x1xf32>
    %319 = arith.addf %315, %318 : vector<17x1xf32>
    %320 = math.rsqrt %319 : vector<17x1xf32>
    %321 = vector.broadcast %320 : vector<17x1xf32> to vector<17x32xf32>
    %322 = arith.mulf %317, %321 : vector<17x32xf32>
    %323 = vector.broadcast %302 : vector<1x32xf32> to vector<17x32xf32>
    %324 = arith.mulf %322, %323 : vector<17x32xf32>
    %325 = vector.broadcast %304 : vector<1x32xf32> to vector<17x32xf32>
    %326 = arith.addf %324, %325 : vector<17x32xf32>
    %327 = arith.truncf %326 : vector<17x32xf32> to vector<17x32xbf16>
    %c2_147 = arith.constant 2 : index
    %c0_148 = arith.constant 0 : index
    %c0_149 = arith.constant 0 : index
    %328 = vector.load %arg8[%c2_147, %c0_148, %c0_149] : memref<4x32x96xbf16, #tpu.memory_space<vmem>>, vector<1x32x96xbf16>
    %329 = vector.shape_cast %328 : vector<1x32x96xbf16> to vector<32x96xbf16>
    %cst_150 = arith.constant dense<0.000000e+00> : vector<17x96xf32>
    %330 = tpu.matmul %327, %329, %cst_150 {dimension_numbers = #tpu.dot_dimension_numbers<[1], [0], [0], [1], [0, 0, 1, 1], [], []>} : vector<17x32xbf16>, vector<32x96xbf16>, vector<17x96xf32> -> vector<17x96xf32>
    %c2_151 = arith.constant 2 : index
    %c0_152 = arith.constant 0 : index
    %c0_153 = arith.constant 0 : index
    %331 = vector.load %arg9[%c2_151, %c0_152, %c0_153] : memref<4x1x96xf32, #tpu.memory_space<vmem>>, vector<1x1x96xf32>
    %332 = vector.shape_cast %331 : vector<1x1x96xf32> to vector<1x96xf32>
    %333 = vector.broadcast %332 : vector<1x96xf32> to vector<17x96xf32>
    %334 = arith.addf %330, %333 : vector<17x96xf32>
    %335 = vector.extract_strided_slice %334 {offsets = [0, 0], sizes = [17, 16], strides = [1, 1]} : vector<17x96xf32> to vector<17x16xf32>
    %336 = vector.extract_strided_slice %334 {offsets = [0, 32], sizes = [17, 16], strides = [1, 1]} : vector<17x96xf32> to vector<17x16xf32>
    %337 = vector.extract_strided_slice %334 {offsets = [0, 64], sizes = [17, 16], strides = [1, 1]} : vector<17x96xf32> to vector<17x16xf32>
    %338 = arith.truncf %335 : vector<17x16xf32> to vector<17x16xbf16>
    %339 = arith.truncf %336 : vector<17x16xf32> to vector<17x16xbf16>
    %cst_154 = arith.constant dense<0.000000e+00> : vector<17x17xf32>
    %340 = tpu.matmul %338, %339, %cst_154 {dimension_numbers = #tpu.dot_dimension_numbers<[1], [1], [0], [0], [0, 0, 1, 0], [], []>} : vector<17x16xbf16>, vector<17x16xbf16>, vector<17x17xf32> -> vector<17x17xf32>
    %cst_155 = arith.constant 2.500000e-01 : f32
    %341 = vector.broadcast %cst_155 : f32 to vector<17x17xf32>
    %342 = arith.mulf %340, %341 : vector<17x17xf32>
    %cst_156 = arith.constant dense<0xFF800000> : vector<17xf32>
    %343 = vector.multi_reduction <maximumf>, %342, %cst_156 [1] : vector<17x17xf32> to vector<17xf32>
    %344 = vector.shape_cast %343 : vector<17xf32> to vector<17x1xf32>
    %345 = vector.broadcast %344 : vector<17x1xf32> to vector<17x17xf32>
    %346 = arith.subf %342, %345 : vector<17x17xf32>
    %347 = math.exp %346 : vector<17x17xf32>
    %cst_157 = arith.constant dense<0.000000e+00> : vector<17xf32>
    %348 = vector.multi_reduction <add>, %347, %cst_157 [1] : vector<17x17xf32> to vector<17xf32>
    %349 = vector.shape_cast %348 : vector<17xf32> to vector<17x1xf32>
    %350 = tpu.reciprocal %349 {approx = true} : vector<17x1xf32> -> vector<17x1xf32>
    %351 = vector.broadcast %350 : vector<17x1xf32> to vector<17x17xf32>
    %352 = arith.mulf %347, %351 : vector<17x17xf32>
    %353 = arith.truncf %352 : vector<17x17xf32> to vector<17x17xbf16>
    %354 = arith.truncf %337 : vector<17x16xf32> to vector<17x16xbf16>
    %cst_158 = arith.constant dense<0.000000e+00> : vector<17x16xf32>
    %355 = tpu.matmul %353, %354, %cst_158 {dimension_numbers = #tpu.dot_dimension_numbers<[1], [0], [0], [1], [0, 0, 1, 1], [], []>} : vector<17x17xbf16>, vector<17x16xbf16>, vector<17x16xf32> -> vector<17x16xf32>
    %356 = vector.extract_strided_slice %334 {offsets = [0, 16], sizes = [17, 16], strides = [1, 1]} : vector<17x96xf32> to vector<17x16xf32>
    %357 = vector.extract_strided_slice %334 {offsets = [0, 48], sizes = [17, 16], strides = [1, 1]} : vector<17x96xf32> to vector<17x16xf32>
    %358 = vector.extract_strided_slice %334 {offsets = [0, 80], sizes = [17, 16], strides = [1, 1]} : vector<17x96xf32> to vector<17x16xf32>
    %359 = arith.truncf %356 : vector<17x16xf32> to vector<17x16xbf16>
    %360 = arith.truncf %357 : vector<17x16xf32> to vector<17x16xbf16>
    %cst_159 = arith.constant dense<0.000000e+00> : vector<17x17xf32>
    %361 = tpu.matmul %359, %360, %cst_159 {dimension_numbers = #tpu.dot_dimension_numbers<[1], [1], [0], [0], [0, 0, 1, 0], [], []>} : vector<17x16xbf16>, vector<17x16xbf16>, vector<17x17xf32> -> vector<17x17xf32>
    %cst_160 = arith.constant 2.500000e-01 : f32
    %362 = vector.broadcast %cst_160 : f32 to vector<17x17xf32>
    %363 = arith.mulf %361, %362 : vector<17x17xf32>
    %cst_161 = arith.constant dense<0xFF800000> : vector<17xf32>
    %364 = vector.multi_reduction <maximumf>, %363, %cst_161 [1] : vector<17x17xf32> to vector<17xf32>
    %365 = vector.shape_cast %364 : vector<17xf32> to vector<17x1xf32>
    %366 = vector.broadcast %365 : vector<17x1xf32> to vector<17x17xf32>
    %367 = arith.subf %363, %366 : vector<17x17xf32>
    %368 = math.exp %367 : vector<17x17xf32>
    %cst_162 = arith.constant dense<0.000000e+00> : vector<17xf32>
    %369 = vector.multi_reduction <add>, %368, %cst_162 [1] : vector<17x17xf32> to vector<17xf32>
    %370 = vector.shape_cast %369 : vector<17xf32> to vector<17x1xf32>
    %371 = tpu.reciprocal %370 {approx = true} : vector<17x1xf32> -> vector<17x1xf32>
    %372 = vector.broadcast %371 : vector<17x1xf32> to vector<17x17xf32>
    %373 = arith.mulf %368, %372 : vector<17x17xf32>
    %374 = arith.truncf %373 : vector<17x17xf32> to vector<17x17xbf16>
    %375 = arith.truncf %358 : vector<17x16xf32> to vector<17x16xbf16>
    %cst_163 = arith.constant dense<0.000000e+00> : vector<17x16xf32>
    %376 = tpu.matmul %374, %375, %cst_163 {dimension_numbers = #tpu.dot_dimension_numbers<[1], [0], [0], [1], [0, 0, 1, 1], [], []>} : vector<17x17xbf16>, vector<17x16xbf16>, vector<17x16xf32> -> vector<17x16xf32>
    %377 = tpu.concatenate %355, %376 in 1 : vector<17x16xf32>, vector<17x16xf32> -> vector<17x32xf32>
    %378 = arith.truncf %377 : vector<17x32xf32> to vector<17x32xbf16>
    %c2_164 = arith.constant 2 : index
    %c0_165 = arith.constant 0 : index
    %c0_166 = arith.constant 0 : index
    %379 = vector.load %arg10[%c2_164, %c0_165, %c0_166] : memref<4x32x32xbf16, #tpu.memory_space<vmem>>, vector<1x32x32xbf16>
    %380 = vector.shape_cast %379 : vector<1x32x32xbf16> to vector<32x32xbf16>
    %cst_167 = arith.constant dense<0.000000e+00> : vector<17x32xf32>
    %381 = tpu.matmul %378, %380, %cst_167 {dimension_numbers = #tpu.dot_dimension_numbers<[1], [0], [0], [1], [0, 0, 1, 1], [], []>} : vector<17x32xbf16>, vector<32x32xbf16>, vector<17x32xf32> -> vector<17x32xf32>
    %c2_168 = arith.constant 2 : index
    %c0_169 = arith.constant 0 : index
    %c0_170 = arith.constant 0 : index
    %382 = vector.load %arg11[%c2_168, %c0_169, %c0_170] : memref<4x1x32xf32, #tpu.memory_space<vmem>>, vector<1x1x32xf32>
    %383 = vector.shape_cast %382 : vector<1x1x32xf32> to vector<1x32xf32>
    %384 = vector.broadcast %383 : vector<1x32xf32> to vector<17x32xf32>
    %385 = arith.addf %381, %384 : vector<17x32xf32>
    %386 = arith.addf %300, %385 : vector<17x32xf32>
    %c2_171 = arith.constant 2 : index
    %c0_172 = arith.constant 0 : index
    %c0_173 = arith.constant 0 : index
    %387 = vector.load %arg12[%c2_171, %c0_172, %c0_173] : memref<4x1x32xf32, #tpu.memory_space<vmem>>, vector<1x1x32xf32>
    %388 = vector.shape_cast %387 : vector<1x1x32xf32> to vector<1x32xf32>
    %c2_174 = arith.constant 2 : index
    %c0_175 = arith.constant 0 : index
    %c0_176 = arith.constant 0 : index
    %389 = vector.load %arg13[%c2_174, %c0_175, %c0_176] : memref<4x1x32xf32, #tpu.memory_space<vmem>>, vector<1x1x32xf32>
    %390 = vector.shape_cast %389 : vector<1x1x32xf32> to vector<1x32xf32>
    %cst_177 = arith.constant dense<0.000000e+00> : vector<17xf32>
    %391 = vector.multi_reduction <add>, %386, %cst_177 [1] : vector<17x32xf32> to vector<17xf32>
    %392 = vector.shape_cast %391 : vector<17xf32> to vector<17x1xf32>
    %cst_178 = arith.constant 3.200000e+01 : f32
    %393 = vector.broadcast %cst_178 : f32 to vector<17x1xf32>
    %394 = arith.divf %392, %393 : vector<17x1xf32>
    %395 = vector.broadcast %394 : vector<17x1xf32> to vector<17x32xf32>
    %396 = arith.subf %386, %395 : vector<17x32xf32>
    %397 = arith.mulf %396, %396 : vector<17x32xf32>
    %cst_179 = arith.constant dense<0.000000e+00> : vector<17xf32>
    %398 = vector.multi_reduction <add>, %397, %cst_179 [1] : vector<17x32xf32> to vector<17xf32>
    %399 = vector.shape_cast %398 : vector<17xf32> to vector<17x1xf32>
    %cst_180 = arith.constant 3.200000e+01 : f32
    %400 = vector.broadcast %cst_180 : f32 to vector<17x1xf32>
    %401 = arith.divf %399, %400 : vector<17x1xf32>
    %402 = vector.broadcast %394 : vector<17x1xf32> to vector<17x32xf32>
    %403 = arith.subf %386, %402 : vector<17x32xf32>
    %cst_181 = arith.constant 9.99999997E-7 : f32
    %404 = vector.broadcast %cst_181 : f32 to vector<17x1xf32>
    %405 = arith.addf %401, %404 : vector<17x1xf32>
    %406 = math.rsqrt %405 : vector<17x1xf32>
    %407 = vector.broadcast %406 : vector<17x1xf32> to vector<17x32xf32>
    %408 = arith.mulf %403, %407 : vector<17x32xf32>
    %409 = vector.broadcast %388 : vector<1x32xf32> to vector<17x32xf32>
    %410 = arith.mulf %408, %409 : vector<17x32xf32>
    %411 = vector.broadcast %390 : vector<1x32xf32> to vector<17x32xf32>
    %412 = arith.addf %410, %411 : vector<17x32xf32>
    %413 = arith.truncf %412 : vector<17x32xf32> to vector<17x32xbf16>
    %c2_182 = arith.constant 2 : index
    %c0_183 = arith.constant 0 : index
    %c0_184 = arith.constant 0 : index
    %414 = vector.load %arg14[%c2_182, %c0_183, %c0_184] : memref<4x32x128xbf16, #tpu.memory_space<vmem>>, vector<1x32x128xbf16>
    %415 = vector.shape_cast %414 : vector<1x32x128xbf16> to vector<32x128xbf16>
    %cst_185 = arith.constant dense<0.000000e+00> : vector<17x128xf32>
    %416 = tpu.matmul %413, %415, %cst_185 {dimension_numbers = #tpu.dot_dimension_numbers<[1], [0], [0], [1], [0, 0, 1, 1], [], []>} : vector<17x32xbf16>, vector<32x128xbf16>, vector<17x128xf32> -> vector<17x128xf32>
    %c2_186 = arith.constant 2 : index
    %c0_187 = arith.constant 0 : index
    %c0_188 = arith.constant 0 : index
    %417 = vector.load %arg15[%c2_186, %c0_187, %c0_188] : memref<4x1x128xf32, #tpu.memory_space<vmem>>, vector<1x1x128xf32>
    %418 = vector.shape_cast %417 : vector<1x1x128xf32> to vector<1x128xf32>
    %419 = vector.broadcast %418 : vector<1x128xf32> to vector<17x128xf32>
    %420 = arith.addf %416, %419 : vector<17x128xf32>
    %cst_189 = arith.constant 5.000000e-01 : f32
    %421 = vector.broadcast %cst_189 : f32 to vector<17x128xf32>
    %422 = arith.mulf %421, %420 : vector<17x128xf32>
    %cst_190 = arith.constant 4.471500e-02 : f32
    %423 = vector.broadcast %cst_190 : f32 to vector<17x128xf32>
    %424 = arith.mulf %423, %420 : vector<17x128xf32>
    %425 = arith.mulf %424, %420 : vector<17x128xf32>
    %426 = arith.mulf %425, %420 : vector<17x128xf32>
    %427 = arith.addf %420, %426 : vector<17x128xf32>
    %cst_191 = arith.constant 0.797884583 : f32
    %428 = vector.broadcast %cst_191 : f32 to vector<17x128xf32>
    %429 = arith.mulf %428, %427 : vector<17x128xf32>
    %430 = math.tanh %429 : vector<17x128xf32>
    %cst_192 = arith.constant 1.000000e+00 : f32
    %431 = vector.broadcast %cst_192 : f32 to vector<17x128xf32>
    %432 = arith.addf %431, %430 : vector<17x128xf32>
    %433 = arith.mulf %422, %432 : vector<17x128xf32>
    %434 = arith.truncf %433 : vector<17x128xf32> to vector<17x128xbf16>
    %c2_193 = arith.constant 2 : index
    %c0_194 = arith.constant 0 : index
    %c0_195 = arith.constant 0 : index
    %435 = vector.load %arg16[%c2_193, %c0_194, %c0_195] : memref<4x128x32xbf16, #tpu.memory_space<vmem>>, vector<1x128x32xbf16>
    %436 = vector.shape_cast %435 : vector<1x128x32xbf16> to vector<128x32xbf16>
    %cst_196 = arith.constant dense<0.000000e+00> : vector<17x32xf32>
    %437 = tpu.matmul %434, %436, %cst_196 {dimension_numbers = #tpu.dot_dimension_numbers<[1], [0], [0], [1], [0, 0, 1, 1], [], []>} : vector<17x128xbf16>, vector<128x32xbf16>, vector<17x32xf32> -> vector<17x32xf32>
    %c2_197 = arith.constant 2 : index
    %c0_198 = arith.constant 0 : index
    %c0_199 = arith.constant 0 : index
    %438 = vector.load %arg17[%c2_197, %c0_198, %c0_199] : memref<4x1x32xf32, #tpu.memory_space<vmem>>, vector<1x1x32xf32>
    %439 = vector.shape_cast %438 : vector<1x1x32xf32> to vector<1x32xf32>
    %440 = vector.broadcast %439 : vector<1x32xf32> to vector<17x32xf32>
    %441 = arith.addf %437, %440 : vector<17x32xf32>
    %442 = arith.addf %386, %441 : vector<17x32xf32>
    %c3 = arith.constant 3 : index
    %c0_200 = arith.constant 0 : index
    %c0_201 = arith.constant 0 : index
    %443 = vector.load %arg6[%c3, %c0_200, %c0_201] : memref<4x1x32xf32, #tpu.memory_space<vmem>>, vector<1x1x32xf32>
    %444 = vector.shape_cast %443 : vector<1x1x32xf32> to vector<1x32xf32>
    %c3_202 = arith.constant 3 : index
    %c0_203 = arith.constant 0 : index
    %c0_204 = arith.constant 0 : index
    %445 = vector.load %arg7[%c3_202, %c0_203, %c0_204] : memref<4x1x32xf32, #tpu.memory_space<vmem>>, vector<1x1x32xf32>
    %446 = vector.shape_cast %445 : vector<1x1x32xf32> to vector<1x32xf32>
    %cst_205 = arith.constant dense<0.000000e+00> : vector<17xf32>
    %447 = vector.multi_reduction <add>, %442, %cst_205 [1] : vector<17x32xf32> to vector<17xf32>
    %448 = vector.shape_cast %447 : vector<17xf32> to vector<17x1xf32>
    %cst_206 = arith.constant 3.200000e+01 : f32
    %449 = vector.broadcast %cst_206 : f32 to vector<17x1xf32>
    %450 = arith.divf %448, %449 : vector<17x1xf32>
    %451 = vector.broadcast %450 : vector<17x1xf32> to vector<17x32xf32>
    %452 = arith.subf %442, %451 : vector<17x32xf32>
    %453 = arith.mulf %452, %452 : vector<17x32xf32>
    %cst_207 = arith.constant dense<0.000000e+00> : vector<17xf32>
    %454 = vector.multi_reduction <add>, %453, %cst_207 [1] : vector<17x32xf32> to vector<17xf32>
    %455 = vector.shape_cast %454 : vector<17xf32> to vector<17x1xf32>
    %cst_208 = arith.constant 3.200000e+01 : f32
    %456 = vector.broadcast %cst_208 : f32 to vector<17x1xf32>
    %457 = arith.divf %455, %456 : vector<17x1xf32>
    %458 = vector.broadcast %450 : vector<17x1xf32> to vector<17x32xf32>
    %459 = arith.subf %442, %458 : vector<17x32xf32>
    %cst_209 = arith.constant 9.99999997E-7 : f32
    %460 = vector.broadcast %cst_209 : f32 to vector<17x1xf32>
    %461 = arith.addf %457, %460 : vector<17x1xf32>
    %462 = math.rsqrt %461 : vector<17x1xf32>
    %463 = vector.broadcast %462 : vector<17x1xf32> to vector<17x32xf32>
    %464 = arith.mulf %459, %463 : vector<17x32xf32>
    %465 = vector.broadcast %444 : vector<1x32xf32> to vector<17x32xf32>
    %466 = arith.mulf %464, %465 : vector<17x32xf32>
    %467 = vector.broadcast %446 : vector<1x32xf32> to vector<17x32xf32>
    %468 = arith.addf %466, %467 : vector<17x32xf32>
    %469 = arith.truncf %468 : vector<17x32xf32> to vector<17x32xbf16>
    %c3_210 = arith.constant 3 : index
    %c0_211 = arith.constant 0 : index
    %c0_212 = arith.constant 0 : index
    %470 = vector.load %arg8[%c3_210, %c0_211, %c0_212] : memref<4x32x96xbf16, #tpu.memory_space<vmem>>, vector<1x32x96xbf16>
    %471 = vector.shape_cast %470 : vector<1x32x96xbf16> to vector<32x96xbf16>
    %cst_213 = arith.constant dense<0.000000e+00> : vector<17x96xf32>
    %472 = tpu.matmul %469, %471, %cst_213 {dimension_numbers = #tpu.dot_dimension_numbers<[1], [0], [0], [1], [0, 0, 1, 1], [], []>} : vector<17x32xbf16>, vector<32x96xbf16>, vector<17x96xf32> -> vector<17x96xf32>
    %c3_214 = arith.constant 3 : index
    %c0_215 = arith.constant 0 : index
    %c0_216 = arith.constant 0 : index
    %473 = vector.load %arg9[%c3_214, %c0_215, %c0_216] : memref<4x1x96xf32, #tpu.memory_space<vmem>>, vector<1x1x96xf32>
    %474 = vector.shape_cast %473 : vector<1x1x96xf32> to vector<1x96xf32>
    %475 = vector.broadcast %474 : vector<1x96xf32> to vector<17x96xf32>
    %476 = arith.addf %472, %475 : vector<17x96xf32>
    %477 = vector.extract_strided_slice %476 {offsets = [0, 0], sizes = [17, 16], strides = [1, 1]} : vector<17x96xf32> to vector<17x16xf32>
    %478 = vector.extract_strided_slice %476 {offsets = [0, 32], sizes = [17, 16], strides = [1, 1]} : vector<17x96xf32> to vector<17x16xf32>
    %479 = vector.extract_strided_slice %476 {offsets = [0, 64], sizes = [17, 16], strides = [1, 1]} : vector<17x96xf32> to vector<17x16xf32>
    %480 = arith.truncf %477 : vector<17x16xf32> to vector<17x16xbf16>
    %481 = arith.truncf %478 : vector<17x16xf32> to vector<17x16xbf16>
    %cst_217 = arith.constant dense<0.000000e+00> : vector<17x17xf32>
    %482 = tpu.matmul %480, %481, %cst_217 {dimension_numbers = #tpu.dot_dimension_numbers<[1], [1], [0], [0], [0, 0, 1, 0], [], []>} : vector<17x16xbf16>, vector<17x16xbf16>, vector<17x17xf32> -> vector<17x17xf32>
    %cst_218 = arith.constant 2.500000e-01 : f32
    %483 = vector.broadcast %cst_218 : f32 to vector<17x17xf32>
    %484 = arith.mulf %482, %483 : vector<17x17xf32>
    %cst_219 = arith.constant dense<0xFF800000> : vector<17xf32>
    %485 = vector.multi_reduction <maximumf>, %484, %cst_219 [1] : vector<17x17xf32> to vector<17xf32>
    %486 = vector.shape_cast %485 : vector<17xf32> to vector<17x1xf32>
    %487 = vector.broadcast %486 : vector<17x1xf32> to vector<17x17xf32>
    %488 = arith.subf %484, %487 : vector<17x17xf32>
    %489 = math.exp %488 : vector<17x17xf32>
    %cst_220 = arith.constant dense<0.000000e+00> : vector<17xf32>
    %490 = vector.multi_reduction <add>, %489, %cst_220 [1] : vector<17x17xf32> to vector<17xf32>
    %491 = vector.shape_cast %490 : vector<17xf32> to vector<17x1xf32>
    %492 = tpu.reciprocal %491 {approx = true} : vector<17x1xf32> -> vector<17x1xf32>
    %493 = vector.broadcast %492 : vector<17x1xf32> to vector<17x17xf32>
    %494 = arith.mulf %489, %493 : vector<17x17xf32>
    %495 = arith.truncf %494 : vector<17x17xf32> to vector<17x17xbf16>
    %496 = arith.truncf %479 : vector<17x16xf32> to vector<17x16xbf16>
    %cst_221 = arith.constant dense<0.000000e+00> : vector<17x16xf32>
    %497 = tpu.matmul %495, %496, %cst_221 {dimension_numbers = #tpu.dot_dimension_numbers<[1], [0], [0], [1], [0, 0, 1, 1], [], []>} : vector<17x17xbf16>, vector<17x16xbf16>, vector<17x16xf32> -> vector<17x16xf32>
    %498 = vector.extract_strided_slice %476 {offsets = [0, 16], sizes = [17, 16], strides = [1, 1]} : vector<17x96xf32> to vector<17x16xf32>
    %499 = vector.extract_strided_slice %476 {offsets = [0, 48], sizes = [17, 16], strides = [1, 1]} : vector<17x96xf32> to vector<17x16xf32>
    %500 = vector.extract_strided_slice %476 {offsets = [0, 80], sizes = [17, 16], strides = [1, 1]} : vector<17x96xf32> to vector<17x16xf32>
    %501 = arith.truncf %498 : vector<17x16xf32> to vector<17x16xbf16>
    %502 = arith.truncf %499 : vector<17x16xf32> to vector<17x16xbf16>
    %cst_222 = arith.constant dense<0.000000e+00> : vector<17x17xf32>
    %503 = tpu.matmul %501, %502, %cst_222 {dimension_numbers = #tpu.dot_dimension_numbers<[1], [1], [0], [0], [0, 0, 1, 0], [], []>} : vector<17x16xbf16>, vector<17x16xbf16>, vector<17x17xf32> -> vector<17x17xf32>
    %cst_223 = arith.constant 2.500000e-01 : f32
    %504 = vector.broadcast %cst_223 : f32 to vector<17x17xf32>
    %505 = arith.mulf %503, %504 : vector<17x17xf32>
    %cst_224 = arith.constant dense<0xFF800000> : vector<17xf32>
    %506 = vector.multi_reduction <maximumf>, %505, %cst_224 [1] : vector<17x17xf32> to vector<17xf32>
    %507 = vector.shape_cast %506 : vector<17xf32> to vector<17x1xf32>
    %508 = vector.broadcast %507 : vector<17x1xf32> to vector<17x17xf32>
    %509 = arith.subf %505, %508 : vector<17x17xf32>
    %510 = math.exp %509 : vector<17x17xf32>
    %cst_225 = arith.constant dense<0.000000e+00> : vector<17xf32>
    %511 = vector.multi_reduction <add>, %510, %cst_225 [1] : vector<17x17xf32> to vector<17xf32>
    %512 = vector.shape_cast %511 : vector<17xf32> to vector<17x1xf32>
    %513 = tpu.reciprocal %512 {approx = true} : vector<17x1xf32> -> vector<17x1xf32>
    %514 = vector.broadcast %513 : vector<17x1xf32> to vector<17x17xf32>
    %515 = arith.mulf %510, %514 : vector<17x17xf32>
    %516 = arith.truncf %515 : vector<17x17xf32> to vector<17x17xbf16>
    %517 = arith.truncf %500 : vector<17x16xf32> to vector<17x16xbf16>
    %cst_226 = arith.constant dense<0.000000e+00> : vector<17x16xf32>
    %518 = tpu.matmul %516, %517, %cst_226 {dimension_numbers = #tpu.dot_dimension_numbers<[1], [0], [0], [1], [0, 0, 1, 1], [], []>} : vector<17x17xbf16>, vector<17x16xbf16>, vector<17x16xf32> -> vector<17x16xf32>
    %519 = tpu.concatenate %497, %518 in 1 : vector<17x16xf32>, vector<17x16xf32> -> vector<17x32xf32>
    %520 = arith.truncf %519 : vector<17x32xf32> to vector<17x32xbf16>
    %c3_227 = arith.constant 3 : index
    %c0_228 = arith.constant 0 : index
    %c0_229 = arith.constant 0 : index
    %521 = vector.load %arg10[%c3_227, %c0_228, %c0_229] : memref<4x32x32xbf16, #tpu.memory_space<vmem>>, vector<1x32x32xbf16>
    %522 = vector.shape_cast %521 : vector<1x32x32xbf16> to vector<32x32xbf16>
    %cst_230 = arith.constant dense<0.000000e+00> : vector<17x32xf32>
    %523 = tpu.matmul %520, %522, %cst_230 {dimension_numbers = #tpu.dot_dimension_numbers<[1], [0], [0], [1], [0, 0, 1, 1], [], []>} : vector<17x32xbf16>, vector<32x32xbf16>, vector<17x32xf32> -> vector<17x32xf32>
    %c3_231 = arith.constant 3 : index
    %c0_232 = arith.constant 0 : index
    %c0_233 = arith.constant 0 : index
    %524 = vector.load %arg11[%c3_231, %c0_232, %c0_233] : memref<4x1x32xf32, #tpu.memory_space<vmem>>, vector<1x1x32xf32>
    %525 = vector.shape_cast %524 : vector<1x1x32xf32> to vector<1x32xf32>
    %526 = vector.broadcast %525 : vector<1x32xf32> to vector<17x32xf32>
    %527 = arith.addf %523, %526 : vector<17x32xf32>
    %528 = arith.addf %442, %527 : vector<17x32xf32>
    %c3_234 = arith.constant 3 : index
    %c0_235 = arith.constant 0 : index
    %c0_236 = arith.constant 0 : index
    %529 = vector.load %arg12[%c3_234, %c0_235, %c0_236] : memref<4x1x32xf32, #tpu.memory_space<vmem>>, vector<1x1x32xf32>
    %530 = vector.shape_cast %529 : vector<1x1x32xf32> to vector<1x32xf32>
    %c3_237 = arith.constant 3 : index
    %c0_238 = arith.constant 0 : index
    %c0_239 = arith.constant 0 : index
    %531 = vector.load %arg13[%c3_237, %c0_238, %c0_239] : memref<4x1x32xf32, #tpu.memory_space<vmem>>, vector<1x1x32xf32>
    %532 = vector.shape_cast %531 : vector<1x1x32xf32> to vector<1x32xf32>
    %cst_240 = arith.constant dense<0.000000e+00> : vector<17xf32>
    %533 = vector.multi_reduction <add>, %528, %cst_240 [1] : vector<17x32xf32> to vector<17xf32>
    %534 = vector.shape_cast %533 : vector<17xf32> to vector<17x1xf32>
    %cst_241 = arith.constant 3.200000e+01 : f32
    %535 = vector.broadcast %cst_241 : f32 to vector<17x1xf32>
    %536 = arith.divf %534, %535 : vector<17x1xf32>
    %537 = vector.broadcast %536 : vector<17x1xf32> to vector<17x32xf32>
    %538 = arith.subf %528, %537 : vector<17x32xf32>
    %539 = arith.mulf %538, %538 : vector<17x32xf32>
    %cst_242 = arith.constant dense<0.000000e+00> : vector<17xf32>
    %540 = vector.multi_reduction <add>, %539, %cst_242 [1] : vector<17x32xf32> to vector<17xf32>
    %541 = vector.shape_cast %540 : vector<17xf32> to vector<17x1xf32>
    %cst_243 = arith.constant 3.200000e+01 : f32
    %542 = vector.broadcast %cst_243 : f32 to vector<17x1xf32>
    %543 = arith.divf %541, %542 : vector<17x1xf32>
    %544 = vector.broadcast %536 : vector<17x1xf32> to vector<17x32xf32>
    %545 = arith.subf %528, %544 : vector<17x32xf32>
    %cst_244 = arith.constant 9.99999997E-7 : f32
    %546 = vector.broadcast %cst_244 : f32 to vector<17x1xf32>
    %547 = arith.addf %543, %546 : vector<17x1xf32>
    %548 = math.rsqrt %547 : vector<17x1xf32>
    %549 = vector.broadcast %548 : vector<17x1xf32> to vector<17x32xf32>
    %550 = arith.mulf %545, %549 : vector<17x32xf32>
    %551 = vector.broadcast %530 : vector<1x32xf32> to vector<17x32xf32>
    %552 = arith.mulf %550, %551 : vector<17x32xf32>
    %553 = vector.broadcast %532 : vector<1x32xf32> to vector<17x32xf32>
    %554 = arith.addf %552, %553 : vector<17x32xf32>
    %555 = arith.truncf %554 : vector<17x32xf32> to vector<17x32xbf16>
    %c3_245 = arith.constant 3 : index
    %c0_246 = arith.constant 0 : index
    %c0_247 = arith.constant 0 : index
    %556 = vector.load %arg14[%c3_245, %c0_246, %c0_247] : memref<4x32x128xbf16, #tpu.memory_space<vmem>>, vector<1x32x128xbf16>
    %557 = vector.shape_cast %556 : vector<1x32x128xbf16> to vector<32x128xbf16>
    %cst_248 = arith.constant dense<0.000000e+00> : vector<17x128xf32>
    %558 = tpu.matmul %555, %557, %cst_248 {dimension_numbers = #tpu.dot_dimension_numbers<[1], [0], [0], [1], [0, 0, 1, 1], [], []>} : vector<17x32xbf16>, vector<32x128xbf16>, vector<17x128xf32> -> vector<17x128xf32>
    %c3_249 = arith.constant 3 : index
    %c0_250 = arith.constant 0 : index
    %c0_251 = arith.constant 0 : index
    %559 = vector.load %arg15[%c3_249, %c0_250, %c0_251] : memref<4x1x128xf32, #tpu.memory_space<vmem>>, vector<1x1x128xf32>
    %560 = vector.shape_cast %559 : vector<1x1x128xf32> to vector<1x128xf32>
    %561 = vector.broadcast %560 : vector<1x128xf32> to vector<17x128xf32>
    %562 = arith.addf %558, %561 : vector<17x128xf32>
    %cst_252 = arith.constant 5.000000e-01 : f32
    %563 = vector.broadcast %cst_252 : f32 to vector<17x128xf32>
    %564 = arith.mulf %563, %562 : vector<17x128xf32>
    %cst_253 = arith.constant 4.471500e-02 : f32
    %565 = vector.broadcast %cst_253 : f32 to vector<17x128xf32>
    %566 = arith.mulf %565, %562 : vector<17x128xf32>
    %567 = arith.mulf %566, %562 : vector<17x128xf32>
    %568 = arith.mulf %567, %562 : vector<17x128xf32>
    %569 = arith.addf %562, %568 : vector<17x128xf32>
    %cst_254 = arith.constant 0.797884583 : f32
    %570 = vector.broadcast %cst_254 : f32 to vector<17x128xf32>
    %571 = arith.mulf %570, %569 : vector<17x128xf32>
    %572 = math.tanh %571 : vector<17x128xf32>
    %cst_255 = arith.constant 1.000000e+00 : f32
    %573 = vector.broadcast %cst_255 : f32 to vector<17x128xf32>
    %574 = arith.addf %573, %572 : vector<17x128xf32>
    %575 = arith.mulf %564, %574 : vector<17x128xf32>
    %576 = arith.truncf %575 : vector<17x128xf32> to vector<17x128xbf16>
    %c3_256 = arith.constant 3 : index
    %c0_257 = arith.constant 0 : index
    %c0_258 = arith.constant 0 : index
    %577 = vector.load %arg16[%c3_256, %c0_257, %c0_258] : memref<4x128x32xbf16, #tpu.memory_space<vmem>>, vector<1x128x32xbf16>
    %578 = vector.shape_cast %577 : vector<1x128x32xbf16> to vector<128x32xbf16>
    %cst_259 = arith.constant dense<0.000000e+00> : vector<17x32xf32>
    %579 = tpu.matmul %576, %578, %cst_259 {dimension_numbers = #tpu.dot_dimension_numbers<[1], [0], [0], [1], [0, 0, 1, 1], [], []>} : vector<17x128xbf16>, vector<128x32xbf16>, vector<17x32xf32> -> vector<17x32xf32>
    %c3_260 = arith.constant 3 : index
    %c0_261 = arith.constant 0 : index
    %c0_262 = arith.constant 0 : index
    %580 = vector.load %arg17[%c3_260, %c0_261, %c0_262] : memref<4x1x32xf32, #tpu.memory_space<vmem>>, vector<1x1x32xf32>
    %581 = vector.shape_cast %580 : vector<1x1x32xf32> to vector<1x32xf32>
    %582 = vector.broadcast %581 : vector<1x32xf32> to vector<17x32xf32>
    %583 = arith.addf %579, %582 : vector<17x32xf32>
    %584 = arith.addf %528, %583 : vector<17x32xf32>
    %c0_263 = arith.constant 0 : index
    %c0_264 = arith.constant 0 : index
    %585 = vector.load %arg18[%c0_263, %c0_264] : memref<1x32xf32, #tpu.memory_space<vmem>>, vector<1x32xf32>
    %c0_265 = arith.constant 0 : index
    %c0_266 = arith.constant 0 : index
    %586 = vector.load %arg19[%c0_265, %c0_266] : memref<1x32xf32, #tpu.memory_space<vmem>>, vector<1x32xf32>
    %cst_267 = arith.constant dense<0.000000e+00> : vector<17xf32>
    %587 = vector.multi_reduction <add>, %584, %cst_267 [1] : vector<17x32xf32> to vector<17xf32>
    %588 = vector.shape_cast %587 : vector<17xf32> to vector<17x1xf32>
    %cst_268 = arith.constant 3.200000e+01 : f32
    %589 = vector.broadcast %cst_268 : f32 to vector<17x1xf32>
    %590 = arith.divf %588, %589 : vector<17x1xf32>
    %591 = vector.broadcast %590 : vector<17x1xf32> to vector<17x32xf32>
    %592 = arith.subf %584, %591 : vector<17x32xf32>
    %593 = arith.mulf %592, %592 : vector<17x32xf32>
    %cst_269 = arith.constant dense<0.000000e+00> : vector<17xf32>
    %594 = vector.multi_reduction <add>, %593, %cst_269 [1] : vector<17x32xf32> to vector<17xf32>
    %595 = vector.shape_cast %594 : vector<17xf32> to vector<17x1xf32>
    %cst_270 = arith.constant 3.200000e+01 : f32
    %596 = vector.broadcast %cst_270 : f32 to vector<17x1xf32>
    %597 = arith.divf %595, %596 : vector<17x1xf32>
    %598 = vector.broadcast %590 : vector<17x1xf32> to vector<17x32xf32>
    %599 = arith.subf %584, %598 : vector<17x32xf32>
    %cst_271 = arith.constant 9.99999997E-7 : f32
    %600 = vector.broadcast %cst_271 : f32 to vector<17x1xf32>
    %601 = arith.addf %597, %600 : vector<17x1xf32>
    %602 = math.rsqrt %601 : vector<17x1xf32>
    %603 = vector.broadcast %602 : vector<17x1xf32> to vector<17x32xf32>
    %604 = arith.mulf %599, %603 : vector<17x32xf32>
    %605 = vector.broadcast %585 : vector<1x32xf32> to vector<17x32xf32>
    %606 = arith.mulf %604, %605 : vector<17x32xf32>
    %607 = vector.broadcast %586 : vector<1x32xf32> to vector<17x32xf32>
    %608 = arith.addf %606, %607 : vector<17x32xf32>
    %c0_272 = arith.constant 0 : index
    %c0_273 = arith.constant 0 : index
    %c0_274 = arith.constant 0 : index
    %609 = vector.load %arg20[%c0_272, %c0_273, %c0_274] : memref<1x17x32xf32, #tpu.memory_space<vmem>>, vector<1x17x32xf32>
    %610 = vector.shape_cast %609 : vector<1x17x32xf32> to vector<17x32xf32>
    %611 = vector.shape_cast %608 : vector<17x32xf32> to vector<1x17x32xf32>
    tpu.vector_store %arg20[%c0_272, %c0_273, %c0_274], %611 {strides = array<i32>} : memref<1x17x32xf32, #tpu.memory_space<vmem>>, vector<1x17x32xf32>,
    return
  }
  func.func @transform_0(%arg0: i32) -> (i32, i32, i32) {
    %c0_i32 = arith.constant 0 : i32
    %c0_i32_0 = arith.constant 0 : i32
    %c0_i32_1 = arith.constant 0 : i32
    return %arg0, %c0_i32, %c0_i32_0 : i32, i32, i32
  }
  func.func @transform_1(%arg0: i32) -> (i32, i32) {
    %c0_i32 = arith.constant 0 : i32
    %c0_i32_0 = arith.constant 0 : i32
    %c0_i32_1 = arith.constant 0 : i32
    return %c0_i32, %c0_i32_0 : i32, i32
  }
  func.func @transform_2(%arg0: i32) -> (i32, i32) {
    %c0_i32 = arith.constant 0 : i32
    %c0_i32_0 = arith.constant 0 : i32
    %c0_i32_1 = arith.constant 0 : i32
    return %c0_i32, %c0_i32_0 : i32, i32
  }
  func.func @transform_3(%arg0: i32) -> (i32, i32) {
    %c0_i32 = arith.constant 0 : i32
    %c0_i32_0 = arith.constant 0 : i32
    %c0_i32_1 = arith.constant 0 : i32
    return %c0_i32, %c0_i32_0 : i32, i32
  }
  func.func @transform_4(%arg0: i32) -> (i32, i32) {
    %c0_i32 = arith.constant 0 : i32
    %c0_i32_0 = arith.constant 0 : i32
    %c0_i32_1 = arith.constant 0 : i32
    return %c0_i32, %c0_i32_0 : i32, i32
  }
  func.func @transform_5(%arg0: i32) -> (i32, i32, i32) {
    %c0_i32 = arith.constant 0 : i32
    %c0_i32_0 = arith.constant 0 : i32
    %c0_i32_1 = arith.constant 0 : i32
    %c0_i32_2 = arith.constant 0 : i32
    return %c0_i32, %c0_i32_0, %c0_i32_1 : i32, i32, i32
  }
  func.func @transform_6(%arg0: i32) -> (i32, i32, i32) {
    %c0_i32 = arith.constant 0 : i32
    %c0_i32_0 = arith.constant 0 : i32
    %c0_i32_1 = arith.constant 0 : i32
    %c0_i32_2 = arith.constant 0 : i32
    return %c0_i32, %c0_i32_0, %c0_i32_1 : i32, i32, i32
  }
  func.func @transform_7(%arg0: i32) -> (i32, i32, i32) {
    %c0_i32 = arith.constant 0 : i32
    %c0_i32_0 = arith.constant 0 : i32
    %c0_i32_1 = arith.constant 0 : i32
    %c0_i32_2 = arith.constant 0 : i32
    return %c0_i32, %c0_i32_0, %c0_i32_1 : i32, i32, i32
  }
  func.func @transform_8(%arg0: i32) -> (i32, i32, i32) {
    %c0_i32 = arith.constant 0 : i32
    %c0_i32_0 = arith.constant 0 : i32
    %c0_i32_1 = arith.constant 0 : i32
    %c0_i32_2 = arith.constant 0 : i32
    return %c0_i32, %c0_i32_0, %c0_i32_1 : i32, i32, i32
  }
  func.func @transform_9(%arg0: i32) -> (i32, i32, i32) {
    %c0_i32 = arith.constant 0 : i32
    %c0_i32_0 = arith.constant 0 : i32
    %c0_i32_1 = arith.constant 0 : i32
    %c0_i32_2 = arith.constant 0 : i32
    return %c0_i32, %c0_i32_0, %c0_i32_1 : i32, i32, i32
  }
  func.func @transform_10(%arg0: i32) -> (i32, i32, i32) {
    %c0_i32 = arith.constant 0 : i32
    %c0_i32_0 = arith.constant 0 : i32
    %c0_i32_1 = arith.constant 0 : i32
    %c0_i32_2 = arith.constant 0 : i32
    return %c0_i32, %c0_i32_0, %c0_i32_1 : i32, i32, i32
  }
  func.func @transform_11(%arg0: i32) -> (i32, i32, i32) {
    %c0_i32 = arith.constant 0 : i32
    %c0_i32_0 = arith.constant 0 : i32
    %c0_i32_1 = arith.constant 0 : i32
    %c0_i32_2 = arith.constant 0 : i32
    return %c0_i32, %c0_i32_0, %c0_i32_1 : i32, i32, i32
  }
  func.func @transform_12(%arg0: i32) -> (i32, i32, i32) {
    %c0_i32 = arith.constant 0 : i32
    %c0_i32_0 = arith.constant 0 : i32
    %c0_i32_1 = arith.constant 0 : i32
    %c0_i32_2 = arith.constant 0 : i32
    return %c0_i32, %c0_i32_0, %c0_i32_1 : i32, i32, i32
  }
  func.func @transform_13(%arg0: i32) -> (i32, i32, i32) {
    %c0_i32 = arith.constant 0 : i32
    %c0_i32_0 = arith.constant 0 : i32
    %c0_i32_1 = arith.constant 0 : i32
    %c0_i32_2 = arith.constant 0 : i32
    return %c0_i32, %c0_i32_0, %c0_i32_1 : i32, i32, i32
  }
  func.func @transform_14(%arg0: i32) -> (i32, i32, i32) {
    %c0_i32 = arith.constant 0 : i32
    %c0_i32_0 = arith.constant 0 : i32
    %c0_i32_1 = arith.constant 0 : i32
    %c0_i32_2 = arith.constant 0 : i32
    return %c0_i32, %c0_i32_0, %c0_i32_1 : i32, i32, i32
  }
  func.func @transform_15(%arg0: i32) -> (i32, i32, i32) {
    %c0_i32 = arith.constant 0 : i32
    %c0_i32_0 = arith.constant 0 : i32
    %c0_i32_1 = arith.constant 0 : i32
    %c0_i32_2 = arith.constant 0 : i32
    return %c0_i32, %c0_i32_0, %c0_i32_1 : i32, i32, i32
  }
  func.func @transform_16(%arg0: i32) -> (i32, i32, i32) {
    %c0_i32 = arith.constant 0 : i32
    %c0_i32_0 = arith.constant 0 : i32
    %c0_i32_1 = arith.constant 0 : i32
    %c0_i32_2 = arith.constant 0 : i32
    return %c0_i32, %c0_i32_0, %c0_i32_1 : i32, i32, i32
  }
  func.func @transform_17(%arg0: i32) -> (i32, i32) {
    %c0_i32 = arith.constant 0 : i32
    %c0_i32_0 = arith.constant 0 : i32
    %c0_i32_1 = arith.constant 0 : i32
    return %c0_i32, %c0_i32_0 : i32, i32
  }
  func.func @transform_18(%arg0: i32) -> (i32, i32) {
    %c0_i32 = arith.constant 0 : i32
    %c0_i32_0 = arith.constant 0 : i32
    %c0_i32_1 = arith.constant 0 : i32
    return %c0_i32, %c0_i32_0 : i32, i32
  }
  func.func @transform_19(%arg0: i32) -> (i32, i32, i32) {
    %c0_i32 = arith.constant 0 : i32
    %c0_i32_0 = arith.constant 0 : i32
    %c0_i32_1 = arith.constant 0 : i32
    return %arg0, %c0_i32, %c0_i32_0 : i32, i32, i32
  }
}

</mosaic_0001>

<llo_original>
// kernel: radio_forward.1
$region0: #{radio_forward.1}
  #allocation0 [shape = 'u32[]', space=smem, size = 0x4, offset = 0x4, fixed_abs, tag = 'smem constant byte address 0x4 - core index']
  #allocation1 [shape = 'u32[144,128]{1,0:T(1,128)}', space=vmem, size = 0x12000, scoped, tag = 'internal scratch']
  %s0 = inlined_call_operand.vmem [shape: f32[2,17,48], index: 0, kind: input, shape index: {}]
  %s1 = inlined_call_operand.vmem [shape: bf16[48,32], index: 1, kind: input, shape index: {}]
  %s2 = inlined_call_operand.vmem [shape: f32[1,32], index: 2, kind: input, shape index: {}]
  %s3 = inlined_call_operand.vmem [shape: f32[1,32], index: 3, kind: input, shape index: {}]
  %s4 = inlined_call_operand.vmem [shape: f32[17,32], index: 4, kind: input, shape index: {}]
  %s5 = inlined_call_operand.vmem [shape: f32[4,1,32], index: 5, kind: input, shape index: {}]
  %s6 = inlined_call_operand.vmem [shape: f32[4,1,32], index: 6, kind: input, shape index: {}]
  %s7 = inlined_call_operand.vmem [shape: bf16[4,32,96], index: 7, kind: input, shape index: {}]
  %s8 = inlined_call_operand.vmem [shape: f32[4,1,96], index: 8, kind: input, shape index: {}]
  %s9 = inlined_call_operand.vmem [shape: bf16[4,32,32], index: 9, kind: input, shape index: {}]
  %s10 = inlined_call_operand.vmem [shape: f32[4,1,32], index: 10, kind: input, shape index: {}]
  %s11 = inlined_call_operand.vmem [shape: f32[4,1,32], index: 11, kind: input, shape index: {}]
  %s12 = inlined_call_operand.vmem [shape: f32[4,1,32], index: 12, kind: input, shape index: {}]
  %s13 = inlined_call_operand.vmem [shape: bf16[4,32,128], index: 13, kind: input, shape index: {}]
  %s14 = inlined_call_operand.vmem [shape: f32[4,1,128], index: 14, kind: input, shape index: {}]
  %s15 = inlined_call_operand.vmem [shape: bf16[4,128,32], index: 15, kind: input, shape index: {}]
  %s16 = inlined_call_operand.vmem [shape: f32[4,1,32], index: 16, kind: input, shape index: {}]
  %s17 = inlined_call_operand.vmem [shape: f32[1,32], index: 17, kind: input, shape index: {}]
  %s18 = inlined_call_operand.vmem [shape: f32[1,32], index: 18, kind: input, shape index: {}]
  %s19 = inlined_call_operand.vmem [shape: f32[2,17,32], index: 19, kind: output, shape index: {}]
  %s20 = sld [smem:[#allocation0]]
  $region109: #{radio_forward.1} parent=0
    _
  %s22 = ssub.s32 1, %s20
  %s23 = scalar_select 0, %s22, %s20
  loop: start=0, step=1, limit=4
  $region2: #{radio_forward.1} parent=0 // loop_pre_header
    _
  $region3: #{radio_forward.1} parent=0 // loop_header
    %s25 = sphi 0, %s29
    %p26 = scmp.ge.s32.totalorder %s25, 4
    %s35 = sphi 0, %s37
    %s38 = sphi 0, %s35
    %s39 = sphi 0, %s38
    %s55 = sphi 0, %s39
    %s59 = sphi 0, %s59
    %s61 = sphi 0, %s59
    %s62 = sphi 0, %s61
    %s76 = sphi 0, %s62
    %s80 = sphi 0, %s80
    %s82 = sphi 0, %s80
    %s83 = sphi 0, %s82
    %s97 = sphi 0, %s83
    %s101 = sphi 0, %s101
    %s103 = sphi 0, %s101
    %s104 = sphi 0, %s103
    %s118 = sphi 0, %s104
    %s122 = sphi 0, %s122
    %s124 = sphi 0, %s122
    %s125 = sphi 0, %s124
    %s139 = sphi 0, %s125
    %s143 = sphi 0, %s143
    %s145 = sphi 0, %s143
    %s146 = sphi 0, %s145
    %s160 = sphi 0, %s146
    %s164 = sphi 0, %s164
    %s166 = sphi 0, %s164
    %s167 = sphi 0, %s166
    %s181 = sphi 0, %s167
    %s185 = sphi 0, %s185
    %s187 = sphi 0, %s185
    %s188 = sphi 0, %s187
    %s202 = sphi 0, %s188
    %s206 = sphi 0, %s206
    %s208 = sphi 0, %s206
    %s209 = sphi 0, %s208
    %s223 = sphi 0, %s209
    %s227 = sphi 0, %s227
    %s229 = sphi 0, %s227
    %s230 = sphi 0, %s229
    %s244 = sphi 0, %s230
    %s248 = sphi 0, %s248
    %s250 = sphi 0, %s248
    %s251 = sphi 0, %s250
    %s265 = sphi 0, %s251
    %s269 = sphi 0, %s269
    %s271 = sphi 0, %s269
    %s272 = sphi 0, %s271
    %s286 = sphi 0, %s272
    %s290 = sphi 0, %s290
    %s292 = sphi 0, %s290
    %s293 = sphi 0, %s292
    %s307 = sphi 0, %s293
    %s311 = sphi 0, %s311
    %s313 = sphi 0, %s311
    %s314 = sphi 0, %s313
    %s328 = sphi 0, %s314
    %s332 = sphi 0, %s332
    %s334 = sphi 0, %s332
    %s335 = sphi 0, %s334
    %s349 = sphi 0, %s335
    %s353 = sphi 0, %s353
    %s355 = sphi 0, %s353
    %s356 = sphi 0, %s355
    %s370 = sphi 0, %s356
    %s374 = sphi 0, %s374
    %s376 = sphi 0, %s374
    %s377 = sphi 0, %s376
    %s391 = sphi 0, %s377
    %s395 = sphi 0, %s395
    %s397 = sphi 0, %s395
    %s398 = sphi 0, %s397
    %s412 = sphi 0, %s398
    %s416 = sphi 0, %s416
    %s418 = sphi 0, %s416
    %s419 = sphi 0, %s418
    %s433 = sphi 0, %s419
    %s439 = sphi 0, %s441
    %s442 = sphi 0, %s439
    %s443 = sphi 0, %s442
    %s459 = sphi 0, %s443
  $region4: #{radio_forward.1} parent=0 // loop_header_branch
    %28 = sbr.rel (%p26) target = $region8
  $region5: #{radio_forward.1} parent=0 // loop_body
    %s30 = ssub.s32 %s25, 1
    %s31 = ssub.s32 %s25, 2
    %s32 = sadd.s32 %s25, 1
    %s33 = ssub.s32 %s25, %s32
    %p34 = scmp.eq.s32.totalorder %s33, 0
    %s36 = sadd.s32 %s35, 1
    %s37 = scalar_select %p34, %s35, %s36
    %p40 = pneg %p34
    %p41 = scmp.eq.s32.totalorder %s25, 1
    %p42 = por %p40, %p41
    %p43 = scmp.ne.s32.totalorder %s35, %s38
    %p44 = scmp.eq.s32.totalorder %s25, 0
    %p45 = por %p43, %p44
    %p46 = scmp.ne.s32.totalorder %s35, %s38
    %p47 = scmp.eq.s32.totalorder %s30, 1
    %p48 = por %p46, %p47
    %p49 = scmp.ne.s32.totalorder %s38, %s39
    %p50 = scmp.eq.s32.totalorder %s30, 0
    %p51 = por %p49, %p50
    %p52 = scmp.ne.s32.totalorder %s38, %s39
    %p53 = scmp.eq.s32.totalorder %s31, 1
    %p54 = por %p52, %p53
    %p56 = scmp.ne.s32.totalorder %s39, %s55
    %p57 = scmp.eq.s32.totalorder %s31, 0
    %p58 = por %p56, %p57
    %s60 = sadd.s32 %s59, 1
    %p63 = scmp.eq.s32.totalorder %s25, 1
    %p64 = scmp.ne.s32.totalorder %s59, %s61
    %p65 = scmp.eq.s32.totalorder %s25, 0
    %p66 = por %p64, %p65
    %p67 = scmp.ne.s32.totalorder %s59, %s61
    %p68 = scmp.eq.s32.totalorder %s30, 1
    %p69 = por %p67, %p68
    %p70 = scmp.ne.s32.totalorder %s61, %s62
    %p71 = scmp.eq.s32.totalorder %s30, 0
    %p72 = por %p70, %p71
    %p73 = scmp.ne.s32.totalorder %s61, %s62
    %p74 = scmp.eq.s32.totalorder %s31, 1
    %p75 = por %p73, %p74
    %p77 = scmp.ne.s32.totalorder %s62, %s76
    %p78 = scmp.eq.s32.totalorder %s31, 0
    %p79 = por %p77, %p78
    %s81 = sadd.s32 %s80, 1
    %p84 = scmp.eq.s32.totalorder %s25, 1
    %p85 = scmp.ne.s32.totalorder %s80, %s82
    %p86 = scmp.eq.s32.totalorder %s25, 0
    %p87 = por %p85, %p86
    %p88 = scmp.ne.s32.totalorder %s80, %s82
    %p89 = scmp.eq.s32.totalorder %s30, 1
    %p90 = por %p88, %p89
    %p91 = scmp.ne.s32.totalorder %s82, %s83
    %p92 = scmp.eq.s32.totalorder %s30, 0
    %p93 = por %p91, %p92
    %p94 = scmp.ne.s32.totalorder %s82, %s83
    %p95 = scmp.eq.s32.totalorder %s31, 1
    %p96 = por %p94, %p95
    %p98 = scmp.ne.s32.totalorder %s83, %s97
    %p99 = scmp.eq.s32.totalorder %s31, 0
    %p100 = por %p98, %p99
    %s102 = sadd.s32 %s101, 1
    %p105 = scmp.eq.s32.totalorder %s25, 1
    %p106 = scmp.ne.s32.totalorder %s101, %s103
    %p107 = scmp.eq.s32.totalorder %s25, 0
    %p108 = por %p106, %p107
    %p109 = scmp.ne.s32.totalorder %s101, %s103
    %p110 = scmp.eq.s32.totalorder %s30, 1
    %p111 = por %p109, %p110
    %p112 = scmp.ne.s32.totalorder %s103, %s104
    %p113 = scmp.eq.s32.totalorder %s30, 0
    %p114 = por %p112, %p113
    %p115 = scmp.ne.s32.totalorder %s103, %s104
    %p116 = scmp.eq.s32.totalorder %s31, 1
    %p117 = por %p115, %p116
    %p119 = scmp.ne.s32.totalorder %s104, %s118
    %p120 = scmp.eq.s32.totalorder %s31, 0
    %p121 = por %p119, %p120
    %s123 = sadd.s32 %s122, 1
    %p126 = scmp.eq.s32.totalorder %s25, 1
    %p127 = scmp.ne.s32.totalorder %s122, %s124
    %p128 = scmp.eq.s32.totalorder %s25, 0
    %p129 = por %p127, %p128
    %p130 = scmp.ne.s32.totalorder %s122, %s124
    %p131 = scmp.eq.s32.totalorder %s30, 1
    %p132 = por %p130, %p131
    %p133 = scmp.ne.s32.totalorder %s124, %s125
    %p134 = scmp.eq.s32.totalorder %s30, 0
    %p135 = por %p133, %p134
    %p136 = scmp.ne.s32.totalorder %s124, %s125
    %p137 = scmp.eq.s32.totalorder %s31, 1
    %p138 = por %p136, %p137
    %p140 = scmp.ne.s32.totalorder %s125, %s139
    %p141 = scmp.eq.s32.totalorder %s31, 0
    %p142 = por %p140, %p141
    %s144 = sadd.s32 %s143, 1
    %p147 = scmp.eq.s32.totalorder %s25, 1
    %p148 = scmp.ne.s32.totalorder %s143, %s145
    %p149 = scmp.eq.s32.totalorder %s25, 0
    %p150 = por %p148, %p149
    %p151 = scmp.ne.s32.totalorder %s143, %s145
    %p152 = scmp.eq.s32.totalorder %s30, 1
    %p153 = por %p151, %p152
    %p154 = scmp.ne.s32.totalorder %s145, %s146
    %p155 = scmp.eq.s32.totalorder %s30, 0
    %p156 = por %p154, %p155
    %p157 = scmp.ne.s32.totalorder %s145, %s146
    %p158 = scmp.eq.s32.totalorder %s31, 1
    %p159 = por %p157, %p158
    %p161 = scmp.ne.s32.totalorder %s146, %s160
    %p162 = scmp.eq.s32.totalorder %s31, 0
    %p163 = por %p161, %p162
    %s165 = sadd.s32 %s164, 1
    %p168 = scmp.eq.s32.totalorder %s25, 1
    %p169 = scmp.ne.s32.totalorder %s164, %s166
    %p170 = scmp.eq.s32.totalorder %s25, 0
    %p171 = por %p169, %p170
    %p172 = scmp.ne.s32.totalorder %s164, %s166
    %p173 = scmp.eq.s32.totalorder %s30, 1
    %p174 = por %p172, %p173
    %p175 = scmp.ne.s32.totalorder %s166, %s167
    %p176 = scmp.eq.s32.totalorder %s30, 0
    %p177 = por %p175, %p176
    %p178 = scmp.ne.s32.totalorder %s166, %s167
    %p179 = scmp.eq.s32.totalorder %s31, 1
    %p180 = por %p178, %p179
    %p182 = scmp.ne.s32.totalorder %s167, %s181
    %p183 = scmp.eq.s32.totalorder %s31, 0
    %p184 = por %p182, %p183
    %s186 = sadd.s32 %s185, 1
    %p189 = scmp.eq.s32.totalorder %s25, 1
    %p190 = scmp.ne.s32.totalorder %s185, %s187
    %p191 = scmp.eq.s32.totalorder %s25, 0
    %p192 = por %p190, %p191
    %p193 = scmp.ne.s32.totalorder %s185, %s187
    %p194 = scmp.eq.s32.totalorder %s30, 1
    %p195 = por %p193, %p194
    %p196 = scmp.ne.s32.totalorder %s187, %s188
    %p197 = scmp.eq.s32.totalorder %s30, 0
    %p198 = por %p196, %p197
    %p199 = scmp.ne.s32.totalorder %s187, %s188
    %p200 = scmp.eq.s32.totalorder %s31, 1
    %p201 = por %p199, %p200
    %p203 = scmp.ne.s32.totalorder %s188, %s202
    %p204 = scmp.eq.s32.totalorder %s31, 0
    %p205 = por %p203, %p204
    %s207 = sadd.s32 %s206, 1
    %p210 = scmp.eq.s32.totalorder %s25, 1
    %p211 = scmp.ne.s32.totalorder %s206, %s208
    %p212 = scmp.eq.s32.totalorder %s25, 0
    %p213 = por %p211, %p212
    %p214 = scmp.ne.s32.totalorder %s206, %s208
    %p215 = scmp.eq.s32.totalorder %s30, 1
    %p216 = por %p214, %p215
    %p217 = scmp.ne.s32.totalorder %s208, %s209
    %p218 = scmp.eq.s32.totalorder %s30, 0
    %p219 = por %p217, %p218
    %p220 = scmp.ne.s32.totalorder %s208, %s209
    %p221 = scmp.eq.s32.totalorder %s31, 1
    %p222 = por %p220, %p221
    %p224 = scmp.ne.s32.totalorder %s209, %s223
    %p225 = scmp.eq.s32.totalorder %s31, 0
    %p226 = por %p224, %p225
    %s228 = sadd.s32 %s227, 1
    %p231 = scmp.eq.s32.totalorder %s25, 1
    %p232 = scmp.ne.s32.totalorder %s227, %s229
    %p233 = scmp.eq.s32.totalorder %s25, 0
    %p234 = por %p232, %p233
    %p235 = scmp.ne.s32.totalorder %s227, %s229
    %p236 = scmp.eq.s32.totalorder %s30, 1
    %p237 = por %p235, %p236
    %p238 = scmp.ne.s32.totalorder %s229, %s230
    %p239 = scmp.eq.s32.totalorder %s30, 0
    %p240 = por %p238, %p239
    %p241 = scmp.ne.s32.totalorder %s229, %s230
    %p242 = scmp.eq.s32.totalorder %s31, 1
    %p243 = por %p241, %p242
    %p245 = scmp.ne.s32.totalorder %s230, %s244
    %p246 = scmp.eq.s32.totalorder %s31, 0
    %p247 = por %p245, %p246
    %s249 = sadd.s32 %s248, 1
    %p252 = scmp.eq.s32.totalorder %s25, 1
    %p253 = scmp.ne.s32.totalorder %s248, %s250
    %p254 = scmp.eq.s32.totalorder %s25, 0
    %p255 = por %p253, %p254
    %p256 = scmp.ne.s32.totalorder %s248, %s250
    %p257 = scmp.eq.s32.totalorder %s30, 1
    %p258 = por %p256, %p257
    %p259 = scmp.ne.s32.totalorder %s250, %s251
    %p260 = scmp.eq.s32.totalorder %s30, 0
    %p261 = por %p259, %p260
    %p262 = scmp.ne.s32.totalorder %s250, %s251
    %p263 = scmp.eq.s32.totalorder %s31, 1
    %p264 = por %p262, %p263
    %p266 = scmp.ne.s32.totalorder %s251, %s265
    %p267 = scmp.eq.s32.totalorder %s31, 0
    %p268 = por %p266, %p267
    %s270 = sadd.s32 %s269, 1
    %p273 = scmp.eq.s32.totalorder %s25, 1
    %p274 = scmp.ne.s32.totalorder %s269, %s271
    %p275 = scmp.eq.s32.totalorder %s25, 0
    %p276 = por %p274, %p275
    %p277 = scmp.ne.s32.totalorder %s269, %s271
    %p278 = scmp.eq.s32.totalorder %s30, 1
    %p279 = por %p277, %p278
    %p280 = scmp.ne.s32.totalorder %s271, %s272
    %p281 = scmp.eq.s32.totalorder %s30, 0
    %p282 = por %p280, %p281
    %p283 = scmp.ne.s32.totalorder %s271, %s272
    %p284 = scmp.eq.s32.totalorder %s31, 1
    %p285 = por %p283, %p284
    %p287 = scmp.ne.s32.totalorder %s272, %s286
    %p288 = scmp.eq.s32.totalorder %s31, 0
    %p289 = por %p287, %p288
    %s291 = sadd.s32 %s290, 1
    %p294 = scmp.eq.s32.totalorder %s25, 1
    %p295 = scmp.ne.s32.totalorder %s290, %s292
    %p296 = scmp.eq.s32.totalorder %s25, 0
    %p297 = por %p295, %p296
    %p298 = scmp.ne.s32.totalorder %s290, %s292
    %p299 = scmp.eq.s32.totalorder %s30, 1
    %p300 = por %p298, %p299
    %p301 = scmp.ne.s32.totalorder %s292, %s293
    %p302 = scmp.eq.s32.totalorder %s30, 0
    %p303 = por %p301, %p302
    %p304 = scmp.ne.s32.totalorder %s292, %s293
    %p305 = scmp.eq.s32.totalorder %s31, 1
    %p306 = por %p304, %p305
    %p308 = scmp.ne.s32.totalorder %s293, %s307
    %p309 = scmp.eq.s32.totalorder %s31, 0
    %p310 = por %p308, %p309
    %s312 = sadd.s32 %s311, 1
    %p315 = scmp.eq.s32.totalorder %s25, 1
    %p316 = scmp.ne.s32.totalorder %s311, %s313
    %p317 = scmp.eq.s32.totalorder %s25, 0
    %p318 = por %p316, %p317
    %p319 = scmp.ne.s32.totalorder %s311, %s313
    %p320 = scmp.eq.s32.totalorder %s30, 1
    %p321 = por %p319, %p320
    %p322 = scmp.ne.s32.totalorder %s313, %s314
    %p323 = scmp.eq.s32.totalorder %s30, 0
    %p324 = por %p322, %p323
    %p325 = scmp.ne.s32.totalorder %s313, %s314
    %p326 = scmp.eq.s32.totalorder %s31, 1
    %p327 = por %p325, %p326
    %p329 = scmp.ne.s32.totalorder %s314, %s328
    %p330 = scmp.eq.s32.totalorder %s31, 0
    %p331 = por %p329, %p330
    %s333 = sadd.s32 %s332, 1
    %p336 = scmp.eq.s32.totalorder %s25, 1
    %p337 = scmp.ne.s32.totalorder %s332, %s334
    %p338 = scmp.eq.s32.totalorder %s25, 0
    %p339 = por %p337, %p338
    %p340 = scmp.ne.s32.totalorder %s332, %s334
    %p341 = scmp.eq.s32.totalorder %s30, 1
    %p342 = por %p340, %p341
    %p343 = scmp.ne.s32.totalorder %s334, %s335
    %p344 = scmp.eq.s32.totalorder %s30, 0
    %p345 = por %p343, %p344
    %p346 = scmp.ne.s32.totalorder %s334, %s335
    %p347 = scmp.eq.s32.totalorder %s31, 1
    %p348 = por %p346, %p347
    %p350 = scmp.ne.s32.totalorder %s335, %s349
    %p351 = scmp.eq.s32.totalorder %s31, 0
    %p352 = por %p350, %p351
    %s354 = sadd.s32 %s353, 1
    %p357 = scmp.eq.s32.totalorder %s25, 1
    %p358 = scmp.ne.s32.totalorder %s353, %s355
    %p359 = scmp.eq.s32.totalorder %s25, 0
    %p360 = por %p358, %p359
    %p361 = scmp.ne.s32.totalorder %s353, %s355
    %p362 = scmp.eq.s32.totalorder %s30, 1
    %p363 = por %p361, %p362
    %p364 = scmp.ne.s32.totalorder %s355, %s356
    %p365 = scmp.eq.s32.totalorder %s30, 0
    %p366 = por %p364, %p365
    %p367 = scmp.ne.s32.totalorder %s355, %s356
    %p368 = scmp.eq.s32.totalorder %s31, 1
    %p369 = por %p367, %p368
    %p371 = scmp.ne.s32.totalorder %s356, %s370
    %p372 = scmp.eq.s32.totalorder %s31, 0
    %p373 = por %p371, %p372
    %s375 = sadd.s32 %s374, 1
    %p378 = scmp.eq.s32.totalorder %s25, 1
    %p379 = scmp.ne.s32.totalorder %s374, %s376
    %p380 = scmp.eq.s32.totalorder %s25, 0
    %p381 = por %p379, %p380
    %p382 = scmp.ne.s32.totalorder %s374, %s376
    %p383 = scmp.eq.s32.totalorder %s30, 1
    %p384 = por %p382, %p383
    %p385 = scmp.ne.s32.totalorder %s376, %s377
    %p386 = scmp.eq.s32.totalorder %s30, 0
    %p387 = por %p385, %p386
    %p388 = scmp.ne.s32.totalorder %s376, %s377
    %p389 = scmp.eq.s32.totalorder %s31, 1
    %p390 = por %p388, %p389
    %p392 = scmp.ne.s32.totalorder %s377, %s391
    %p393 = scmp.eq.s32.totalorder %s31, 0
    %p394 = por %p392, %p393
    %s396 = sadd.s32 %s395, 1
    %p399 = scmp.eq.s32.totalorder %s25, 1
    %p400 = scmp.ne.s32.totalorder %s395, %s397
    %p401 = scmp.eq.s32.totalorder %s25, 0
    %p402 = por %p400, %p401
    %p403 = scmp.ne.s32.totalorder %s395, %s397
    %p404 = scmp.eq.s32.totalorder %s30, 1
    %p405 = por %p403, %p404
    %p406 = scmp.ne.s32.totalorder %s397, %s398
    %p407 = scmp.eq.s32.totalorder %s30, 0
    %p408 = por %p406, %p407
    %p409 = scmp.ne.s32.totalorder %s397, %s398
    %p410 = scmp.eq.s32.totalorder %s31, 1
    %p411 = por %p409, %p410
    %p413 = scmp.ne.s32.totalorder %s398, %s412
    %p414 = scmp.eq.s32.totalorder %s31, 0
    %p415 = por %p413, %p414
    %s417 = sadd.s32 %s416, 1
    %p420 = scmp.eq.s32.totalorder %s25, 1
    %p421 = scmp.ne.s32.totalorder %s416, %s418
    %p422 = scmp.eq.s32.totalorder %s25, 0
    %p423 = por %p421, %p422
    %p424 = scmp.ne.s32.totalorder %s416, %s418
    %p425 = scmp.eq.s32.totalorder %s30, 1
    %p426 = por %p424, %p425
    %p427 = scmp.ne.s32.totalorder %s418, %s419
    %p428 = scmp.eq.s32.totalorder %s30, 0
    %p429 = por %p427, %p428
    %p430 = scmp.ne.s32.totalorder %s418, %s419
    %p431 = scmp.eq.s32.totalorder %s31, 1
    %p432 = por %p430, %p431
    %p434 = scmp.ne.s32.totalorder %s419, %s433
    %p435 = scmp.eq.s32.totalorder %s31, 0
    %p436 = por %p434, %p435
    %s437 = ssub.s32 %s25, %s32
    %p438 = scmp.eq.s32.totalorder %s437, 0
    %s440 = sadd.s32 %s439, 1
    %s441 = scalar_select %p438, %s439, %s440
    %p444 = pneg %p438
    %p445 = scmp.eq.s32.totalorder %s25, 1
    %p446 = por %p444, %p445
    %p447 = scmp.ne.s32.totalorder %s439, %s442
    %p448 = scmp.eq.s32.totalorder %s25, 0
    %p449 = por %p447, %p448
    %p450 = scmp.ne.s32.totalorder %s439, %s442
    %p451 = scmp.eq.s32.totalorder %s30, 1
    %p452 = por %p450, %p451
    %p453 = scmp.ne.s32.totalorder %s442, %s443
    %p454 = scmp.eq.s32.totalorder %s30, 0
    %p455 = por %p453, %p454
    %p456 = scmp.ne.s32.totalorder %s442, %s443
    %p457 = scmp.eq.s32.totalorder %s31, 1
    %p458 = por %p456, %p457
    %p460 = scmp.ne.s32.totalorder %s443, %s459
    %p461 = scmp.eq.s32.totalorder %s31, 0
    %p462 = por %p460, %p461
    %p463 = scmp.le.s32.totalorder 1, %s25
    %p464 = scmp.lt.s32.totalorder %s25, 3
    %p465 = pnand %p463, %p464
    %p466 = pneg %p465
    // Predicated region
    $region9: #{radio_forward.1} parent=5 // pred_check
      _
    $region10: #{radio_forward.1} parent=5 // pred_check_branch
      %468 = sbr.rel (%p465) target = $region12
    $region11: #{radio_forward.1} parent=5 // pred_region
      %s469 = ssub.s32 %s25, 1
      // Predicated region
      $region13: #{radio_forward.1} parent=11 // pred_check
        %p470 = pneg %p72
      $region14: #{radio_forward.1} parent=11 // pred_check_branch
        %472 = sbr.rel (%p470) target = $region16
      $region15: #{radio_forward.1} parent=11 // pred_region
        _
      $region16: #{radio_forward.1} parent=11 // pred_fallthru
        _
      // Predicated region
      $region17: #{radio_forward.1} parent=11 // pred_check
        %p473 = pneg %p93
      $region18: #{radio_forward.1} parent=11 // pred_check_branch
        %475 = sbr.rel (%p473) target = $region20
      $region19: #{radio_forward.1} parent=11 // pred_region
        _
      $region20: #{radio_forward.1} parent=11 // pred_fallthru
        _
      // Predicated region
      $region21: #{radio_forward.1} parent=11 // pred_check
        %p476 = pneg %p114
      $region22: #{radio_forward.1} parent=11 // pred_check_branch
        %478 = sbr.rel (%p476) target = $region24
      $region23: #{radio_forward.1} parent=11 // pred_region
        _
      $region24: #{radio_forward.1} parent=11 // pred_fallthru
        _
      // Predicated region
      $region25: #{radio_forward.1} parent=11 // pred_check
        %p479 = pneg %p135
      $region26: #{radio_forward.1} parent=11 // pred_check_branch
        %481 = sbr.rel (%p479) target = $region28
      $region27: #{radio_forward.1} parent=11 // pred_region
        _
      $region28: #{radio_forward.1} parent=11 // pred_fallthru
        _
      // Predicated region
      $region29: #{radio_forward.1} parent=11 // pred_check
        %p482 = pneg %p156
      $region30: #{radio_forward.1} parent=11 // pred_check_branch
        %484 = sbr.rel (%p482) target = $region32
      $region31: #{radio_forward.1} parent=11 // pred_region
        _
      $region32: #{radio_forward.1} parent=11 // pred_fallthru
        _
      // Predicated region
      $region33: #{radio_forward.1} parent=11 // pred_check
        %p485 = pneg %p177
      $region34: #{radio_forward.1} parent=11 // pred_check_branch
        %487 = sbr.rel (%p485) target = $region36
      $region35: #{radio_forward.1} parent=11 // pred_region
        _
      $region36: #{radio_forward.1} parent=11 // pred_fallthru
        _
      // Predicated region
      $region37: #{radio_forward.1} parent=11 // pred_check
        %p488 = pneg %p198
      $region38: #{radio_forward.1} parent=11 // pred_check_branch
        %490 = sbr.rel (%p488) target = $region40
      $region39: #{radio_forward.1} parent=11 // pred_region
        _
      $region40: #{radio_forward.1} parent=11 // pred_fallthru
        _
      // Predicated region
      $region41: #{radio_forward.1} parent=11 // pred_check
        %p491 = pneg %p219
      $region42: #{radio_forward.1} parent=11 // pred_check_branch
        %493 = sbr.rel (%p491) target = $region44
      $region43: #{radio_forward.1} parent=11 // pred_region
        _
      $region44: #{radio_forward.1} parent=11 // pred_fallthru
        _
      // Predicated region
      $region45: #{radio_forward.1} parent=11 // pred_check
        %p494 = pneg %p240
      $region46: #{radio_forward.1} parent=11 // pred_check_branch
        %496 = sbr.rel (%p494) target = $region48
      $region47: #{radio_forward.1} parent=11 // pred_region
        _
      $region48: #{radio_forward.1} parent=11 // pred_fallthru
        _
      // Predicated region
      $region49: #{radio_forward.1} parent=11 // pred_check
        %p497 = pneg %p261
      $region50: #{radio_forward.1} parent=11 // pred_check_branch
        %499 = sbr.rel (%p497) target = $region52
      $region51: #{radio_forward.1} parent=11 // pred_region
        _
      $region52: #{radio_forward.1} parent=11 // pred_fallthru
        _
      // Predicated region
      $region53: #{radio_forward.1} parent=11 // pred_check
        %p500 = pneg %p282
      $region54: #{radio_forward.1} parent=11 // pred_check_branch
        %502 = sbr.rel (%p500) target = $region56
      $region55: #{radio_forward.1} parent=11 // pred_region
        _
      $region56: #{radio_forward.1} parent=11 // pred_fallthru
        _
      // Predicated region
      $region57: #{radio_forward.1} parent=11 // pred_check
        %p503 = pneg %p303
      $region58: #{radio_forward.1} parent=11 // pred_check_branch
        %505 = sbr.rel (%p503) target = $region60
      $region59: #{radio_forward.1} parent=11 // pred_region
        _
      $region60: #{radio_forward.1} parent=11 // pred_fallthru
        _
      // Predicated region
      $region61: #{radio_forward.1} parent=11 // pred_check
        %p506 = pneg %p324
      $region62: #{radio_forward.1} parent=11 // pred_check_branch
        %508 = sbr.rel (%p506) target = $region64
      $region63: #{radio_forward.1} parent=11 // pred_region
        _
      $region64: #{radio_forward.1} parent=11 // pred_fallthru
        _
      // Predicated region
      $region65: #{radio_forward.1} parent=11 // pred_check
        %p509 = pneg %p345
      $region66: #{radio_forward.1} parent=11 // pred_check_branch
        %511 = sbr.rel (%p509) target = $region68
      $region67: #{radio_forward.1} parent=11 // pred_region
        _
      $region68: #{radio_forward.1} parent=11 // pred_fallthru
        _
      // Predicated region
      $region69: #{radio_forward.1} parent=11 // pred_check
        %p512 = pneg %p366
      $region70: #{radio_forward.1} parent=11 // pred_check_branch
        %514 = sbr.rel (%p512) target = $region72
      $region71: #{radio_forward.1} parent=11 // pred_region
        _
      $region72: #{radio_forward.1} parent=11 // pred_fallthru
        _
      // Predicated region
      $region73: #{radio_forward.1} parent=11 // pred_check
        %p515 = pneg %p387
      $region74: #{radio_forward.1} parent=11 // pred_check_branch
        %517 = sbr.rel (%p515) target = $region76
      $region75: #{radio_forward.1} parent=11 // pred_region
        _
      $region76: #{radio_forward.1} parent=11 // pred_fallthru
        _
      // Predicated region
      $region77: #{radio_forward.1} parent=11 // pred_check
        %p518 = pneg %p408
      $region78: #{radio_forward.1} parent=11 // pred_check_branch
        %520 = sbr.rel (%p518) target = $region80
      $region79: #{radio_forward.1} parent=11 // pred_region
        _
      $region80: #{radio_forward.1} parent=11 // pred_fallthru
        _
      // Predicated region
      $region81: #{radio_forward.1} parent=11 // pred_check
        %p521 = pneg %p429
      $region82: #{radio_forward.1} parent=11 // pred_check_branch
        %523 = sbr.rel (%p521) target = $region84
      $region83: #{radio_forward.1} parent=11 // pred_region
        _
      $region84: #{radio_forward.1} parent=11 // pred_fallthru
        _
    $region12: #{radio_forward.1} parent=5 // pred_fallthru
      _
    %p524 = scmp.lt.s32.totalorder %s25, 2
    // Predicated region
    $region85: #{radio_forward.1} parent=5 // pred_check
      %p525 = pneg %p524
    $region86: #{radio_forward.1} parent=5 // pred_check_branch
      %527 = sbr.rel (%p525) target = $region88
    $region87: #{radio_forward.1} parent=5 // pred_region
      // Predicated region
      $region89: #{radio_forward.1} parent=87 // pred_check
        %p528 = pneg %p45
      $region90: #{radio_forward.1} parent=87 // pred_check_branch
        %530 = sbr.rel (%p528) target = $region92
      $region91: #{radio_forward.1} parent=87 // pred_region
        %p531 = scmp.lt.s32.totalorder %s25, 1
        %s532 = scalar_select %p531, %s25, 1
        %s533 = smul.addr %s532, 3
        %s534 = smul.addr %s533, 8
        %s535 = scalar_lea.vmem %s0, %s534
      $region92: #{radio_forward.1} parent=87 // pred_fallthru
        _
    $region88: #{radio_forward.1} parent=5 // pred_fallthru
      _
    %p536 = scmp.le.s32.totalorder 1, %s25
    %p537 = scmp.lt.s32.totalorder %s25, 3
    %p538 = pnand %p536, %p537
    %p539 = pneg %p538
    // Predicated region
    $region93: #{radio_forward.1} parent=5 // pred_check
      _
    $region94: #{radio_forward.1} parent=5 // pred_check_branch
      %541 = sbr.rel (%p538) target = $region96
    $region95: #{radio_forward.1} parent=5 // pred_region
      %s542 = ssub.s32 %s25, 1
      %p543 = scmp.lt.s32.totalorder %s30, 1
      %s544 = scalar_select %p543, %s30, 1
      %s545 = smul.addr %s544, 3
      %s546 = smul.addr %s545, 8
      %s547 = scalar_lea.vmem %s0, %s546
      %p548 = pneg %p51
      %p549 = pneg %p48
      %p550 = pneg %p72
      %p551 = pneg %p69
      %p552 = pneg %p93
      %p553 = pneg %p90
      %p554 = pneg %p114
      %p555 = pneg %p111
      %p556 = pneg %p135
      %p557 = pneg %p132
      %p558 = pneg %p156
      %p559 = pneg %p153
      %p560 = pneg %p177
      %p561 = pneg %p174
      %p562 = pneg %p198
      %p563 = pneg %p195
      %p564 = pneg %p219
      %p565 = pneg %p216
      %p566 = pneg %p240
      %p567 = pneg %p237
      %p568 = pneg %p261
      %p569 = pneg %p258
      %p570 = pneg %p282
      %p571 = pneg %p279
      %p572 = pneg %p303
      %p573 = pneg %p300
      %p574 = pneg %p324
      %p575 = pneg %p321
      %p576 = pneg %p345
      %p577 = pneg %p342
      %p578 = pneg %p366
      %p579 = pneg %p363
      %p580 = pneg %p387
      %p581 = pneg %p384
      %p582 = pneg %p408
      %p583 = pneg %p405
      %p584 = pneg %p429
      %p585 = pneg %p426
      %p586 = pneg %p455
      %p587 = pneg %p452
      %p588 = scmp.lt.s32.totalorder %s30, 1
      %s589 = scalar_select %p588, %s30, 1
      %s590 = smul.addr %s589, 3
      %s591 = smul.addr %s590, 8
      %s592 = scalar_lea.vmem %s19, %s591
      %p593 = scmp.lt.s32.totalorder %s30, 1
      %s594 = scalar_select %p593, %s30, 1
      %s595 = smul.addr %s594, 3
      %s596 = smul.addr %s595, 8
      %s597 = scalar_lea.vmem %s0, %s596
      %p598 = scmp.lt.s32.totalorder %s30, 1
      %s599 = scalar_select %p598, %s30, 1
      %s600 = smul.addr %s599, 3
      %s601 = smul.addr %s600, 8
      %s602 = scalar_lea.vmem %s19, %s601
      %v604 = vld [vmem:[%s597] sm:$0xff]
      %v605 = vld [vmem:[%s597 + $0x8] sm:$0xff]
      %v606 = vld [vmem:[%s597 + $0x10] sm:$0x1]
      %v607 = vpack.c.bf16 %v605, %v604
      %v608 = vpack.c.bf16 %v606, %v606
      %v609 = vld [vmem:[%s1] sm:$0xf]
      %v610 = vld [vmem:[%s1 + $0x4] sm:$0xf]
      %v611 = vld [vmem:[%s1 + $0x8] sm:$0xf]
      %v612 = vld [vmem:[%s1 + $0xc] sm:$0xf]
      %v613 = vld [vmem:[%s1 + $0x10] sm:$0xf]
      %v614 = vld [vmem:[%s1 + $0x14] sm:$0xf]
      %v615 = vld [vmem:[%s2] sm:$0x1]
      %v617 = vlaneseq
      %v618 = vshrl.u32 %v617, 7
      %v619 = vsub.s32 0, %v618
      %v620 = vrot.slane %v615, %v619
      %v628 = vunpack.c.l.b16 %v609
      %v629 = vunpack.c.l.b16 %v610
      %v630 = vunpack.c.l.b16 %v611
      %v631 = vunpack.c.l.b16 %v612
      %v632 = vunpack.c.l.b16 %v613
      %v633 = vunpack.c.l.b16 %v614
      %v634 = vpack.c.b16 %v629, %v628
      %v635 = vpack.c.b16 %v631, %v630
      %v636 = vpack.c.b16 %v633, %v632
      %vm640 = vcmask 392192
      %v642 = vsel %vm640, %v607, 0
      %v645 = vsel %vm640, %v608, 0
      %647 = vmatprep.subr.bf16.mxu0 0
      %648 = vmatpush1.bf16.msra.mxu0 0
      %649 = vmatprep.subr.bf16.mxu0 0
      %650 = vmatpush1.bf16.msra.mxu0 0
      %651 = vmatprep.subr.bf16.mxu0 0
      %652 = vmatpush1.bf16.msra.mxu0 0
      %653 = vmatprep.subr.bf16.mxu0 0
      %654 = vmatpush1.bf16.msra.mxu0 0
      %655 = vmatprep.subr.bf16.mxu0 0
      %656 = vmatpush1.bf16.msra.mxu0 0
      %657 = vmatprep.subr.bf16.mxu0 0
      %658 = vmatpush1.bf16.msra.mxu0 %v636
      %659 = vmatprep.subr.bf16.mxu0 0
      %660 = vmatpush1.bf16.msra.mxu0 %v635
      %661 = vmatprep.subr.bf16.mxu0 0
      %662 = vmatpush1.bf16.msra.mxu0 %v634
      %663 = vmatprep.subr.bf16.mxu0 0
      %664 = vmatpush2.bf16.msra.mxu0 0
      %665 = vmatprep.subr.bf16.mxu0 0
      %666 = vmatpush2.bf16.msra.mxu0 0
      %667 = vmatprep.subr.bf16.mxu0 0
      %668 = vmatpush2.bf16.msra.mxu0 0
      %669 = vmatprep.subr.bf16.mxu0 0
      %670 = vmatpush2.bf16.msra.mxu0 0
      %671 = vmatprep.subr.bf16.mxu0 0
      %672 = vmatpush2.bf16.msra.mxu0 0
      %673 = vmatprep.subr.bf16.mxu0 0
      %674 = vmatpush2.bf16.msra.mxu0 0
      %675 = vmatprep.subr.bf16.mxu0 0
      %676 = vmatpush2.bf16.msra.mxu0 0
      %677 = vmatprep.subr.bf16.mxu0 0
      %678 = vmatpush2.bf16.msra.mxu0 0
      %679 = vmatprep.mubr.bf16.mxu0 0
      %680 = vmatmul.mubr.bf16.gmra.mxu0 %v642
      %v681 = vpop.f32.mrf.mxu0
      %v682 = vadd.f32 %v620, %v681
      %v683 = vpop.f32.mrf.mxu0
      %v684 = vpop.f32.mrf.mxu0
      %v685 = vadd.f32 %v620, %v684
      %v686 = vpop.f32.mrf.mxu0
      %687 = vmatprep.mubr.bf16.mxu0 0
      %688 = vmatmul.mubr.bf16.gmra.mxu0 %v645
      %v689 = vpop.f32.mrf.mxu0
      %v690 = vadd.f32 %v620, %v689
      %v691 = vpop.f32.mrf.mxu0
      %v692 = vpop.f32.mrf.mxu0
      %v693 = vpop.f32.mrf.mxu0
      %694 = vdwg.mxu0
      %v695 = vlaneseq
      %v696 = vshrl.u32 %v695, 7
      %v697 = vadd.s32 %v696, 8
      %v698 = vadd.s32 %v696, 16
      %v699 = vld [vmem:[%s3] sm:$0x1]
      %v701 = vlaneseq
      %v702 = vshrl.u32 %v701, 7
      %v703 = vsub.s32 0, %v702
      %v704 = vrot.slane %v699, %v703
      %vm706 = vcmp.lt.s32.totalorder %v696, 1
      %vm707 = vcmp.lt.s32.totalorder %v697, 1
      %vm708 = vcmp.lt.s32.totalorder %v698, 1
      %v709 = vsel %vm706, %v704, %v682
      %v710 = vsel %vm707, %v704, %v685
      %v711 = vsel %vm708, %v704, %v690
      %v712 = vld [vmem:[%s4] sm:$0xff]
      %v713 = vld [vmem:[%s4 + $0x8] sm:$0xff]
      %v714 = vld [vmem:[%s4 + $0x10] sm:$0x1]
      %v715 = vadd.f32 %v709, %v712
      %v716 = vadd.f32 %v710, %v713
      %v717 = vadd.f32 %v711, %v714
      %v718 = vld [vmem:[%s5] sm:$0x1]
      %v719 = vld [vmem:[%s6] sm:$0x1]
      %vm720 = vcmask 261120
      %v721 = vsel %vm720, %v715, 0.0
      %722 = vadd.xlane.f32.xlu0 %v721
      %v723 = vpop.xlane.xlu0 %722
      %v724 = vsel %vm720, %v716, 0.0
      %725 = vadd.xlane.f32.xlu0 %v724
      %v726 = vpop.xlane.xlu0 %725
      %vm727 = vcmask 253952
      %v728 = vsel %vm727, %v717, 0.0
      %729 = vadd.xlane.f32.xlu0 %v728
      %v730 = vpop.xlane.xlu0 %729
      %v731 = vrcp.pop 32.0
      %v732 = vmul.f32 %v723, %v731
      %v733 = vmul.f32 %v726, %v731
      %v734 = vmul.f32 %v730, %v731
      %v735 = vsub.f32 %v715, %v732
      %v736 = vsub.f32 %v716, %v733
      %v737 = vsub.f32 %v717, %v734
      %v738 = vmul.f32 %v735, %v735
      %v739 = vmul.f32 %v736, %v736
      %v740 = vmul.f32 %v737, %v737
      %v741 = vsel %vm720, %v738, 0.0
      %742 = vadd.xlane.f32.xlu0 %v741
      %v743 = vpop.xlane.xlu0 %742
      %v744 = vsel %vm720, %v739, 0.0
      %745 = vadd.xlane.f32.xlu0 %v744
      %v746 = vpop.xlane.xlu0 %745
      %v747 = vsel %vm727, %v740, 0.0
      %748 = vadd.xlane.f32.xlu0 %v747
      %v749 = vpop.xlane.xlu0 %748
      %v750 = vmul.f32 %v743, %v731
      %v751 = vmul.f32 %v746, %v731
      %v752 = vmul.f32 %v749, %v731
      %v753 = vadd.f32 %v750, 1e-06
      %v754 = vadd.f32 %v751, 1e-06
      %v755 = vadd.f32 %v752, 1e-06
      %v756 = vrsqrt.pop %v753
      %v757 = vrsqrt.pop %v754
      %v758 = vrsqrt.pop %v755
      %v759 = vmul.f32 %v735, %v756
      %v760 = vmul.f32 %v736, %v757
      %v761 = vmul.f32 %v737, %v758
      %v763 = vlaneseq
      %v764 = vshrl.u32 %v763, 7
      %v765 = vsub.s32 0, %v764
      %v766 = vrot.slane %v718, %v765
      %v768 = vmul.f32 %v759, %v766
      %v769 = vmul.f32 %v760, %v766
      %v770 = vmul.f32 %v761, %v766
      %v772 = vlaneseq
      %v773 = vshrl.u32 %v772, 7
      %v774 = vsub.s32 0, %v773
      %v775 = vrot.slane %v719, %v774
      %v777 = vadd.f32 %v768, %v775
      %v778 = vadd.f32 %v769, %v775
      %v779 = vadd.f32 %v770, %v775
      %v780 = vpack.c.bf16 %v778, %v777
      %v781 = vpack.c.bf16 %v779, %v779
      %v782 = vld [vmem:[%s7] sm:$0xf]
      %v783 = vld [vmem:[%s7 + $0x4] sm:$0xf]
      %v784 = vld [vmem:[%s7 + $0x8] sm:$0xf]
      %v785 = vld [vmem:[%s7 + $0xc] sm:$0xf]
      %v786 = vld [vmem:[%s8] sm:$0x1]
      %v788 = vlaneseq
      %v789 = vshrl.u32 %v788, 7
      %v790 = vsub.s32 0, %v789
      %v791 = vrot.slane %v786, %v790
      %v797 = vunpack.c.l.b16 %v782
      %v798 = vunpack.c.l.b16 %v783
      %v799 = vunpack.c.l.b16 %v784
      %v800 = vunpack.c.l.b16 %v785
      %v801 = vpack.c.b16 %v798, %v797
      %v802 = vpack.c.b16 %v800, %v799
      %v806 = vsel %vm720, %v780, 0
      %v809 = vsel %vm720, %v781, 0
      %811 = vmatprep.subr.bf16.mxu0 0
      %812 = vmatpush1.bf16.msra.mxu0 0
      %813 = vmatprep.subr.bf16.mxu0 0
      %814 = vmatpush1.bf16.msra.mxu0 0
      %815 = vmatprep.subr.bf16.mxu0 0
      %816 = vmatpush1.bf16.msra.mxu0 0
      %817 = vmatprep.subr.bf16.mxu0 0
      %818 = vmatpush1.bf16.msra.mxu0 0
      %819 = vmatprep.subr.bf16.mxu0 0
      %820 = vmatpush1.bf16.msra.mxu0 0
      %821 = vmatprep.subr.bf16.mxu0 0
      %822 = vmatpush1.bf16.msra.mxu0 0
      %823 = vmatprep.subr.bf16.mxu0 0
      %824 = vmatpush1.bf16.msra.mxu0 %v802
      %825 = vmatprep.subr.bf16.mxu0 0
      %826 = vmatpush1.bf16.msra.mxu0 %v801
      %827 = vmatprep.subr.bf16.mxu0 0
      %828 = vmatpush2.bf16.msra.mxu0 0
      %829 = vmatprep.subr.bf16.mxu0 0
      %830 = vmatpush2.bf16.msra.mxu0 0
      %831 = vmatprep.subr.bf16.mxu0 0
      %832 = vmatpush2.bf16.msra.mxu0 0
      %833 = vmatprep.subr.bf16.mxu0 0
      %834 = vmatpush2.bf16.msra.mxu0 0
      %835 = vmatprep.subr.bf16.mxu0 0
      %836 = vmatpush2.bf16.msra.mxu0 0
      %837 = vmatprep.subr.bf16.mxu0 0
      %838 = vmatpush2.bf16.msra.mxu0 0
      %839 = vmatprep.subr.bf16.mxu0 0
      %840 = vmatpush2.bf16.msra.mxu0 0
      %841 = vmatprep.subr.bf16.mxu0 0
      %842 = vmatpush2.bf16.msra.mxu0 0
      %843 = vmatprep.mubr.bf16.mxu0 0
      %844 = vmatmul.mubr.bf16.gmra.mxu0 %v806
      %v845 = vpop.f32.mrf.mxu0
      %v846 = vadd.f32 %v791, %v845
      %v847 = vpop.f32.mrf.mxu0
      %v848 = vpop.f32.mrf.mxu0
      %v849 = vadd.f32 %v791, %v848
      %v850 = vpop.f32.mrf.mxu0
      %851 = vmatprep.mubr.bf16.mxu0 0
      %852 = vmatmul.mubr.bf16.gmra.mxu0 %v809
      %v853 = vpop.f32.mrf.mxu0
      %v854 = vadd.f32 %v791, %v853
      %v855 = vpop.f32.mrf.mxu0
      %v856 = vpop.f32.mrf.mxu0
      %v857 = vpop.f32.mrf.mxu0
      %858 = vdwg.mxu0
      %v859 = vpack.c.bf16 %v849, %v846
      %v860 = vpack.c.bf16 %v854, %v854
      %863 = vrot.lane.b32.xlu0 %v859, 96
      %v864 = vpop.permute.xlu0 %863
      %865 = vrot.lane.b32.xlu0 %v860, 96
      %v866 = vpop.permute.xlu0 %865
      %vm867 = vcmask 130048
      %v869 = vsel %vm867, %v859, 0
      %v872 = vsel %vm867, %v860, 0
      %v875 = vsel %vm867, %v864, 0
      %v878 = vsel %vm867, %v866, 0
      %880 = vmatprep.subr.bf16.mxu0 0
      %881 = vmatpush1.bf16.xpose.msra.mxu0 0
      %882 = vmatprep.subr.bf16.mxu0 0
      %883 = vmatpush1.bf16.xpose.msra.mxu0 0
      %884 = vmatprep.subr.bf16.mxu0 0
      %885 = vmatpush1.bf16.xpose.msra.mxu0 0
      %886 = vmatprep.subr.bf16.mxu0 0
      %887 = vmatpush1.bf16.xpose.msra.mxu0 0
      %888 = vmatprep.subr.bf16.mxu0 0
      %889 = vmatpush1.bf16.xpose.msra.mxu0 0
      %890 = vmatprep.subr.bf16.mxu0 0
      %891 = vmatpush1.bf16.xpose.msra.mxu0 0
      %892 = vmatprep.subr.bf16.mxu0 0
      %893 = vmatpush1.bf16.xpose.msra.mxu0 %v878
      %894 = vmatprep.subr.bf16.mxu0 0
      %895 = vmatpush1.bf16.xpose.msra.mxu0 %v875
      %896 = vmatprep.subr.bf16.mxu0 0
      %897 = vmatpush2.bf16.xpose.msra.mxu0 0
      %898 = vmatprep.subr.bf16.mxu0 0
      %899 = vmatpush2.bf16.xpose.msra.mxu0 0
      %900 = vmatprep.subr.bf16.mxu0 0
      %901 = vmatpush2.bf16.xpose.msra.mxu0 0
      %902 = vmatprep.subr.bf16.mxu0 0
      %903 = vmatpush2.bf16.xpose.msra.mxu0 0
      %904 = vmatprep.subr.bf16.mxu0 0
      %905 = vmatpush2.bf16.xpose.msra.mxu0 0
      %906 = vmatprep.subr.bf16.mxu0 0
      %907 = vmatpush2.bf16.xpose.msra.mxu0 0
      %908 = vmatprep.subr.bf16.mxu0 0
      %909 = vmatpush2.bf16.xpose.msra.mxu0 0
      %910 = vmatprep.subr.bf16.mxu0 0
      %911 = vmatpush2.bf16.xpose.msra.mxu0 0
      %912 = vmatprep.mubr.bf16.mxu0 0
      %913 = vmatmul.mubr.bf16.gmra.mxu0 %v869
      %v914 = vpop.f32.mrf.mxu0
      %v915 = vadd.f32 0.0, %v914
      %v916 = vpop.f32.mrf.mxu0
      %v917 = vpop.f32.mrf.mxu0
      %v918 = vadd.f32 0.0, %v917
      %v919 = vpop.f32.mrf.mxu0
      %920 = vmatprep.mubr.bf16.mxu0 0
      %921 = vmatmul.mubr.bf16.gmra.mxu0 %v872
      %v922 = vpop.f32.mrf.mxu0
      %v923 = vadd.f32 0.0, %v922
      %v924 = vpop.f32.mrf.mxu0
      %v925 = vpop.f32.mrf.mxu0
      %v926 = vpop.f32.mrf.mxu0
      %927 = vdwg.mxu0
      %v928 = vmul.f32 %v915, 0.25
      %v929 = vmul.f32 %v918, 0.25
      %v930 = vmul.f32 %v923, 0.25
      %vm931 = vcmask 138240
      %v932 = vsel %vm931, %v928, -inf
      %933 = vmax.xlane.f32.xlu0 %v932
      %v934 = vpop.xlane.xlu0 %933
      %v935 = vsel %vm931, %v929, -inf
      %936 = vmax.xlane.f32.xlu0 %v935
      %v937 = vpop.xlane.xlu0 %936
      %vm938 = vcmask 131072
      %v939 = vsel %vm938, %v930, -inf
      %940 = vmax.xlane.f32.xlu0 %v939
      %v941 = vpop.xlane.xlu0 %940
      %v942 = vsub.f32 %v928, %v934
      %v943 = vsub.f32 %v929, %v937
      %v944 = vsub.f32 %v930, %v941
      %v945 = vmul.f32 %v942, 1.442695
      %v946 = vpow.pop %v945
      %v947 = vmul.f32 %v943, 1.442695
      %v948 = vpow.pop %v947
      %v949 = vmul.f32 %v944, 1.442695
      %v950 = vpow.pop %v949
      %v951 = vsel %vm931, %v946, 0.0
      %952 = vadd.xlane.f32.xlu0 %v951
      %v953 = vpop.xlane.xlu0 %952
      %v954 = vsel %vm931, %v948, 0.0
      %955 = vadd.xlane.f32.xlu0 %v954
      %v956 = vpop.xlane.xlu0 %955
      %v957 = vsel %vm938, %v950, 0.0
      %958 = vadd.xlane.f32.xlu0 %v957
      %v959 = vpop.xlane.xlu0 %958
      %v960 = vrcp.pop %v953
      %v961 = vrcp.pop %v956
      %v962 = vrcp.pop %v959
      %v963 = vmul.f32 %v946, %v960
      %v964 = vmul.f32 %v948, %v961
      %v965 = vmul.f32 %v950, %v962
      %v966 = vpack.c.bf16 %v964, %v963
      %v967 = vpack.c.bf16 %v965, %v965
      %968 = vrot.lane.b32.xlu0 %v859, 64
      %v969 = vpop.permute.xlu0 %968
      %970 = vrot.lane.b32.xlu0 %v860, 64
      %v971 = vpop.permute.xlu0 %970
      %v974 = vsel %vm931, %v966, 0
      %v977 = vsel %vm931, %v967, 0
      %vm979 = vcmask 1040384
      %v980 = vsel 0, 4294967295, 65535
      %v981 = vsel %vm979, %v980, 0
      %v983 = vand.u32 %v971, %v981
      %985 = vmatprep.subr.bf16.mxu0 0
      %986 = vmatpush1.bf16.msra.mxu0 0
      %987 = vmatprep.subr.bf16.mxu0 0
      %988 = vmatpush1.bf16.msra.mxu0 0
      %989 = vmatprep.subr.bf16.mxu0 0
      %990 = vmatpush1.bf16.msra.mxu0 0
      %991 = vmatprep.subr.bf16.mxu0 0
      %992 = vmatpush1.bf16.msra.mxu0 0
      %993 = vmatprep.subr.bf16.mxu0 0
      %994 = vmatpush1.bf16.msra.mxu0 0
      %995 = vmatprep.subr.bf16.mxu0 0
      %996 = vmatpush1.bf16.msra.mxu0 0
      %997 = vmatprep.subr.bf16.mxu0 0
      %998 = vmatpush1.bf16.msra.mxu0 %v983
      %999 = vmatprep.subr.bf16.mxu0 0
      %1000 = vmatpush1.bf16.msra.mxu0 %v969
      %1001 = vmatprep.subr.bf16.mxu0 0
      %1002 = vmatpush2.bf16.msra.mxu0 0
      %1003 = vmatprep.subr.bf16.mxu0 0
      %1004 = vmatpush2.bf16.msra.mxu0 0
      %1005 = vmatprep.subr.bf16.mxu0 0
      %1006 = vmatpush2.bf16.msra.mxu0 0
      %1007 = vmatprep.subr.bf16.mxu0 0
      %1008 = vmatpush2.bf16.msra.mxu0 0
      %1009 = vmatprep.subr.bf16.mxu0 0
      %1010 = vmatpush2.bf16.msra.mxu0 0
      %1011 = vmatprep.subr.bf16.mxu0 0
      %1012 = vmatpush2.bf16.msra.mxu0 0
      %1013 = vmatprep.subr.bf16.mxu0 0
      %1014 = vmatpush2.bf16.msra.mxu0 0
      %1015 = vmatprep.subr.bf16.mxu0 0
      %1016 = vmatpush2.bf16.msra.mxu0 0
      %1017 = vmatprep.mubr.bf16.mxu0 0
      %1018 = vmatmul.mubr.bf16.gmra.mxu0 %v974
      %v1019 = vpop.f32.mrf.mxu0
      %v1020 = vadd.f32 0.0, %v1019
      %v1021 = vpop.f32.mrf.mxu0
      %v1022 = vpop.f32.mrf.mxu0
      %v1023 = vadd.f32 0.0, %v1022
      %v1024 = vpop.f32.mrf.mxu0
      %1025 = vmatprep.mubr.bf16.mxu0 0
      %1026 = vmatmul.mubr.bf16.gmra.mxu0 %v977
      %v1027 = vpop.f32.mrf.mxu0
      %v1028 = vadd.f32 0.0, %v1027
      %v1029 = vpop.f32.mrf.mxu0
      %v1030 = vpop.f32.mrf.mxu0
      %v1031 = vpop.f32.mrf.mxu0
      %1032 = vdwg.mxu0
      %1033 = vrot.lane.b32.xlu0 %v859, 112
      %v1034 = vpop.permute.xlu0 %1033
      %1035 = vrot.lane.b32.xlu0 %v860, 112
      %v1036 = vpop.permute.xlu0 %1035
      %1037 = vrot.lane.b32.xlu0 %v859, 80
      %v1038 = vpop.permute.xlu0 %1037
      %1039 = vrot.lane.b32.xlu0 %v860, 80
      %v1040 = vpop.permute.xlu0 %1039
      %v1042 = vsel %vm867, %v1034, 0
      %v1045 = vsel %vm867, %v1036, 0
      %v1048 = vsel %vm867, %v1038, 0
      %v1051 = vsel %vm867, %v1040, 0
      %1053 = vmatprep.subr.bf16.mxu0 0
      %1054 = vmatpush1.bf16.xpose.msra.mxu0 0
      %1055 = vmatprep.subr.bf16.mxu0 0
      %1056 = vmatpush1.bf16.xpose.msra.mxu0 0
      %1057 = vmatprep.subr.bf16.mxu0 0
      %1058 = vmatpush1.bf16.xpose.msra.mxu0 0
      %1059 = vmatprep.subr.bf16.mxu0 0
      %1060 = vmatpush1.bf16.xpose.msra.mxu0 0
      %1061 = vmatprep.subr.bf16.mxu0 0
      %1062 = vmatpush1.bf16.xpose.msra.mxu0 0
      %1063 = vmatprep.subr.bf16.mxu0 0
      %1064 = vmatpush1.bf16.xpose.msra.mxu0 0
      %1065 = vmatprep.subr.bf16.mxu0 0
      %1066 = vmatpush1.bf16.xpose.msra.mxu0 %v1051
      %1067 = vmatprep.subr.bf16.mxu0 0
      %1068 = vmatpush1.bf16.xpose.msra.mxu0 %v1048
      %1069 = vmatprep.subr.bf16.mxu0 0
      %1070 = vmatpush2.bf16.xpose.msra.mxu0 0
      %1071 = vmatprep.subr.bf16.mxu0 0
      %1072 = vmatpush2.bf16.xpose.msra.mxu0 0
      %1073 = vmatprep.subr.bf16.mxu0 0
      %1074 = vmatpush2.bf16.xpose.msra.mxu0 0
      %1075 = vmatprep.subr.bf16.mxu0 0
      %1076 = vmatpush2.bf16.xpose.msra.mxu0 0
      %1077 = vmatprep.subr.bf16.mxu0 0
      %1078 = vmatpush2.bf16.xpose.msra.mxu0 0
      %1079 = vmatprep.subr.bf16.mxu0 0
      %1080 = vmatpush2.bf16.xpose.msra.mxu0 0
      %1081 = vmatprep.subr.bf16.mxu0 0
      %1082 = vmatpush2.bf16.xpose.msra.mxu0 0
      %1083 = vmatprep.subr.bf16.mxu0 0
      %1084 = vmatpush2.bf16.xpose.msra.mxu0 0
      %1085 = vmatprep.mubr.bf16.mxu0 0
      %1086 = vmatmul.mubr.bf16.gmra.mxu0 %v1042
      %v1087 = vpop.f32.mrf.mxu0
      %v1088 = vadd.f32 0.0, %v1087
      %v1089 = vpop.f32.mrf.mxu0
      %v1090 = vpop.f32.mrf.mxu0
      %v1091 = vadd.f32 0.0, %v1090
      %v1092 = vpop.f32.mrf.mxu0
      %1093 = vmatprep.mubr.bf16.mxu0 0
      %1094 = vmatmul.mubr.bf16.gmra.mxu0 %v1045
      %v1095 = vpop.f32.mrf.mxu0
      %v1096 = vadd.f32 0.0, %v1095
      %v1097 = vpop.f32.mrf.mxu0
      %v1098 = vpop.f32.mrf.mxu0
      %v1099 = vpop.f32.mrf.mxu0
      %1100 = vdwg.mxu0
      %v1101 = vmul.f32 %v1088, 0.25
      %v1102 = vmul.f32 %v1091, 0.25
      %v1103 = vmul.f32 %v1096, 0.25
      %v1104 = vsel %vm931, %v1101, -inf
      %1105 = vmax.xlane.f32.xlu0 %v1104
      %v1106 = vpop.xlane.xlu0 %1105
      %v1107 = vsel %vm931, %v1102, -inf
      %1108 = vmax.xlane.f32.xlu0 %v1107
      %v1109 = vpop.xlane.xlu0 %1108
      %v1110 = vsel %vm938, %v1103, -inf
      %1111 = vmax.xlane.f32.xlu0 %v1110
      %v1112 = vpop.xlane.xlu0 %1111
      %v1113 = vsub.f32 %v1101, %v1106
      %v1114 = vsub.f32 %v1102, %v1109
      %v1115 = vsub.f32 %v1103, %v1112
      %v1116 = vmul.f32 %v1113, 1.442695
      %v1117 = vpow.pop %v1116
      %v1118 = vmul.f32 %v1114, 1.442695
      %v1119 = vpow.pop %v1118
      %v1120 = vmul.f32 %v1115, 1.442695
      %v1121 = vpow.pop %v1120
      %v1122 = vsel %vm931, %v1117, 0.0
      %1123 = vadd.xlane.f32.xlu0 %v1122
      %v1124 = vpop.xlane.xlu0 %1123
      %v1125 = vsel %vm931, %v1119, 0.0
      %1126 = vadd.xlane.f32.xlu0 %v1125
      %v1127 = vpop.xlane.xlu0 %1126
      %v1128 = vsel %vm938, %v1121, 0.0
      %1129 = vadd.xlane.f32.xlu0 %v1128
      %v1130 = vpop.xlane.xlu0 %1129
      %v1131 = vrcp.pop %v1124
      %v1132 = vrcp.pop %v1127
      %v1133 = vrcp.pop %v1130
      %v1134 = vmul.f32 %v1117, %v1131
      %v1135 = vmul.f32 %v1119, %v1132
      %v1136 = vmul.f32 %v1121, %v1133
      %v1137 = vpack.c.bf16 %v1135, %v1134
      %v1138 = vpack.c.bf16 %v1136, %v1136
      %1139 = vrot.lane.b32.xlu0 %v859, 48
      %v1140 = vpop.permute.xlu0 %1139
      %1141 = vrot.lane.b32.xlu0 %v860, 48
      %v1142 = vpop.permute.xlu0 %1141
      %v1145 = vsel %vm931, %v1137, 0
      %v1148 = vsel %vm931, %v1138, 0
      %v1151 = vand.u32 %v1142, %v981
      %1153 = vmatprep.subr.bf16.mxu0 0
      %1154 = vmatpush1.bf16.msra.mxu0 0
      %1155 = vmatprep.subr.bf16.mxu0 0
      %1156 = vmatpush1.bf16.msra.mxu0 0
      %1157 = vmatprep.subr.bf16.mxu0 0
      %1158 = vmatpush1.bf16.msra.mxu0 0
      %1159 = vmatprep.subr.bf16.mxu0 0
      %1160 = vmatpush1.bf16.msra.mxu0 0
      %1161 = vmatprep.subr.bf16.mxu0 0
      %1162 = vmatpush1.bf16.msra.mxu0 0
      %1163 = vmatprep.subr.bf16.mxu0 0
      %1164 = vmatpush1.bf16.msra.mxu0 0
      %1165 = vmatprep.subr.bf16.mxu0 0
      %1166 = vmatpush1.bf16.msra.mxu0 %v1151
      %1167 = vmatprep.subr.bf16.mxu0 0
      %1168 = vmatpush1.bf16.msra.mxu0 %v1140
      %1169 = vmatprep.subr.bf16.mxu0 0
      %1170 = vmatpush2.bf16.msra.mxu0 0
      %1171 = vmatprep.subr.bf16.mxu0 0
      %1172 = vmatpush2.bf16.msra.mxu0 0
      %1173 = vmatprep.subr.bf16.mxu0 0
      %1174 = vmatpush2.bf16.msra.mxu0 0
      %1175 = vmatprep.subr.bf16.mxu0 0
      %1176 = vmatpush2.bf16.msra.mxu0 0
      %1177 = vmatprep.subr.bf16.mxu0 0
      %1178 = vmatpush2.bf16.msra.mxu0 0
      %1179 = vmatprep.subr.bf16.mxu0 0
      %1180 = vmatpush2.bf16.msra.mxu0 0
      %1181 = vmatprep.subr.bf16.mxu0 0
      %1182 = vmatpush2.bf16.msra.mxu0 0
      %1183 = vmatprep.subr.bf16.mxu0 0
      %1184 = vmatpush2.bf16.msra.mxu0 0
      %1185 = vmatprep.mubr.bf16.mxu0 0
      %1186 = vmatmul.mubr.bf16.gmra.mxu0 %v1145
      %v1187 = vpop.f32.mrf.mxu0
      %v1188 = vadd.f32 0.0, %v1187
      %v1189 = vpop.f32.mrf.mxu0
      %v1190 = vpop.f32.mrf.mxu0
      %v1191 = vadd.f32 0.0, %v1190
      %v1192 = vpop.f32.mrf.mxu0
      %1193 = vmatprep.mubr.bf16.mxu0 0
      %1194 = vmatmul.mubr.bf16.gmra.mxu0 %v1148
      %v1195 = vpop.f32.mrf.mxu0
      %v1196 = vadd.f32 0.0, %v1195
      %v1197 = vpop.f32.mrf.mxu0
      %v1198 = vpop.f32.mrf.mxu0
      %v1199 = vpop.f32.mrf.mxu0
      %1200 = vdwg.mxu0
      %1204 = vrot.lane.b32.xlu0 %v1188, 16
      %v1205 = vpop.permute.xlu0 %1204
      %1206 = vrot.lane.b32.xlu0 %v1191, 16
      %v1207 = vpop.permute.xlu0 %1206
      %1208 = vrot.lane.b32.xlu0 %v1196, 16
      %v1209 = vpop.permute.xlu0 %1208
      %v1213 = vsel %vm867, %v1020, %v1205
      %v1214 = vsel %vm867, %v1023, %v1207
      %v1215 = vsel %vm867, %v1028, %v1209
      %v1216 = vpack.c.bf16 %v1214, %v1213
      %v1217 = vpack.c.bf16 %v1215, %v1215
      %v1218 = vld [vmem:[%s9] sm:$0xf]
      %v1219 = vld [vmem:[%s9 + $0x4] sm:$0xf]
      %v1220 = vld [vmem:[%s9 + $0x8] sm:$0xf]
      %v1221 = vld [vmem:[%s9 + $0xc] sm:$0xf]
      %v1222 = vld [vmem:[%s10] sm:$0x1]
      %v1224 = vlaneseq
      %v1225 = vshrl.u32 %v1224, 7
      %v1226 = vsub.s32 0, %v1225
      %v1227 = vrot.slane %v1222, %v1226
      %v1233 = vunpack.c.l.b16 %v1218
      %v1234 = vunpack.c.l.b16 %v1219
      %v1235 = vunpack.c.l.b16 %v1220
      %v1236 = vunpack.c.l.b16 %v1221
      %v1237 = vpack.c.b16 %v1234, %v1233
      %v1238 = vpack.c.b16 %v1236, %v1235
      %v1242 = vsel %vm720, %v1216, 0
      %v1245 = vsel %vm720, %v1217, 0
      %1247 = vmatprep.subr.bf16.mxu0 0
      %1248 = vmatpush1.bf16.msra.mxu0 0
      %1249 = vmatprep.subr.bf16.mxu0 0
      %1250 = vmatpush1.bf16.msra.mxu0 0
      %1251 = vmatprep.subr.bf16.mxu0 0
      %1252 = vmatpush1.bf16.msra.mxu0 0
      %1253 = vmatprep.subr.bf16.mxu0 0
      %1254 = vmatpush1.bf16.msra.mxu0 0
      %1255 = vmatprep.subr.bf16.mxu0 0
      %1256 = vmatpush1.bf16.msra.mxu0 0
      %1257 = vmatprep.subr.bf16.mxu0 0
      %1258 = vmatpush1.bf16.msra.mxu0 0
      %1259 = vmatprep.subr.bf16.mxu0 0
      %1260 = vmatpush1.bf16.msra.mxu0 %v1238
      %1261 = vmatprep.subr.bf16.mxu0 0
      %1262 = vmatpush1.bf16.msra.mxu0 %v1237
      %1263 = vmatprep.subr.bf16.mxu0 0
      %1264 = vmatpush2.bf16.msra.mxu0 0
      %1265 = vmatprep.subr.bf16.mxu0 0
      %1266 = vmatpush2.bf16.msra.mxu0 0
      %1267 = vmatprep.subr.bf16.mxu0 0
      %1268 = vmatpush2.bf16.msra.mxu0 0
      %1269 = vmatprep.subr.bf16.mxu0 0
      %1270 = vmatpush2.bf16.msra.mxu0 0
      %1271 = vmatprep.subr.bf16.mxu0 0
      %1272 = vmatpush2.bf16.msra.mxu0 0
      %1273 = vmatprep.subr.bf16.mxu0 0
      %1274 = vmatpush2.bf16.msra.mxu0 0
      %1275 = vmatprep.subr.bf16.mxu0 0
      %1276 = vmatpush2.bf16.msra.mxu0 0
      %1277 = vmatprep.subr.bf16.mxu0 0
      %1278 = vmatpush2.bf16.msra.mxu0 0
      %1279 = vmatprep.mubr.bf16.mxu0 0
      %1280 = vmatmul.mubr.bf16.gmra.mxu0 %v1242
      %v1281 = vpop.f32.mrf.mxu0
      %v1282 = vadd.f32 %v1227, %v1281
      %v1283 = vpop.f32.mrf.mxu0
      %v1284 = vpop.f32.mrf.mxu0
      %v1285 = vadd.f32 %v1227, %v1284
      %v1286 = vpop.f32.mrf.mxu0
      %1287 = vmatprep.mubr.bf16.mxu0 0
      %1288 = vmatmul.mubr.bf16.gmra.mxu0 %v1245
      %v1289 = vpop.f32.mrf.mxu0
      %v1290 = vadd.f32 %v1227, %v1289
      %v1291 = vpop.f32.mrf.mxu0
      %v1292 = vpop.f32.mrf.mxu0
      %v1293 = vpop.f32.mrf.mxu0
      %1294 = vdwg.mxu0
      %v1295 = vadd.f32 %v715, %v1282
      %v1296 = vadd.f32 %v716, %v1285
      %v1297 = vadd.f32 %v717, %v1290
      %v1298 = vld [vmem:[%s11] sm:$0x1]
      %v1299 = vld [vmem:[%s12] sm:$0x1]
      %v1300 = vsel %vm720, %v1295, 0.0
      %1301 = vadd.xlane.f32.xlu0 %v1300
      %v1302 = vpop.xlane.xlu0 %1301
      %v1303 = vsel %vm720, %v1296, 0.0
      %1304 = vadd.xlane.f32.xlu0 %v1303
      %v1305 = vpop.xlane.xlu0 %1304
      %v1306 = vsel %vm727, %v1297, 0.0
      %1307 = vadd.xlane.f32.xlu0 %v1306
      %v1308 = vpop.xlane.xlu0 %1307
      %v1309 = vmul.f32 %v1302, %v731
      %v1310 = vmul.f32 %v1305, %v731
      %v1311 = vmul.f32 %v1308, %v731
      %v1312 = vsub.f32 %v1295, %v1309
      %v1313 = vsub.f32 %v1296, %v1310
      %v1314 = vsub.f32 %v1297, %v1311
      %v1315 = vmul.f32 %v1312, %v1312
      %v1316 = vmul.f32 %v1313, %v1313
      %v1317 = vmul.f32 %v1314, %v1314
      %v1318 = vsel %vm720, %v1315, 0.0
      %1319 = vadd.xlane.f32.xlu0 %v1318
      %v1320 = vpop.xlane.xlu0 %1319
      %v1321 = vsel %vm720, %v1316, 0.0
      %1322 = vadd.xlane.f32.xlu0 %v1321
      %v1323 = vpop.xlane.xlu0 %1322
      %v1324 = vsel %vm727, %v1317, 0.0
      %1325 = vadd.xlane.f32.xlu0 %v1324
      %v1326 = vpop.xlane.xlu0 %1325
      %v1327 = vmul.f32 %v1320, %v731
      %v1328 = vmul.f32 %v1323, %v731
      %v1329 = vmul.f32 %v1326, %v731
      %v1330 = vadd.f32 %v1327, 1e-06
      %v1331 = vadd.f32 %v1328, 1e-06
      %v1332 = vadd.f32 %v1329, 1e-06
      %v1333 = vrsqrt.pop %v1330
      %v1334 = vrsqrt.pop %v1331
      %v1335 = vrsqrt.pop %v1332
      %v1336 = vmul.f32 %v1312, %v1333
      %v1337 = vmul.f32 %v1313, %v1334
      %v1338 = vmul.f32 %v1314, %v1335
      %v1340 = vlaneseq
      %v1341 = vshrl.u32 %v1340, 7
      %v1342 = vsub.s32 0, %v1341
      %v1343 = vrot.slane %v1298, %v1342
      %v1345 = vmul.f32 %v1336, %v1343
      %v1346 = vmul.f32 %v1337, %v1343
      %v1347 = vmul.f32 %v1338, %v1343
      %v1349 = vlaneseq
      %v1350 = vshrl.u32 %v1349, 7
      %v1351 = vsub.s32 0, %v1350
      %v1352 = vrot.slane %v1299, %v1351
      %v1354 = vadd.f32 %v1345, %v1352
      %v1355 = vadd.f32 %v1346, %v1352
      %v1356 = vadd.f32 %v1347, %v1352
      %v1357 = vpack.c.bf16 %v1355, %v1354
      %v1358 = vpack.c.bf16 %v1356, %v1356
      %v1359 = vld [vmem:[%s13] sm:$0xf]
      %v1360 = vld [vmem:[%s13 + $0x4] sm:$0xf]
      %v1361 = vld [vmem:[%s13 + $0x8] sm:$0xf]
      %v1362 = vld [vmem:[%s13 + $0xc] sm:$0xf]
      %v1363 = vld [vmem:[%s14] sm:$0x1]
      %v1365 = vlaneseq
      %v1366 = vshrl.u32 %v1365, 7
      %v1367 = vsub.s32 0, %v1366
      %v1368 = vrot.slane %v1363, %v1367
      %v1374 = vunpack.c.l.b16 %v1359
      %v1375 = vunpack.c.l.b16 %v1360
      %v1376 = vunpack.c.l.b16 %v1361
      %v1377 = vunpack.c.l.b16 %v1362
      %v1378 = vpack.c.b16 %v1375, %v1374
      %v1379 = vpack.c.b16 %v1377, %v1376
      %v1383 = vsel %vm720, %v1357, 0
      %v1386 = vsel %vm720, %v1358, 0
      %1388 = vmatprep.subr.bf16.mxu0 0
      %1389 = vmatpush1.bf16.msra.mxu0 0
      %1390 = vmatprep.subr.bf16.mxu0 0
      %1391 = vmatpush1.bf16.msra.mxu0 0
      %1392 = vmatprep.subr.bf16.mxu0 0
      %1393 = vmatpush1.bf16.msra.mxu0 0
      %1394 = vmatprep.subr.bf16.mxu0 0
      %1395 = vmatpush1.bf16.msra.mxu0 0
      %1396 = vmatprep.subr.bf16.mxu0 0
      %1397 = vmatpush1.bf16.msra.mxu0 0
      %1398 = vmatprep.subr.bf16.mxu0 0
      %1399 = vmatpush1.bf16.msra.mxu0 0
      %1400 = vmatprep.subr.bf16.mxu0 0
      %1401 = vmatpush1.bf16.msra.mxu0 %v1379
      %1402 = vmatprep.subr.bf16.mxu0 0
      %1403 = vmatpush1.bf16.msra.mxu0 %v1378
      %1404 = vmatprep.subr.bf16.mxu0 0
      %1405 = vmatpush2.bf16.msra.mxu0 0
      %1406 = vmatprep.subr.bf16.mxu0 0
      %1407 = vmatpush2.bf16.msra.mxu0 0
      %1408 = vmatprep.subr.bf16.mxu0 0
      %1409 = vmatpush2.bf16.msra.mxu0 0
      %1410 = vmatprep.subr.bf16.mxu0 0
      %1411 = vmatpush2.bf16.msra.mxu0 0
      %1412 = vmatprep.subr.bf16.mxu0 0
      %1413 = vmatpush2.bf16.msra.mxu0 0
      %1414 = vmatprep.subr.bf16.mxu0 0
      %1415 = vmatpush2.bf16.msra.mxu0 0
      %1416 = vmatprep.subr.bf16.mxu0 0
      %1417 = vmatpush2.bf16.msra.mxu0 0
      %1418 = vmatprep.subr.bf16.mxu0 0
      %1419 = vmatpush2.bf16.msra.mxu0 0
      %1420 = vmatprep.mubr.bf16.mxu0 0
      %1421 = vmatmul.mubr.bf16.gmra.mxu0 %v1383
      %v1422 = vpop.f32.mrf.mxu0
      %v1423 = vadd.f32 %v1368, %v1422
      %v1424 = vpop.f32.mrf.mxu0
      %v1425 = vpop.f32.mrf.mxu0
      %v1426 = vadd.f32 %v1368, %v1425
      %v1427 = vpop.f32.mrf.mxu0
      %1428 = vmatprep.mubr.bf16.mxu0 0
      %1429 = vmatmul.mubr.bf16.gmra.mxu0 %v1386
      %v1430 = vpop.f32.mrf.mxu0
      %v1431 = vadd.f32 %v1368, %v1430
      %v1432 = vpop.f32.mrf.mxu0
      %v1433 = vpop.f32.mrf.mxu0
      %v1434 = vpop.f32.mrf.mxu0
      %1435 = vdwg.mxu0
      %v1436 = vmul.f32 %v1423, 0.5
      %v1437 = vmul.f32 %v1426, 0.5
      %v1438 = vmul.f32 %v1431, 0.5
      %v1439 = vmul.f32 %v1423, 0.044715
      %v1440 = vmul.f32 %v1426, 0.044715
      %v1441 = vmul.f32 %v1431, 0.044715
      %v1442 = vmul.f32 %v1439, %v1423
      %v1443 = vmul.f32 %v1440, %v1426
      %v1444 = vmul.f32 %v1441, %v1431
      %v1445 = vmul.f32 %v1442, %v1423
      %v1446 = vmul.f32 %v1443, %v1426
      %v1447 = vmul.f32 %v1444, %v1431
      %v1448 = vadd.f32 %v1423, %v1445
      %v1449 = vadd.f32 %v1426, %v1446
      %v1450 = vadd.f32 %v1431, %v1447
      %v1451 = vmul.f32 %v1448, 0.7978846
      %v1452 = vmul.f32 %v1449, 0.7978846
      %v1453 = vmul.f32 %v1450, 0.7978846
      %v1454 = vtanh.pop %v1451
      %v1455 = vtanh.pop %v1452
      %v1456 = vtanh.pop %v1453
      %v1457 = vadd.f32 %v1454, 1.0
      %v1458 = vadd.f32 %v1455, 1.0
      %v1459 = vadd.f32 %v1456, 1.0
      %v1460 = vmul.f32 %v1436, %v1457
      %v1461 = vmul.f32 %v1437, %v1458
      %v1462 = vmul.f32 %v1438, %v1459
      %v1463 = vpack.c.bf16 %v1461, %v1460
      %v1464 = vpack.c.bf16 %v1462, %v1462
      %v1465 = vld [vmem:[%s15] sm:$0xf]
      %v1466 = vld [vmem:[%s15 + $0x4] sm:$0xf]
      %v1467 = vld [vmem:[%s15 + $0x8] sm:$0xf]
      %v1468 = vld [vmem:[%s15 + $0xc] sm:$0xf]
      %v1469 = vld [vmem:[%s15 + $0x10] sm:$0xf]
      %v1470 = vld [vmem:[%s15 + $0x14] sm:$0xf]
      %v1471 = vld [vmem:[%s15 + $0x18] sm:$0xf]
      %v1472 = vld [vmem:[%s15 + $0x1c] sm:$0xf]
      %v1473 = vld [vmem:[%s15 + $0x20] sm:$0xf]
      %v1474 = vld [vmem:[%s15 + $0x24] sm:$0xf]
      %v1475 = vld [vmem:[%s15 + $0x28] sm:$0xf]
      %v1476 = vld [vmem:[%s15 + $0x2c] sm:$0xf]
      %v1477 = vld [vmem:[%s15 + $0x30] sm:$0xf]
      %v1478 = vld [vmem:[%s15 + $0x34] sm:$0xf]
      %v1479 = vld [vmem:[%s15 + $0x38] sm:$0xf]
      %v1480 = vld [vmem:[%s15 + $0x3c] sm:$0xf]
      %v1481 = vld [vmem:[%s16] sm:$0x1]
      %v1483 = vlaneseq
      %v1484 = vshrl.u32 %v1483, 7
      %v1485 = vsub.s32 0, %v1484
      %v1486 = vrot.slane %v1481, %v1485
      %v1504 = vunpack.c.l.b16 %v1465
      %v1505 = vunpack.c.l.b16 %v1466
      %v1506 = vunpack.c.l.b16 %v1467
      %v1507 = vunpack.c.l.b16 %v1468
      %v1508 = vunpack.c.l.b16 %v1469
      %v1509 = vunpack.c.l.b16 %v1470
      %v1510 = vunpack.c.l.b16 %v1471
      %v1511 = vunpack.c.l.b16 %v1472
      %v1512 = vunpack.c.l.b16 %v1473
      %v1513 = vunpack.c.l.b16 %v1474
      %v1514 = vunpack.c.l.b16 %v1475
      %v1515 = vunpack.c.l.b16 %v1476
      %v1516 = vunpack.c.l.b16 %v1477
      %v1517 = vunpack.c.l.b16 %v1478
      %v1518 = vunpack.c.l.b16 %v1479
      %v1519 = vunpack.c.l.b16 %v1480
      %v1520 = vpack.c.b16 %v1505, %v1504
      %v1521 = vpack.c.b16 %v1507, %v1506
      %v1522 = vpack.c.b16 %v1509, %v1508
      %v1523 = vpack.c.b16 %v1511, %v1510
      %v1524 = vpack.c.b16 %v1513, %v1512
      %v1525 = vpack.c.b16 %v1515, %v1514
      %v1526 = vpack.c.b16 %v1517, %v1516
      %v1527 = vpack.c.b16 %v1519, %v1518
      %1536 = vmatprep.subr.bf16.mxu0 0
      %1537 = vmatpush1.bf16.msra.mxu0 %v1527
      %1538 = vmatprep.subr.bf16.mxu0 0
      %1539 = vmatpush1.bf16.msra.mxu0 %v1526
      %1540 = vmatprep.subr.bf16.mxu0 0
      %1541 = vmatpush1.bf16.msra.mxu0 %v1525
      %1542 = vmatprep.subr.bf16.mxu0 0
      %1543 = vmatpush1.bf16.msra.mxu0 %v1524
      %1544 = vmatprep.subr.bf16.mxu0 0
      %1545 = vmatpush1.bf16.msra.mxu0 %v1523
      %1546 = vmatprep.subr.bf16.mxu0 0
      %1547 = vmatpush1.bf16.msra.mxu0 %v1522
      %1548 = vmatprep.subr.bf16.mxu0 0
      %1549 = vmatpush1.bf16.msra.mxu0 %v1521
      %1550 = vmatprep.subr.bf16.mxu0 0
      %1551 = vmatpush1.bf16.msra.mxu0 %v1520
      %1552 = vmatprep.subr.bf16.mxu0 0
      %1553 = vmatpush2.bf16.msra.mxu0 0
      %1554 = vmatprep.subr.bf16.mxu0 0
      %1555 = vmatpush2.bf16.msra.mxu0 0
      %1556 = vmatprep.subr.bf16.mxu0 0
      %1557 = vmatpush2.bf16.msra.mxu0 0
      %1558 = vmatprep.subr.bf16.mxu0 0
      %1559 = vmatpush2.bf16.msra.mxu0 0
      %1560 = vmatprep.subr.bf16.mxu0 0
      %1561 = vmatpush2.bf16.msra.mxu0 0
      %1562 = vmatprep.subr.bf16.mxu0 0
      %1563 = vmatpush2.bf16.msra.mxu0 0
      %1564 = vmatprep.subr.bf16.mxu0 0
      %1565 = vmatpush2.bf16.msra.mxu0 0
      %1566 = vmatprep.subr.bf16.mxu0 0
      %1567 = vmatpush2.bf16.msra.mxu0 0
      %1568 = vmatprep.mubr.bf16.mxu0 0
      %1569 = vmatmul.mubr.bf16.gmra.mxu0 %v1463
      %v1570 = vpop.f32.mrf.mxu0
      %v1571 = vadd.f32 %v1486, %v1570
      %v1572 = vpop.f32.mrf.mxu0
      %v1573 = vpop.f32.mrf.mxu0
      %v1574 = vadd.f32 %v1486, %v1573
      %v1575 = vpop.f32.mrf.mxu0
      %1576 = vmatprep.mubr.bf16.mxu0 0
      %1577 = vmatmul.mubr.bf16.gmra.mxu0 %v1464
      %v1578 = vpop.f32.mrf.mxu0
      %v1579 = vadd.f32 %v1486, %v1578
      %v1580 = vpop.f32.mrf.mxu0
      %v1581 = vpop.f32.mrf.mxu0
      %v1582 = vpop.f32.mrf.mxu0
      %1583 = vdwg.mxu0
      %v1584 = vadd.f32 %v1295, %v1571
      %v1585 = vadd.f32 %v1296, %v1574
      %v1586 = vadd.f32 %v1297, %v1579
      %s1587 = scalar_lea.vmem %s5, 1
      %v1588 = vld [vmem:[%s1587] sm:$0x1]
      %s1589 = scalar_lea.vmem %s6, 1
      %v1590 = vld [vmem:[%s1589] sm:$0x1]
      %v1591 = vsel %vm720, %v1584, 0.0
      %1592 = vadd.xlane.f32.xlu0 %v1591
      %v1593 = vpop.xlane.xlu0 %1592
      %v1594 = vsel %vm720, %v1585, 0.0
      %1595 = vadd.xlane.f32.xlu0 %v1594
      %v1596 = vpop.xlane.xlu0 %1595
      %v1597 = vsel %vm727, %v1586, 0.0
      %1598 = vadd.xlane.f32.xlu0 %v1597
      %v1599 = vpop.xlane.xlu0 %1598
      %v1600 = vmul.f32 %v1593, %v731
      %v1601 = vmul.f32 %v1596, %v731
      %v1602 = vmul.f32 %v1599, %v731
      %v1603 = vsub.f32 %v1584, %v1600
      %v1604 = vsub.f32 %v1585, %v1601
      %v1605 = vsub.f32 %v1586, %v1602
      %v1606 = vmul.f32 %v1603, %v1603
      %v1607 = vmul.f32 %v1604, %v1604
      %v1608 = vmul.f32 %v1605, %v1605
      %v1609 = vsel %vm720, %v1606, 0.0
      %1610 = vadd.xlane.f32.xlu0 %v1609
      %v1611 = vpop.xlane.xlu0 %1610
      %v1612 = vsel %vm720, %v1607, 0.0
      %1613 = vadd.xlane.f32.xlu0 %v1612
      %v1614 = vpop.xlane.xlu0 %1613
      %v1615 = vsel %vm727, %v1608, 0.0
      %1616 = vadd.xlane.f32.xlu0 %v1615
      %v1617 = vpop.xlane.xlu0 %1616
      %v1618 = vmul.f32 %v1611, %v731
      %v1619 = vmul.f32 %v1614, %v731
      %v1620 = vmul.f32 %v1617, %v731
      %v1621 = vadd.f32 %v1618, 1e-06
      %v1622 = vadd.f32 %v1619, 1e-06
      %v1623 = vadd.f32 %v1620, 1e-06
      %v1624 = vrsqrt.pop %v1621
      %v1625 = vrsqrt.pop %v1622
      %v1626 = vrsqrt.pop %v1623
      %v1627 = vmul.f32 %v1603, %v1624
      %v1628 = vmul.f32 %v1604, %v1625
      %v1629 = vmul.f32 %v1605, %v1626
      %v1631 = vlaneseq
      %v1632 = vshrl.u32 %v1631, 7
      %v1633 = vsub.s32 0, %v1632
      %v1634 = vrot.slane %v1588, %v1633
      %v1636 = vmul.f32 %v1627, %v1634
      %v1637 = vmul.f32 %v1628, %v1634
      %v1638 = vmul.f32 %v1629, %v1634
      %v1640 = vlaneseq
      %v1641 = vshrl.u32 %v1640, 7
      %v1642 = vsub.s32 0, %v1641
      %v1643 = vrot.slane %v1590, %v1642
      %v1645 = vadd.f32 %v1636, %v1643
      %v1646 = vadd.f32 %v1637, %v1643
      %v1647 = vadd.f32 %v1638, %v1643
      %v1648 = vpack.c.bf16 %v1646, %v1645
      %v1649 = vpack.c.bf16 %v1647, %v1647
      %s1650 = scalar_lea.vmem %s7, 16
      %v1651 = vld [vmem:[%s1650] sm:$0xf]
      %v1652 = vld [vmem:[%s1650 + $0x4] sm:$0xf]
      %v1653 = vld [vmem:[%s1650 + $0x8] sm:$0xf]
      %v1654 = vld [vmem:[%s1650 + $0xc] sm:$0xf]
      %s1655 = scalar_lea.vmem %s8, 1
      %v1656 = vld [vmem:[%s1655] sm:$0x1]
      %v1658 = vlaneseq
      %v1659 = vshrl.u32 %v1658, 7
      %v1660 = vsub.s32 0, %v1659
      %v1661 = vrot.slane %v1656, %v1660
      %v1667 = vunpack.c.l.b16 %v1651
      %v1668 = vunpack.c.l.b16 %v1652
      %v1669 = vunpack.c.l.b16 %v1653
      %v1670 = vunpack.c.l.b16 %v1654
      %v1671 = vpack.c.b16 %v1668, %v1667
      %v1672 = vpack.c.b16 %v1670, %v1669
      %v1676 = vsel %vm720, %v1648, 0
      %v1679 = vsel %vm720, %v1649, 0
      %1681 = vmatprep.subr.bf16.mxu0 0
      %1682 = vmatpush1.bf16.msra.mxu0 0
      %1683 = vmatprep.subr.bf16.mxu0 0
      %1684 = vmatpush1.bf16.msra.mxu0 0
      %1685 = vmatprep.subr.bf16.mxu0 0
      %1686 = vmatpush1.bf16.msra.mxu0 0
      %1687 = vmatprep.subr.bf16.mxu0 0
      %1688 = vmatpush1.bf16.msra.mxu0 0
      %1689 = vmatprep.subr.bf16.mxu0 0
      %1690 = vmatpush1.bf16.msra.mxu0 0
      %1691 = vmatprep.subr.bf16.mxu0 0
      %1692 = vmatpush1.bf16.msra.mxu0 0
      %1693 = vmatprep.subr.bf16.mxu0 0
      %1694 = vmatpush1.bf16.msra.mxu0 %v1672
      %1695 = vmatprep.subr.bf16.mxu0 0
      %1696 = vmatpush1.bf16.msra.mxu0 %v1671
      %1697 = vmatprep.subr.bf16.mxu0 0
      %1698 = vmatpush2.bf16.msra.mxu0 0
      %1699 = vmatprep.subr.bf16.mxu0 0
      %1700 = vmatpush2.bf16.msra.mxu0 0
      %1701 = vmatprep.subr.bf16.mxu0 0
      %1702 = vmatpush2.bf16.msra.mxu0 0
      %1703 = vmatprep.subr.bf16.mxu0 0
      %1704 = vmatpush2.bf16.msra.mxu0 0
      %1705 = vmatprep.subr.bf16.mxu0 0
      %1706 = vmatpush2.bf16.msra.mxu0 0
      %1707 = vmatprep.subr.bf16.mxu0 0
      %1708 = vmatpush2.bf16.msra.mxu0 0
      %1709 = vmatprep.subr.bf16.mxu0 0
      %1710 = vmatpush2.bf16.msra.mxu0 0
      %1711 = vmatprep.subr.bf16.mxu0 0
      %1712 = vmatpush2.bf16.msra.mxu0 0
      %1713 = vmatprep.mubr.bf16.mxu0 0
      %1714 = vmatmul.mubr.bf16.gmra.mxu0 %v1676
      %v1715 = vpop.f32.mrf.mxu0
      %v1716 = vadd.f32 %v1661, %v1715
      %v1717 = vpop.f32.mrf.mxu0
      %v1718 = vpop.f32.mrf.mxu0
      %v1719 = vadd.f32 %v1661, %v1718
      %v1720 = vpop.f32.mrf.mxu0
      %1721 = vmatprep.mubr.bf16.mxu0 0
      %1722 = vmatmul.mubr.bf16.gmra.mxu0 %v1679
      %v1723 = vpop.f32.mrf.mxu0
      %v1724 = vadd.f32 %v1661, %v1723
      %v1725 = vpop.f32.mrf.mxu0
      %v1726 = vpop.f32.mrf.mxu0
      %v1727 = vpop.f32.mrf.mxu0
      %1728 = vdwg.mxu0
      %v1729 = vpack.c.bf16 %v1719, %v1716
      %v1730 = vpack.c.bf16 %v1724, %v1724
      %1733 = vrot.lane.b32.xlu0 %v1729, 96
      %v1734 = vpop.permute.xlu0 %1733
      %1735 = vrot.lane.b32.xlu0 %v1730, 96
      %v1736 = vpop.permute.xlu0 %1735
      %v1738 = vsel %vm867, %v1729, 0
      %v1741 = vsel %vm867, %v1730, 0
      %v1744 = vsel %vm867, %v1734, 0
      %v1747 = vsel %vm867, %v1736, 0
      %1749 = vmatprep.subr.bf16.mxu0 0
      %1750 = vmatpush1.bf16.xpose.msra.mxu0 0
      %1751 = vmatprep.subr.bf16.mxu0 0
      %1752 = vmatpush1.bf16.xpose.msra.mxu0 0
      %1753 = vmatprep.subr.bf16.mxu0 0
      %1754 = vmatpush1.bf16.xpose.msra.mxu0 0
      %1755 = vmatprep.subr.bf16.mxu0 0
      %1756 = vmatpush1.bf16.xpose.msra.mxu0 0
      %1757 = vmatprep.subr.bf16.mxu0 0
      %1758 = vmatpush1.bf16.xpose.msra.mxu0 0
      %1759 = vmatprep.subr.bf16.mxu0 0
      %1760 = vmatpush1.bf16.xpose.msra.mxu0 0
      %1761 = vmatprep.subr.bf16.mxu0 0
      %1762 = vmatpush1.bf16.xpose.msra.mxu0 %v1747
      %1763 = vmatprep.subr.bf16.mxu0 0
      %1764 = vmatpush1.bf16.xpose.msra.mxu0 %v1744
      %1765 = vmatprep.subr.bf16.mxu0 0
      %1766 = vmatpush2.bf16.xpose.msra.mxu0 0
      %1767 = vmatprep.subr.bf16.mxu0 0
      %1768 = vmatpush2.bf16.xpose.msra.mxu0 0
      %1769 = vmatprep.subr.bf16.mxu0 0
      %1770 = vmatpush2.bf16.xpose.msra.mxu0 0
      %1771 = vmatprep.subr.bf16.mxu0 0
      %1772 = vmatpush2.bf16.xpose.msra.mxu0 0
      %1773 = vmatprep.subr.bf16.mxu0 0
      %1774 = vmatpush2.bf16.xpose.msra.mxu0 0
      %1775 = vmatprep.subr.bf16.mxu0 0
      %1776 = vmatpush2.bf16.xpose.msra.mxu0 0
      %1777 = vmatprep.subr.bf16.mxu0 0
      %1778 = vmatpush2.bf16.xpose.msra.mxu0 0
      %1779 = vmatprep.subr.bf16.mxu0 0
      %1780 = vmatpush2.bf16.xpose.msra.mxu0 0
      %1781 = vmatprep.mubr.bf16.mxu0 0
      %1782 = vmatmul.mubr.bf16.gmra.mxu0 %v1738
      %v1783 = vpop.f32.mrf.mxu0
      %v1784 = vadd.f32 0.0, %v1783
      %v1785 = vpop.f32.mrf.mxu0
      %v1786 = vpop.f32.mrf.mxu0
      %v1787 = vadd.f32 0.0, %v1786
      %v1788 = vpop.f32.mrf.mxu0
      %1789 = vmatprep.mubr.bf16.mxu0 0
      %1790 = vmatmul.mubr.bf16.gmra.mxu0 %v1741
      %v1791 = vpop.f32.mrf.mxu0
      %v1792 = vadd.f32 0.0, %v1791
      %v1793 = vpop.f32.mrf.mxu0
      %v1794 = vpop.f32.mrf.mxu0
      %v1795 = vpop.f32.mrf.mxu0
      %1796 = vdwg.mxu0
      %v1797 = vmul.f32 %v1784, 0.25
      %v1798 = vmul.f32 %v1787, 0.25
      %v1799 = vmul.f32 %v1792, 0.25
      %v1800 = vsel %vm931, %v1797, -inf
      %1801 = vmax.xlane.f32.xlu0 %v1800
      %v1802 = vpop.xlane.xlu0 %1801
      %v1803 = vsel %vm931, %v1798, -inf
      %1804 = vmax.xlane.f32.xlu0 %v1803
      %v1805 = vpop.xlane.xlu0 %1804
      %v1806 = vsel %vm938, %v1799, -inf
      %1807 = vmax.xlane.f32.xlu0 %v1806
      %v1808 = vpop.xlane.xlu0 %1807
      %v1809 = vsub.f32 %v1797, %v1802
      %v1810 = vsub.f32 %v1798, %v1805
      %v1811 = vsub.f32 %v1799, %v1808
      %v1812 = vmul.f32 %v1809, 1.442695
      %v1813 = vpow.pop %v1812
      %v1814 = vmul.f32 %v1810, 1.442695
      %v1815 = vpow.pop %v1814
      %v1816 = vmul.f32 %v1811, 1.442695
      %v1817 = vpow.pop %v1816
      %v1818 = vsel %vm931, %v1813, 0.0
      %1819 = vadd.xlane.f32.xlu0 %v1818
      %v1820 = vpop.xlane.xlu0 %1819
      %v1821 = vsel %vm931, %v1815, 0.0
      %1822 = vadd.xlane.f32.xlu0 %v1821
      %v1823 = vpop.xlane.xlu0 %1822
      %v1824 = vsel %vm938, %v1817, 0.0
      %1825 = vadd.xlane.f32.xlu0 %v1824
      %v1826 = vpop.xlane.xlu0 %1825
      %v1827 = vrcp.pop %v1820
      %v1828 = vrcp.pop %v1823
      %v1829 = vrcp.pop %v1826
      %v1830 = vmul.f32 %v1813, %v1827
      %v1831 = vmul.f32 %v1815, %v1828
      %v1832 = vmul.f32 %v1817, %v1829
      %v1833 = vpack.c.bf16 %v1831, %v1830
      %v1834 = vpack.c.bf16 %v1832, %v1832
      %1835 = vrot.lane.b32.xlu0 %v1729, 64
      %v1836 = vpop.permute.xlu0 %1835
      %1837 = vrot.lane.b32.xlu0 %v1730, 64
      %v1838 = vpop.permute.xlu0 %1837
      %v1841 = vsel %vm931, %v1833, 0
      %v1844 = vsel %vm931, %v1834, 0
      %v1847 = vand.u32 %v1838, %v981
      %1849 = vmatprep.subr.bf16.mxu0 0
      %1850 = vmatpush1.bf16.msra.mxu0 0
      %1851 = vmatprep.subr.bf16.mxu0 0
      %1852 = vmatpush1.bf16.msra.mxu0 0
      %1853 = vmatprep.subr.bf16.mxu0 0
      %1854 = vmatpush1.bf16.msra.mxu0 0
      %1855 = vmatprep.subr.bf16.mxu0 0
      %1856 = vmatpush1.bf16.msra.mxu0 0
      %1857 = vmatprep.subr.bf16.mxu0 0
      %1858 = vmatpush1.bf16.msra.mxu0 0
      %1859 = vmatprep.subr.bf16.mxu0 0
      %1860 = vmatpush1.bf16.msra.mxu0 0
      %1861 = vmatprep.subr.bf16.mxu0 0
      %1862 = vmatpush1.bf16.msra.mxu0 %v1847
      %1863 = vmatprep.subr.bf16.mxu0 0
      %1864 = vmatpush1.bf16.msra.mxu0 %v1836
      %1865 = vmatprep.subr.bf16.mxu0 0
      %1866 = vmatpush2.bf16.msra.mxu0 0
      %1867 = vmatprep.subr.bf16.mxu0 0
      %1868 = vmatpush2.bf16.msra.mxu0 0
      %1869 = vmatprep.subr.bf16.mxu0 0
      %1870 = vmatpush2.bf16.msra.mxu0 0
      %1871 = vmatprep.subr.bf16.mxu0 0
      %1872 = vmatpush2.bf16.msra.mxu0 0
      %1873 = vmatprep.subr.bf16.mxu0 0
      %1874 = vmatpush2.bf16.msra.mxu0 0
      %1875 = vmatprep.subr.bf16.mxu0 0
      %1876 = vmatpush2.bf16.msra.mxu0 0
      %1877 = vmatprep.subr.bf16.mxu0 0
      %1878 = vmatpush2.bf16.msra.mxu0 0
      %1879 = vmatprep.subr.bf16.mxu0 0
      %1880 = vmatpush2.bf16.msra.mxu0 0
      %1881 = vmatprep.mubr.bf16.mxu0 0
      %1882 = vmatmul.mubr.bf16.gmra.mxu0 %v1841
      %v1883 = vpop.f32.mrf.mxu0
      %v1884 = vadd.f32 0.0, %v1883
      %v1885 = vpop.f32.mrf.mxu0
      %v1886 = vpop.f32.mrf.mxu0
      %v1887 = vadd.f32 0.0, %v1886
      %v1888 = vpop.f32.mrf.mxu0
      %1889 = vmatprep.mubr.bf16.mxu0 0
      %1890 = vmatmul.mubr.bf16.gmra.mxu0 %v1844
      %v1891 = vpop.f32.mrf.mxu0
      %v1892 = vadd.f32 0.0, %v1891
      %v1893 = vpop.f32.mrf.mxu0
      %v1894 = vpop.f32.mrf.mxu0
      %v1895 = vpop.f32.mrf.mxu0
      %1896 = vdwg.mxu0
      %1897 = vrot.lane.b32.xlu0 %v1729, 112
      %v1898 = vpop.permute.xlu0 %1897
      %1899 = vrot.lane.b32.xlu0 %v1730, 112
      %v1900 = vpop.permute.xlu0 %1899
      %1901 = vrot.lane.b32.xlu0 %v1729, 80
      %v1902 = vpop.permute.xlu0 %1901
      %1903 = vrot.lane.b32.xlu0 %v1730, 80
      %v1904 = vpop.permute.xlu0 %1903
      %v1906 = vsel %vm867, %v1898, 0
      %v1909 = vsel %vm867, %v1900, 0
      %v1912 = vsel %vm867, %v1902, 0
      %v1915 = vsel %vm867, %v1904, 0
      %1917 = vmatprep.subr.bf16.mxu0 0
      %1918 = vmatpush1.bf16.xpose.msra.mxu0 0
      %1919 = vmatprep.subr.bf16.mxu0 0
      %1920 = vmatpush1.bf16.xpose.msra.mxu0 0
      %1921 = vmatprep.subr.bf16.mxu0 0
      %1922 = vmatpush1.bf16.xpose.msra.mxu0 0
      %1923 = vmatprep.subr.bf16.mxu0 0
      %1924 = vmatpush1.bf16.xpose.msra.mxu0 0
      %1925 = vmatprep.subr.bf16.mxu0 0
      %1926 = vmatpush1.bf16.xpose.msra.mxu0 0
      %1927 = vmatprep.subr.bf16.mxu0 0
      %1928 = vmatpush1.bf16.xpose.msra.mxu0 0
      %1929 = vmatprep.subr.bf16.mxu0 0
      %1930 = vmatpush1.bf16.xpose.msra.mxu0 %v1915
      %1931 = vmatprep.subr.bf16.mxu0 0
      %1932 = vmatpush1.bf16.xpose.msra.mxu0 %v1912
      %1933 = vmatprep.subr.bf16.mxu0 0
      %1934 = vmatpush2.bf16.xpose.msra.mxu0 0
      %1935 = vmatprep.subr.bf16.mxu0 0
      %1936 = vmatpush2.bf16.xpose.msra.mxu0 0
      %1937 = vmatprep.subr.bf16.mxu0 0
      %1938 = vmatpush2.bf16.xpose.msra.mxu0 0
      %1939 = vmatprep.subr.bf16.mxu0 0
      %1940 = vmatpush2.bf16.xpose.msra.mxu0 0
      %1941 = vmatprep.subr.bf16.mxu0 0
      %1942 = vmatpush2.bf16.xpose.msra.mxu0 0
      %1943 = vmatprep.subr.bf16.mxu0 0
      %1944 = vmatpush2.bf16.xpose.msra.mxu0 0
      %1945 = vmatprep.subr.bf16.mxu0 0
      %1946 = vmatpush2.bf16.xpose.msra.mxu0 0
      %1947 = vmatprep.subr.bf16.mxu0 0
      %1948 = vmatpush2.bf16.xpose.msra.mxu0 0
      %1949 = vmatprep.mubr.bf16.mxu0 0
      %1950 = vmatmul.mubr.bf16.gmra.mxu0 %v1906
      %v1951 = vpop.f32.mrf.mxu0
      %v1952 = vadd.f32 0.0, %v1951
      %v1953 = vpop.f32.mrf.mxu0
      %v1954 = vpop.f32.mrf.mxu0
      %v1955 = vadd.f32 0.0, %v1954
      %v1956 = vpop.f32.mrf.mxu0
      %1957 = vmatprep.mubr.bf16.mxu0 0
      %1958 = vmatmul.mubr.bf16.gmra.mxu0 %v1909
      %v1959 = vpop.f32.mrf.mxu0
      %v1960 = vadd.f32 0.0, %v1959
      %v1961 = vpop.f32.mrf.mxu0
      %v1962 = vpop.f32.mrf.mxu0
      %v1963 = vpop.f32.mrf.mxu0
      %1964 = vdwg.mxu0
      %v1965 = vmul.f32 %v1952, 0.25
      %v1966 = vmul.f32 %v1955, 0.25
      %v1967 = vmul.f32 %v1960, 0.25
      %v1968 = vsel %vm931, %v1965, -inf
      %1969 = vmax.xlane.f32.xlu0 %v1968
      %v1970 = vpop.xlane.xlu0 %1969
      %v1971 = vsel %vm931, %v1966, -inf
      %1972 = vmax.xlane.f32.xlu0 %v1971
      %v1973 = vpop.xlane.xlu0 %1972
      %v1974 = vsel %vm938, %v1967, -inf
      %1975 = vmax.xlane.f32.xlu0 %v1974
      %v1976 = vpop.xlane.xlu0 %1975
      %v1977 = vsub.f32 %v1965, %v1970
      %v1978 = vsub.f32 %v1966, %v1973
      %v1979 = vsub.f32 %v1967, %v1976
      %v1980 = vmul.f32 %v1977, 1.442695
      %v1981 = vpow.pop %v1980
      %v1982 = vmul.f32 %v1978, 1.442695
      %v1983 = vpow.pop %v1982
      %v1984 = vmul.f32 %v1979, 1.442695
      %v1985 = vpow.pop %v1984
      %v1986 = vsel %vm931, %v1981, 0.0
      %1987 = vadd.xlane.f32.xlu0 %v1986
      %v1988 = vpop.xlane.xlu0 %1987
      %v1989 = vsel %vm931, %v1983, 0.0
      %1990 = vadd.xlane.f32.xlu0 %v1989
      %v1991 = vpop.xlane.xlu0 %1990
      %v1992 = vsel %vm938, %v1985, 0.0
      %1993 = vadd.xlane.f32.xlu0 %v1992
      %v1994 = vpop.xlane.xlu0 %1993
      %v1995 = vrcp.pop %v1988
      %v1996 = vrcp.pop %v1991
      %v1997 = vrcp.pop %v1994
      %v1998 = vmul.f32 %v1981, %v1995
      %v1999 = vmul.f32 %v1983, %v1996
      %v2000 = vmul.f32 %v1985, %v1997
      %v2001 = vpack.c.bf16 %v1999, %v1998
      %v2002 = vpack.c.bf16 %v2000, %v2000
      %2003 = vrot.lane.b32.xlu0 %v1729, 48
      %v2004 = vpop.permute.xlu0 %2003
      %2005 = vrot.lane.b32.xlu0 %v1730, 48
      %v2006 = vpop.permute.xlu0 %2005
      %v2009 = vsel %vm931, %v2001, 0
      %v2012 = vsel %vm931, %v2002, 0
      %v2015 = vand.u32 %v2006, %v981
      %2017 = vmatprep.subr.bf16.mxu0 0
      %2018 = vmatpush1.bf16.msra.mxu0 0
      %2019 = vmatprep.subr.bf16.mxu0 0
      %2020 = vmatpush1.bf16.msra.mxu0 0
      %2021 = vmatprep.subr.bf16.mxu0 0
      %2022 = vmatpush1.bf16.msra.mxu0 0
      %2023 = vmatprep.subr.bf16.mxu0 0
      %2024 = vmatpush1.bf16.msra.mxu0 0
      %2025 = vmatprep.subr.bf16.mxu0 0
      %2026 = vmatpush1.bf16.msra.mxu0 0
      %2027 = vmatprep.subr.bf16.mxu0 0
      %2028 = vmatpush1.bf16.msra.mxu0 0
      %2029 = vmatprep.subr.bf16.mxu0 0
      %2030 = vmatpush1.bf16.msra.mxu0 %v2015
      %2031 = vmatprep.subr.bf16.mxu0 0
      %2032 = vmatpush1.bf16.msra.mxu0 %v2004
      %2033 = vmatprep.subr.bf16.mxu0 0
      %2034 = vmatpush2.bf16.msra.mxu0 0
      %2035 = vmatprep.subr.bf16.mxu0 0
      %2036 = vmatpush2.bf16.msra.mxu0 0
      %2037 = vmatprep.subr.bf16.mxu0 0
      %2038 = vmatpush2.bf16.msra.mxu0 0
      %2039 = vmatprep.subr.bf16.mxu0 0
      %2040 = vmatpush2.bf16.msra.mxu0 0
      %2041 = vmatprep.subr.bf16.mxu0 0
      %2042 = vmatpush2.bf16.msra.mxu0 0
      %2043 = vmatprep.subr.bf16.mxu0 0
      %2044 = vmatpush2.bf16.msra.mxu0 0
      %2045 = vmatprep.subr.bf16.mxu0 0
      %2046 = vmatpush2.bf16.msra.mxu0 0
      %2047 = vmatprep.subr.bf16.mxu0 0
      %2048 = vmatpush2.bf16.msra.mxu0 0
      %2049 = vmatprep.mubr.bf16.mxu0 0
      %2050 = vmatmul.mubr.bf16.gmra.mxu0 %v2009
      %v2051 = vpop.f32.mrf.mxu0
      %v2052 = vadd.f32 0.0, %v2051
      %v2053 = vpop.f32.mrf.mxu0
      %v2054 = vpop.f32.mrf.mxu0
      %v2055 = vadd.f32 0.0, %v2054
      %v2056 = vpop.f32.mrf.mxu0
      %2057 = vmatprep.mubr.bf16.mxu0 0
      %2058 = vmatmul.mubr.bf16.gmra.mxu0 %v2012
      %v2059 = vpop.f32.mrf.mxu0
      %v2060 = vadd.f32 0.0, %v2059
      %v2061 = vpop.f32.mrf.mxu0
      %v2062 = vpop.f32.mrf.mxu0
      %v2063 = vpop.f32.mrf.mxu0
      %2064 = vdwg.mxu0
      %2068 = vrot.lane.b32.xlu0 %v2052, 16
      %v2069 = vpop.permute.xlu0 %2068
      %2070 = vrot.lane.b32.xlu0 %v2055, 16
      %v2071 = vpop.permute.xlu0 %2070
      %2072 = vrot.lane.b32.xlu0 %v2060, 16
      %v2073 = vpop.permute.xlu0 %2072
      %v2077 = vsel %vm867, %v1884, %v2069
      %v2078 = vsel %vm867, %v1887, %v2071
      %v2079 = vsel %vm867, %v1892, %v2073
      %v2080 = vpack.c.bf16 %v2078, %v2077
      %v2081 = vpack.c.bf16 %v2079, %v2079
      %s2082 = scalar_lea.vmem %s9, 16
      %v2083 = vld [vmem:[%s2082] sm:$0xf]
      %v2084 = vld [vmem:[%s2082 + $0x4] sm:$0xf]
      %v2085 = vld [vmem:[%s2082 + $0x8] sm:$0xf]
      %v2086 = vld [vmem:[%s2082 + $0xc] sm:$0xf]
      %s2087 = scalar_lea.vmem %s10, 1
      %v2088 = vld [vmem:[%s2087] sm:$0x1]
      %v2090 = vlaneseq
      %v2091 = vshrl.u32 %v2090, 7
      %v2092 = vsub.s32 0, %v2091
      %v2093 = vrot.slane %v2088, %v2092
      %v2099 = vunpack.c.l.b16 %v2083
      %v2100 = vunpack.c.l.b16 %v2084
      %v2101 = vunpack.c.l.b16 %v2085
      %v2102 = vunpack.c.l.b16 %v2086
      %v2103 = vpack.c.b16 %v2100, %v2099
      %v2104 = vpack.c.b16 %v2102, %v2101
      %v2108 = vsel %vm720, %v2080, 0
      %v2111 = vsel %vm720, %v2081, 0
      %2113 = vmatprep.subr.bf16.mxu0 0
      %2114 = vmatpush1.bf16.msra.mxu0 0
      %2115 = vmatprep.subr.bf16.mxu0 0
      %2116 = vmatpush1.bf16.msra.mxu0 0
      %2117 = vmatprep.subr.bf16.mxu0 0
      %2118 = vmatpush1.bf16.msra.mxu0 0
      %2119 = vmatprep.subr.bf16.mxu0 0
      %2120 = vmatpush1.bf16.msra.mxu0 0
      %2121 = vmatprep.subr.bf16.mxu0 0
      %2122 = vmatpush1.bf16.msra.mxu0 0
      %2123 = vmatprep.subr.bf16.mxu0 0
      %2124 = vmatpush1.bf16.msra.mxu0 0
      %2125 = vmatprep.subr.bf16.mxu0 0
      %2126 = vmatpush1.bf16.msra.mxu0 %v2104
      %2127 = vmatprep.subr.bf16.mxu0 0
      %2128 = vmatpush1.bf16.msra.mxu0 %v2103
      %2129 = vmatprep.subr.bf16.mxu0 0
      %2130 = vmatpush2.bf16.msra.mxu0 0
      %2131 = vmatprep.subr.bf16.mxu0 0
      %2132 = vmatpush2.bf16.msra.mxu0 0
      %2133 = vmatprep.subr.bf16.mxu0 0
      %2134 = vmatpush2.bf16.msra.mxu0 0
      %2135 = vmatprep.subr.bf16.mxu0 0
      %2136 = vmatpush2.bf16.msra.mxu0 0
      %2137 = vmatprep.subr.bf16.mxu0 0
      %2138 = vmatpush2.bf16.msra.mxu0 0
      %2139 = vmatprep.subr.bf16.mxu0 0
      %2140 = vmatpush2.bf16.msra.mxu0 0
      %2141 = vmatprep.subr.bf16.mxu0 0
      %2142 = vmatpush2.bf16.msra.mxu0 0
      %2143 = vmatprep.subr.bf16.mxu0 0
      %2144 = vmatpush2.bf16.msra.mxu0 0
      %2145 = vmatprep.mubr.bf16.mxu0 0
      %2146 = vmatmul.mubr.bf16.gmra.mxu0 %v2108
      %v2147 = vpop.f32.mrf.mxu0
      %v2148 = vadd.f32 %v2093, %v2147
      %v2149 = vpop.f32.mrf.mxu0
      %v2150 = vpop.f32.mrf.mxu0
      %v2151 = vadd.f32 %v2093, %v2150
      %v2152 = vpop.f32.mrf.mxu0
      %2153 = vmatprep.mubr.bf16.mxu0 0
      %2154 = vmatmul.mubr.bf16.gmra.mxu0 %v2111
      %v2155 = vpop.f32.mrf.mxu0
      %v2156 = vadd.f32 %v2093, %v2155
      %v2157 = vpop.f32.mrf.mxu0
      %v2158 = vpop.f32.mrf.mxu0
      %v2159 = vpop.f32.mrf.mxu0
      %2160 = vdwg.mxu0
      %v2161 = vadd.f32 %v1584, %v2148
      %v2162 = vadd.f32 %v1585, %v2151
      %v2163 = vadd.f32 %v1586, %v2156
      %s2164 = scalar_lea.vmem %s11, 1
      %v2165 = vld [vmem:[%s2164] sm:$0x1]
      %s2166 = scalar_lea.vmem %s12, 1
      %v2167 = vld [vmem:[%s2166] sm:$0x1]
      %v2168 = vsel %vm720, %v2161, 0.0
      %2169 = vadd.xlane.f32.xlu0 %v2168
      %v2170 = vpop.xlane.xlu0 %2169
      %v2171 = vsel %vm720, %v2162, 0.0
      %2172 = vadd.xlane.f32.xlu0 %v2171
      %v2173 = vpop.xlane.xlu0 %2172
      %v2174 = vsel %vm727, %v2163, 0.0
      %2175 = vadd.xlane.f32.xlu0 %v2174
      %v2176 = vpop.xlane.xlu0 %2175
      %v2177 = vmul.f32 %v2170, %v731
      %v2178 = vmul.f32 %v2173, %v731
      %v2179 = vmul.f32 %v2176, %v731
      %v2180 = vsub.f32 %v2161, %v2177
      %v2181 = vsub.f32 %v2162, %v2178
      %v2182 = vsub.f32 %v2163, %v2179
      %v2183 = vmul.f32 %v2180, %v2180
      %v2184 = vmul.f32 %v2181, %v2181
      %v2185 = vmul.f32 %v2182, %v2182
      %v2186 = vsel %vm720, %v2183, 0.0
      %2187 = vadd.xlane.f32.xlu0 %v2186
      %v2188 = vpop.xlane.xlu0 %2187
      %v2189 = vsel %vm720, %v2184, 0.0
      %2190 = vadd.xlane.f32.xlu0 %v2189
      %v2191 = vpop.xlane.xlu0 %2190
      %v2192 = vsel %vm727, %v2185, 0.0
      %2193 = vadd.xlane.f32.xlu0 %v2192
      %v2194 = vpop.xlane.xlu0 %2193
      %v2195 = vmul.f32 %v2188, %v731
      %v2196 = vmul.f32 %v2191, %v731
      %v2197 = vmul.f32 %v2194, %v731
      %v2198 = vadd.f32 %v2195, 1e-06
      %v2199 = vadd.f32 %v2196, 1e-06
      %v2200 = vadd.f32 %v2197, 1e-06
      %v2201 = vrsqrt.pop %v2198
      %v2202 = vrsqrt.pop %v2199
      %v2203 = vrsqrt.pop %v2200
      %v2204 = vmul.f32 %v2180, %v2201
      %v2205 = vmul.f32 %v2181, %v2202
      %v2206 = vmul.f32 %v2182, %v2203
      %v2208 = vlaneseq
      %v2209 = vshrl.u32 %v2208, 7
      %v2210 = vsub.s32 0, %v2209
      %v2211 = vrot.slane %v2165, %v2210
      %v2213 = vmul.f32 %v2204, %v2211
      %v2214 = vmul.f32 %v2205, %v2211
      %v2215 = vmul.f32 %v2206, %v2211
      %v2217 = vlaneseq
      %v2218 = vshrl.u32 %v2217, 7
      %v2219 = vsub.s32 0, %v2218
      %v2220 = vrot.slane %v2167, %v2219
      %v2222 = vadd.f32 %v2213, %v2220
      %v2223 = vadd.f32 %v2214, %v2220
      %v2224 = vadd.f32 %v2215, %v2220
      %v2225 = vpack.c.bf16 %v2223, %v2222
      %v2226 = vpack.c.bf16 %v2224, %v2224
      %s2227 = scalar_lea.vmem %s13, 16
      %v2228 = vld [vmem:[%s2227] sm:$0xf]
      %v2229 = vld [vmem:[%s2227 + $0x4] sm:$0xf]
      %v2230 = vld [vmem:[%s2227 + $0x8] sm:$0xf]
      %v2231 = vld [vmem:[%s2227 + $0xc] sm:$0xf]
      %s2232 = scalar_lea.vmem %s14, 1
      %v2233 = vld [vmem:[%s2232] sm:$0x1]
      %v2235 = vlaneseq
      %v2236 = vshrl.u32 %v2235, 7
      %v2237 = vsub.s32 0, %v2236
      %v2238 = vrot.slane %v2233, %v2237
      %v2244 = vunpack.c.l.b16 %v2228
      %v2245 = vunpack.c.l.b16 %v2229
      %v2246 = vunpack.c.l.b16 %v2230
      %v2247 = vunpack.c.l.b16 %v2231
      %v2248 = vpack.c.b16 %v2245, %v2244
      %v2249 = vpack.c.b16 %v2247, %v2246
      %v2253 = vsel %vm720, %v2225, 0
      %v2256 = vsel %vm720, %v2226, 0
      %2258 = vmatprep.subr.bf16.mxu0 0
      %2259 = vmatpush1.bf16.msra.mxu0 0
      %2260 = vmatprep.subr.bf16.mxu0 0
      %2261 = vmatpush1.bf16.msra.mxu0 0
      %2262 = vmatprep.subr.bf16.mxu0 0
      %2263 = vmatpush1.bf16.msra.mxu0 0
      %2264 = vmatprep.subr.bf16.mxu0 0
      %2265 = vmatpush1.bf16.msra.mxu0 0
      %2266 = vmatprep.subr.bf16.mxu0 0
      %2267 = vmatpush1.bf16.msra.mxu0 0
      %2268 = vmatprep.subr.bf16.mxu0 0
      %2269 = vmatpush1.bf16.msra.mxu0 0
      %2270 = vmatprep.subr.bf16.mxu0 0
      %2271 = vmatpush1.bf16.msra.mxu0 %v2249
      %2272 = vmatprep.subr.bf16.mxu0 0
      %2273 = vmatpush1.bf16.msra.mxu0 %v2248
      %2274 = vmatprep.subr.bf16.mxu0 0
      %2275 = vmatpush2.bf16.msra.mxu0 0
      %2276 = vmatprep.subr.bf16.mxu0 0
      %2277 = vmatpush2.bf16.msra.mxu0 0
      %2278 = vmatprep.subr.bf16.mxu0 0
      %2279 = vmatpush2.bf16.msra.mxu0 0
      %2280 = vmatprep.subr.bf16.mxu0 0
      %2281 = vmatpush2.bf16.msra.mxu0 0
      %2282 = vmatprep.subr.bf16.mxu0 0
      %2283 = vmatpush2.bf16.msra.mxu0 0
      %2284 = vmatprep.subr.bf16.mxu0 0
      %2285 = vmatpush2.bf16.msra.mxu0 0
      %2286 = vmatprep.subr.bf16.mxu0 0
      %2287 = vmatpush2.bf16.msra.mxu0 0
      %2288 = vmatprep.subr.bf16.mxu0 0
      %2289 = vmatpush2.bf16.msra.mxu0 0
      %2290 = vmatprep.mubr.bf16.mxu0 0
      %2291 = vmatmul.mubr.bf16.gmra.mxu0 %v2253
      %v2292 = vpop.f32.mrf.mxu0
      %v2293 = vadd.f32 %v2238, %v2292
      %v2294 = vpop.f32.mrf.mxu0
      %v2295 = vpop.f32.mrf.mxu0
      %v2296 = vadd.f32 %v2238, %v2295
      %v2297 = vpop.f32.mrf.mxu0
      %2298 = vmatprep.mubr.bf16.mxu0 0
      %2299 = vmatmul.mubr.bf16.gmra.mxu0 %v2256
      %v2300 = vpop.f32.mrf.mxu0
      %v2301 = vadd.f32 %v2238, %v2300
      %v2302 = vpop.f32.mrf.mxu0
      %v2303 = vpop.f32.mrf.mxu0
      %v2304 = vpop.f32.mrf.mxu0
      %2305 = vdwg.mxu0
      %v2306 = vmul.f32 %v2293, 0.5
      %v2307 = vmul.f32 %v2296, 0.5
      %v2308 = vmul.f32 %v2301, 0.5
      %v2309 = vmul.f32 %v2293, 0.044715
      %v2310 = vmul.f32 %v2296, 0.044715
      %v2311 = vmul.f32 %v2301, 0.044715
      %v2312 = vmul.f32 %v2309, %v2293
      %v2313 = vmul.f32 %v2310, %v2296
      %v2314 = vmul.f32 %v2311, %v2301
      %v2315 = vmul.f32 %v2312, %v2293
      %v2316 = vmul.f32 %v2313, %v2296
      %v2317 = vmul.f32 %v2314, %v2301
      %v2318 = vadd.f32 %v2293, %v2315
      %v2319 = vadd.f32 %v2296, %v2316
      %v2320 = vadd.f32 %v2301, %v2317
      %v2321 = vmul.f32 %v2318, 0.7978846
      %v2322 = vmul.f32 %v2319, 0.7978846
      %v2323 = vmul.f32 %v2320, 0.7978846
      %v2324 = vtanh.pop %v2321
      %v2325 = vtanh.pop %v2322
      %v2326 = vtanh.pop %v2323
      %v2327 = vadd.f32 %v2324, 1.0
      %v2328 = vadd.f32 %v2325, 1.0
      %v2329 = vadd.f32 %v2326, 1.0
      %v2330 = vmul.f32 %v2306, %v2327
      %v2331 = vmul.f32 %v2307, %v2328
      %v2332 = vmul.f32 %v2308, %v2329
      %v2333 = vpack.c.bf16 %v2331, %v2330
      %v2334 = vpack.c.bf16 %v2332, %v2332
      %s2335 = scalar_lea.vmem %s15, 64
      %v2336 = vld [vmem:[%s2335] sm:$0xf]
      %v2337 = vld [vmem:[%s2335 + $0x4] sm:$0xf]
      %v2338 = vld [vmem:[%s2335 + $0x8] sm:$0xf]
      %v2339 = vld [vmem:[%s2335 + $0xc] sm:$0xf]
      %v2340 = vld [vmem:[%s2335 + $0x10] sm:$0xf]
      %v2341 = vld [vmem:[%s2335 + $0x14] sm:$0xf]
      %v2342 = vld [vmem:[%s2335 + $0x18] sm:$0xf]
      %v2343 = vld [vmem:[%s2335 + $0x1c] sm:$0xf]
      %v2344 = vld [vmem:[%s2335 + $0x20] sm:$0xf]
      %v2345 = vld [vmem:[%s2335 + $0x24] sm:$0xf]
      %v2346 = vld [vmem:[%s2335 + $0x28] sm:$0xf]
      %v2347 = vld [vmem:[%s2335 + $0x2c] sm:$0xf]
      %v2348 = vld [vmem:[%s2335 + $0x30] sm:$0xf]
      %v2349 = vld [vmem:[%s2335 + $0x34] sm:$0xf]
      %v2350 = vld [vmem:[%s2335 + $0x38] sm:$0xf]
      %v2351 = vld [vmem:[%s2335 + $0x3c] sm:$0xf]
      %s2352 = scalar_lea.vmem %s16, 1
      %v2353 = vld [vmem:[%s2352] sm:$0x1]
      %v2355 = vlaneseq
      %v2356 = vshrl.u32 %v2355, 7
      %v2357 = vsub.s32 0, %v2356
      %v2358 = vrot.slane %v2353, %v2357
      %v2376 = vunpack.c.l.b16 %v2336
      %v2377 = vunpack.c.l.b16 %v2337
      %v2378 = vunpack.c.l.b16 %v2338
      %v2379 = vunpack.c.l.b16 %v2339
      %v2380 = vunpack.c.l.b16 %v2340
      %v2381 = vunpack.c.l.b16 %v2341
      %v2382 = vunpack.c.l.b16 %v2342
      %v2383 = vunpack.c.l.b16 %v2343
      %v2384 = vunpack.c.l.b16 %v2344
      %v2385 = vunpack.c.l.b16 %v2345
      %v2386 = vunpack.c.l.b16 %v2346
      %v2387 = vunpack.c.l.b16 %v2347
      %v2388 = vunpack.c.l.b16 %v2348
      %v2389 = vunpack.c.l.b16 %v2349
      %v2390 = vunpack.c.l.b16 %v2350
      %v2391 = vunpack.c.l.b16 %v2351
      %v2392 = vpack.c.b16 %v2377, %v2376
      %v2393 = vpack.c.b16 %v2379, %v2378
      %v2394 = vpack.c.b16 %v2381, %v2380
      %v2395 = vpack.c.b16 %v2383, %v2382
      %v2396 = vpack.c.b16 %v2385, %v2384
      %v2397 = vpack.c.b16 %v2387, %v2386
      %v2398 = vpack.c.b16 %v2389, %v2388
      %v2399 = vpack.c.b16 %v2391, %v2390
      %2408 = vmatprep.subr.bf16.mxu0 0
      %2409 = vmatpush1.bf16.msra.mxu0 %v2399
      %2410 = vmatprep.subr.bf16.mxu0 0
      %2411 = vmatpush1.bf16.msra.mxu0 %v2398
      %2412 = vmatprep.subr.bf16.mxu0 0
      %2413 = vmatpush1.bf16.msra.mxu0 %v2397
      %2414 = vmatprep.subr.bf16.mxu0 0
      %2415 = vmatpush1.bf16.msra.mxu0 %v2396
      %2416 = vmatprep.subr.bf16.mxu0 0
      %2417 = vmatpush1.bf16.msra.mxu0 %v2395
      %2418 = vmatprep.subr.bf16.mxu0 0
      %2419 = vmatpush1.bf16.msra.mxu0 %v2394
      %2420 = vmatprep.subr.bf16.mxu0 0
      %2421 = vmatpush1.bf16.msra.mxu0 %v2393
      %2422 = vmatprep.subr.bf16.mxu0 0
      %2423 = vmatpush1.bf16.msra.mxu0 %v2392
      %2424 = vmatprep.subr.bf16.mxu0 0
      %2425 = vmatpush2.bf16.msra.mxu0 0
      %2426 = vmatprep.subr.bf16.mxu0 0
      %2427 = vmatpush2.bf16.msra.mxu0 0
      %2428 = vmatprep.subr.bf16.mxu0 0
      %2429 = vmatpush2.bf16.msra.mxu0 0
      %2430 = vmatprep.subr.bf16.mxu0 0
      %2431 = vmatpush2.bf16.msra.mxu0 0
      %2432 = vmatprep.subr.bf16.mxu0 0
      %2433 = vmatpush2.bf16.msra.mxu0 0
      %2434 = vmatprep.subr.bf16.mxu0 0
      %2435 = vmatpush2.bf16.msra.mxu0 0
      %2436 = vmatprep.subr.bf16.mxu0 0
      %2437 = vmatpush2.bf16.msra.mxu0 0
      %2438 = vmatprep.subr.bf16.mxu0 0
      %2439 = vmatpush2.bf16.msra.mxu0 0
      %2440 = vmatprep.mubr.bf16.mxu0 0
      %2441 = vmatmul.mubr.bf16.gmra.mxu0 %v2333
      %v2442 = vpop.f32.mrf.mxu0
      %v2443 = vadd.f32 %v2358, %v2442
      %v2444 = vpop.f32.mrf.mxu0
      %v2445 = vpop.f32.mrf.mxu0
      %v2446 = vadd.f32 %v2358, %v2445
      %v2447 = vpop.f32.mrf.mxu0
      %2448 = vmatprep.mubr.bf16.mxu0 0
      %2449 = vmatmul.mubr.bf16.gmra.mxu0 %v2334
      %v2450 = vpop.f32.mrf.mxu0
      %v2451 = vadd.f32 %v2358, %v2450
      %v2452 = vpop.f32.mrf.mxu0
      %v2453 = vpop.f32.mrf.mxu0
      %v2454 = vpop.f32.mrf.mxu0
      %2455 = vdwg.mxu0
      %v2456 = vadd.f32 %v2161, %v2443
      %v2457 = vadd.f32 %v2162, %v2446
      %v2458 = vadd.f32 %v2163, %v2451
      %s2459 = scalar_lea.vmem %s5, 2
      %v2460 = vld [vmem:[%s2459] sm:$0x1]
      %s2461 = scalar_lea.vmem %s6, 2
      %v2462 = vld [vmem:[%s2461] sm:$0x1]
      %v2463 = vsel %vm720, %v2456, 0.0
      %2464 = vadd.xlane.f32.xlu0 %v2463
      %v2465 = vpop.xlane.xlu0 %2464
      %v2466 = vsel %vm720, %v2457, 0.0
      %2467 = vadd.xlane.f32.xlu0 %v2466
      %v2468 = vpop.xlane.xlu0 %2467
      %v2469 = vsel %vm727, %v2458, 0.0
      %2470 = vadd.xlane.f32.xlu0 %v2469
      %v2471 = vpop.xlane.xlu0 %2470
      %v2472 = vmul.f32 %v2465, %v731
      %v2473 = vmul.f32 %v2468, %v731
      %v2474 = vmul.f32 %v2471, %v731
      %v2475 = vsub.f32 %v2456, %v2472
      %v2476 = vsub.f32 %v2457, %v2473
      %v2477 = vsub.f32 %v2458, %v2474
      %v2478 = vmul.f32 %v2475, %v2475
      %v2479 = vmul.f32 %v2476, %v2476
      %v2480 = vmul.f32 %v2477, %v2477
      %v2481 = vsel %vm720, %v2478, 0.0
      %2482 = vadd.xlane.f32.xlu0 %v2481
      %v2483 = vpop.xlane.xlu0 %2482
      %v2484 = vsel %vm720, %v2479, 0.0
      %2485 = vadd.xlane.f32.xlu0 %v2484
      %v2486 = vpop.xlane.xlu0 %2485
      %v2487 = vsel %vm727, %v2480, 0.0
      %2488 = vadd.xlane.f32.xlu0 %v2487
      %v2489 = vpop.xlane.xlu0 %2488
      %v2490 = vmul.f32 %v2483, %v731
      %v2491 = vmul.f32 %v2486, %v731
      %v2492 = vmul.f32 %v2489, %v731
      %v2493 = vadd.f32 %v2490, 1e-06
      %v2494 = vadd.f32 %v2491, 1e-06
      %v2495 = vadd.f32 %v2492, 1e-06
      %v2496 = vrsqrt.pop %v2493
      %v2497 = vrsqrt.pop %v2494
      %v2498 = vrsqrt.pop %v2495
      %v2499 = vmul.f32 %v2475, %v2496
      %v2500 = vmul.f32 %v2476, %v2497
      %v2501 = vmul.f32 %v2477, %v2498
      %v2503 = vlaneseq
      %v2504 = vshrl.u32 %v2503, 7
      %v2505 = vsub.s32 0, %v2504
      %v2506 = vrot.slane %v2460, %v2505
      %v2508 = vmul.f32 %v2499, %v2506
      %v2509 = vmul.f32 %v2500, %v2506
      %v2510 = vmul.f32 %v2501, %v2506
      %v2512 = vlaneseq
      %v2513 = vshrl.u32 %v2512, 7
      %v2514 = vsub.s32 0, %v2513
      %v2515 = vrot.slane %v2462, %v2514
      %v2517 = vadd.f32 %v2508, %v2515
      %v2518 = vadd.f32 %v2509, %v2515
      %v2519 = vadd.f32 %v2510, %v2515
      %v2520 = vpack.c.bf16 %v2518, %v2517
      %v2521 = vpack.c.bf16 %v2519, %v2519
      %s2522 = scalar_lea.vmem %s7, 32
      %v2523 = vld [vmem:[%s2522] sm:$0xf]
      %v2524 = vld [vmem:[%s2522 + $0x4] sm:$0xf]
      %v2525 = vld [vmem:[%s2522 + $0x8] sm:$0xf]
      %v2526 = vld [vmem:[%s2522 + $0xc] sm:$0xf]
      %s2527 = scalar_lea.vmem %s8, 2
      %v2528 = vld [vmem:[%s2527] sm:$0x1]
      %v2530 = vlaneseq
      %v2531 = vshrl.u32 %v2530, 7
      %v2532 = vsub.s32 0, %v2531
      %v2533 = vrot.slane %v2528, %v2532
      %v2539 = vunpack.c.l.b16 %v2523
      %v2540 = vunpack.c.l.b16 %v2524
      %v2541 = vunpack.c.l.b16 %v2525
      %v2542 = vunpack.c.l.b16 %v2526
      %v2543 = vpack.c.b16 %v2540, %v2539
      %v2544 = vpack.c.b16 %v2542, %v2541
      %v2548 = vsel %vm720, %v2520, 0
      %v2551 = vsel %vm720, %v2521, 0
      %2553 = vmatprep.subr.bf16.mxu0 0
      %2554 = vmatpush1.bf16.msra.mxu0 0
      %2555 = vmatprep.subr.bf16.mxu0 0
      %2556 = vmatpush1.bf16.msra.mxu0 0
      %2557 = vmatprep.subr.bf16.mxu0 0
      %2558 = vmatpush1.bf16.msra.mxu0 0
      %2559 = vmatprep.subr.bf16.mxu0 0
      %2560 = vmatpush1.bf16.msra.mxu0 0
      %2561 = vmatprep.subr.bf16.mxu0 0
      %2562 = vmatpush1.bf16.msra.mxu0 0
      %2563 = vmatprep.subr.bf16.mxu0 0
      %2564 = vmatpush1.bf16.msra.mxu0 0
      %2565 = vmatprep.subr.bf16.mxu0 0
      %2566 = vmatpush1.bf16.msra.mxu0 %v2544
      %2567 = vmatprep.subr.bf16.mxu0 0
      %2568 = vmatpush1.bf16.msra.mxu0 %v2543
      %2569 = vmatprep.subr.bf16.mxu0 0
      %2570 = vmatpush2.bf16.msra.mxu0 0
      %2571 = vmatprep.subr.bf16.mxu0 0
      %2572 = vmatpush2.bf16.msra.mxu0 0
      %2573 = vmatprep.subr.bf16.mxu0 0
      %2574 = vmatpush2.bf16.msra.mxu0 0
      %2575 = vmatprep.subr.bf16.mxu0 0
      %2576 = vmatpush2.bf16.msra.mxu0 0
      %2577 = vmatprep.subr.bf16.mxu0 0
      %2578 = vmatpush2.bf16.msra.mxu0 0
      %2579 = vmatprep.subr.bf16.mxu0 0
      %2580 = vmatpush2.bf16.msra.mxu0 0
      %2581 = vmatprep.subr.bf16.mxu0 0
      %2582 = vmatpush2.bf16.msra.mxu0 0
      %2583 = vmatprep.subr.bf16.mxu0 0
      %2584 = vmatpush2.bf16.msra.mxu0 0
      %2585 = vmatprep.mubr.bf16.mxu0 0
      %2586 = vmatmul.mubr.bf16.gmra.mxu0 %v2548
      %v2587 = vpop.f32.mrf.mxu0
      %v2588 = vadd.f32 %v2533, %v2587
      %v2589 = vpop.f32.mrf.mxu0
      %v2590 = vpop.f32.mrf.mxu0
      %v2591 = vadd.f32 %v2533, %v2590
      %v2592 = vpop.f32.mrf.mxu0
      %2593 = vmatprep.mubr.bf16.mxu0 0
      %2594 = vmatmul.mubr.bf16.gmra.mxu0 %v2551
      %v2595 = vpop.f32.mrf.mxu0
      %v2596 = vadd.f32 %v2533, %v2595
      %v2597 = vpop.f32.mrf.mxu0
      %v2598 = vpop.f32.mrf.mxu0
      %v2599 = vpop.f32.mrf.mxu0
      %2600 = vdwg.mxu0
      %v2601 = vpack.c.bf16 %v2591, %v2588
      %v2602 = vpack.c.bf16 %v2596, %v2596
      %2605 = vrot.lane.b32.xlu0 %v2601, 96
      %v2606 = vpop.permute.xlu0 %2605
      %2607 = vrot.lane.b32.xlu0 %v2602, 96
      %v2608 = vpop.permute.xlu0 %2607
      %v2610 = vsel %vm867, %v2601, 0
      %v2613 = vsel %vm867, %v2602, 0
      %v2616 = vsel %vm867, %v2606, 0
      %v2619 = vsel %vm867, %v2608, 0
      %2621 = vmatprep.subr.bf16.mxu0 0
      %2622 = vmatpush1.bf16.xpose.msra.mxu0 0
      %2623 = vmatprep.subr.bf16.mxu0 0
      %2624 = vmatpush1.bf16.xpose.msra.mxu0 0
      %2625 = vmatprep.subr.bf16.mxu0 0
      %2626 = vmatpush1.bf16.xpose.msra.mxu0 0
      %2627 = vmatprep.subr.bf16.mxu0 0
      %2628 = vmatpush1.bf16.xpose.msra.mxu0 0
      %2629 = vmatprep.subr.bf16.mxu0 0
      %2630 = vmatpush1.bf16.xpose.msra.mxu0 0
      %2631 = vmatprep.subr.bf16.mxu0 0
      %2632 = vmatpush1.bf16.xpose.msra.mxu0 0
      %2633 = vmatprep.subr.bf16.mxu0 0
      %2634 = vmatpush1.bf16.xpose.msra.mxu0 %v2619
      %2635 = vmatprep.subr.bf16.mxu0 0
      %2636 = vmatpush1.bf16.xpose.msra.mxu0 %v2616
      %2637 = vmatprep.subr.bf16.mxu0 0
      %2638 = vmatpush2.bf16.xpose.msra.mxu0 0
      %2639 = vmatprep.subr.bf16.mxu0 0
      %2640 = vmatpush2.bf16.xpose.msra.mxu0 0
      %2641 = vmatprep.subr.bf16.mxu0 0
      %2642 = vmatpush2.bf16.xpose.msra.mxu0 0
      %2643 = vmatprep.subr.bf16.mxu0 0
      %2644 = vmatpush2.bf16.xpose.msra.mxu0 0
      %2645 = vmatprep.subr.bf16.mxu0 0
      %2646 = vmatpush2.bf16.xpose.msra.mxu0 0
      %2647 = vmatprep.subr.bf16.mxu0 0
      %2648 = vmatpush2.bf16.xpose.msra.mxu0 0
      %2649 = vmatprep.subr.bf16.mxu0 0
      %2650 = vmatpush2.bf16.xpose.msra.mxu0 0
      %2651 = vmatprep.subr.bf16.mxu0 0
      %2652 = vmatpush2.bf16.xpose.msra.mxu0 0
      %2653 = vmatprep.mubr.bf16.mxu0 0
      %2654 = vmatmul.mubr.bf16.gmra.mxu0 %v2610
      %v2655 = vpop.f32.mrf.mxu0
      %v2656 = vadd.f32 0.0, %v2655
      %v2657 = vpop.f32.mrf.mxu0
      %v2658 = vpop.f32.mrf.mxu0
      %v2659 = vadd.f32 0.0, %v2658
      %v2660 = vpop.f32.mrf.mxu0
      %2661 = vmatprep.mubr.bf16.mxu0 0
      %2662 = vmatmul.mubr.bf16.gmra.mxu0 %v2613
      %v2663 = vpop.f32.mrf.mxu0
      %v2664 = vadd.f32 0.0, %v2663
      %v2665 = vpop.f32.mrf.mxu0
      %v2666 = vpop.f32.mrf.mxu0
      %v2667 = vpop.f32.mrf.mxu0
      %2668 = vdwg.mxu0
      %v2669 = vmul.f32 %v2656, 0.25
      %v2670 = vmul.f32 %v2659, 0.25
      %v2671 = vmul.f32 %v2664, 0.25
      %v2672 = vsel %vm931, %v2669, -inf
      %2673 = vmax.xlane.f32.xlu0 %v2672
      %v2674 = vpop.xlane.xlu0 %2673
      %v2675 = vsel %vm931, %v2670, -inf
      %2676 = vmax.xlane.f32.xlu0 %v2675
      %v2677 = vpop.xlane.xlu0 %2676
      %v2678 = vsel %vm938, %v2671, -inf
      %2679 = vmax.xlane.f32.xlu0 %v2678
      %v2680 = vpop.xlane.xlu0 %2679
      %v2681 = vsub.f32 %v2669, %v2674
      %v2682 = vsub.f32 %v2670, %v2677
      %v2683 = vsub.f32 %v2671, %v2680
      %v2684 = vmul.f32 %v2681, 1.442695
      %v2685 = vpow.pop %v2684
      %v2686 = vmul.f32 %v2682, 1.442695
      %v2687 = vpow.pop %v2686
      %v2688 = vmul.f32 %v2683, 1.442695
      %v2689 = vpow.pop %v2688
      %v2690 = vsel %vm931, %v2685, 0.0
      %2691 = vadd.xlane.f32.xlu0 %v2690
      %v2692 = vpop.xlane.xlu0 %2691
      %v2693 = vsel %vm931, %v2687, 0.0
      %2694 = vadd.xlane.f32.xlu0 %v2693
      %v2695 = vpop.xlane.xlu0 %2694
      %v2696 = vsel %vm938, %v2689, 0.0
      %2697 = vadd.xlane.f32.xlu0 %v2696
      %v2698 = vpop.xlane.xlu0 %2697
      %v2699 = vrcp.pop %v2692
      %v2700 = vrcp.pop %v2695
      %v2701 = vrcp.pop %v2698
      %v2702 = vmul.f32 %v2685, %v2699
      %v2703 = vmul.f32 %v2687, %v2700
      %v2704 = vmul.f32 %v2689, %v2701
      %v2705 = vpack.c.bf16 %v2703, %v2702
      %v2706 = vpack.c.bf16 %v2704, %v2704
      %2707 = vrot.lane.b32.xlu0 %v2601, 64
      %v2708 = vpop.permute.xlu0 %2707
      %2709 = vrot.lane.b32.xlu0 %v2602, 64
      %v2710 = vpop.permute.xlu0 %2709
      %v2713 = vsel %vm931, %v2705, 0
      %v2716 = vsel %vm931, %v2706, 0
      %v2719 = vand.u32 %v2710, %v981
      %2721 = vmatprep.subr.bf16.mxu0 0
      %2722 = vmatpush1.bf16.msra.mxu0 0
      %2723 = vmatprep.subr.bf16.mxu0 0
      %2724 = vmatpush1.bf16.msra.mxu0 0
      %2725 = vmatprep.subr.bf16.mxu0 0
      %2726 = vmatpush1.bf16.msra.mxu0 0
      %2727 = vmatprep.subr.bf16.mxu0 0
      %2728 = vmatpush1.bf16.msra.mxu0 0
      %2729 = vmatprep.subr.bf16.mxu0 0
      %2730 = vmatpush1.bf16.msra.mxu0 0
      %2731 = vmatprep.subr.bf16.mxu0 0
      %2732 = vmatpush1.bf16.msra.mxu0 0
      %2733 = vmatprep.subr.bf16.mxu0 0
      %2734 = vmatpush1.bf16.msra.mxu0 %v2719
      %2735 = vmatprep.subr.bf16.mxu0 0
      %2736 = vmatpush1.bf16.msra.mxu0 %v2708
      %2737 = vmatprep.subr.bf16.mxu0 0
      %2738 = vmatpush2.bf16.msra.mxu0 0
      %2739 = vmatprep.subr.bf16.mxu0 0
      %2740 = vmatpush2.bf16.msra.mxu0 0
      %2741 = vmatprep.subr.bf16.mxu0 0
      %2742 = vmatpush2.bf16.msra.mxu0 0
      %2743 = vmatprep.subr.bf16.mxu0 0
      %2744 = vmatpush2.bf16.msra.mxu0 0
      %2745 = vmatprep.subr.bf16.mxu0 0
      %2746 = vmatpush2.bf16.msra.mxu0 0
      %2747 = vmatprep.subr.bf16.mxu0 0
      %2748 = vmatpush2.bf16.msra.mxu0 0
      %2749 = vmatprep.subr.bf16.mxu0 0
      %2750 = vmatpush2.bf16.msra.mxu0 0
      %2751 = vmatprep.subr.bf16.mxu0 0
      %2752 = vmatpush2.bf16.msra.mxu0 0
      %2753 = vmatprep.mubr.bf16.mxu0 0
      %2754 = vmatmul.mubr.bf16.gmra.mxu0 %v2713
      %v2755 = vpop.f32.mrf.mxu0
      %v2756 = vadd.f32 0.0, %v2755
      %v2757 = vpop.f32.mrf.mxu0
      %v2758 = vpop.f32.mrf.mxu0
      %v2759 = vadd.f32 0.0, %v2758
      %v2760 = vpop.f32.mrf.mxu0
      %2761 = vmatprep.mubr.bf16.mxu0 0
      %2762 = vmatmul.mubr.bf16.gmra.mxu0 %v2716
      %v2763 = vpop.f32.mrf.mxu0
      %v2764 = vadd.f32 0.0, %v2763
      %v2765 = vpop.f32.mrf.mxu0
      %v2766 = vpop.f32.mrf.mxu0
      %v2767 = vpop.f32.mrf.mxu0
      %2768 = vdwg.mxu0
      %2769 = vrot.lane.b32.xlu0 %v2601, 112
      %v2770 = vpop.permute.xlu0 %2769
      %2771 = vrot.lane.b32.xlu0 %v2602, 112
      %v2772 = vpop.permute.xlu0 %2771
      %2773 = vrot.lane.b32.xlu0 %v2601, 80
      %v2774 = vpop.permute.xlu0 %2773
      %2775 = vrot.lane.b32.xlu0 %v2602, 80
      %v2776 = vpop.permute.xlu0 %2775
      %v2778 = vsel %vm867, %v2770, 0
      %v2781 = vsel %vm867, %v2772, 0
      %v2784 = vsel %vm867, %v2774, 0
      %v2787 = vsel %vm867, %v2776, 0
      %2789 = vmatprep.subr.bf16.mxu0 0
      %2790 = vmatpush1.bf16.xpose.msra.mxu0 0
      %2791 = vmatprep.subr.bf16.mxu0 0
      %2792 = vmatpush1.bf16.xpose.msra.mxu0 0
      %2793 = vmatprep.subr.bf16.mxu0 0
      %2794 = vmatpush1.bf16.xpose.msra.mxu0 0
      %2795 = vmatprep.subr.bf16.mxu0 0
      %2796 = vmatpush1.bf16.xpose.msra.mxu0 0
      %2797 = vmatprep.subr.bf16.mxu0 0
      %2798 = vmatpush1.bf16.xpose.msra.mxu0 0
      %2799 = vmatprep.subr.bf16.mxu0 0
      %2800 = vmatpush1.bf16.xpose.msra.mxu0 0
      %2801 = vmatprep.subr.bf16.mxu0 0
      %2802 = vmatpush1.bf16.xpose.msra.mxu0 %v2787
      %2803 = vmatprep.subr.bf16.mxu0 0
      %2804 = vmatpush1.bf16.xpose.msra.mxu0 %v2784
      %2805 = vmatprep.subr.bf16.mxu0 0
      %2806 = vmatpush2.bf16.xpose.msra.mxu0 0
      %2807 = vmatprep.subr.bf16.mxu0 0
      %2808 = vmatpush2.bf16.xpose.msra.mxu0 0
      %2809 = vmatprep.subr.bf16.mxu0 0
      %2810 = vmatpush2.bf16.xpose.msra.mxu0 0
      %2811 = vmatprep.subr.bf16.mxu0 0
      %2812 = vmatpush2.bf16.xpose.msra.mxu0 0
      %2813 = vmatprep.subr.bf16.mxu0 0
      %2814 = vmatpush2.bf16.xpose.msra.mxu0 0
      %2815 = vmatprep.subr.bf16.mxu0 0
      %2816 = vmatpush2.bf16.xpose.msra.mxu0 0
      %2817 = vmatprep.subr.bf16.mxu0 0
      %2818 = vmatpush2.bf16.xpose.msra.mxu0 0
      %2819 = vmatprep.subr.bf16.mxu0 0
      %2820 = vmatpush2.bf16.xpose.msra.mxu0 0
      %2821 = vmatprep.mubr.bf16.mxu0 0
      %2822 = vmatmul.mubr.bf16.gmra.mxu0 %v2778
      %v2823 = vpop.f32.mrf.mxu0
      %v2824 = vadd.f32 0.0, %v2823
      %v2825 = vpop.f32.mrf.mxu0
      %v2826 = vpop.f32.mrf.mxu0
      %v2827 = vadd.f32 0.0, %v2826
      %v2828 = vpop.f32.mrf.mxu0
      %2829 = vmatprep.mubr.bf16.mxu0 0
      %2830 = vmatmul.mubr.bf16.gmra.mxu0 %v2781
      %v2831 = vpop.f32.mrf.mxu0
      %v2832 = vadd.f32 0.0, %v2831
      %v2833 = vpop.f32.mrf.mxu0
      %v2834 = vpop.f32.mrf.mxu0
      %v2835 = vpop.f32.mrf.mxu0
      %2836 = vdwg.mxu0
      %v2837 = vmul.f32 %v2824, 0.25
      %v2838 = vmul.f32 %v2827, 0.25
      %v2839 = vmul.f32 %v2832, 0.25
      %v2840 = vsel %vm931, %v2837, -inf
      %2841 = vmax.xlane.f32.xlu0 %v2840
      %v2842 = vpop.xlane.xlu0 %2841
      %v2843 = vsel %vm931, %v2838, -inf
      %2844 = vmax.xlane.f32.xlu0 %v2843
      %v2845 = vpop.xlane.xlu0 %2844
      %v2846 = vsel %vm938, %v2839, -inf
      %2847 = vmax.xlane.f32.xlu0 %v2846
      %v2848 = vpop.xlane.xlu0 %2847
      %v2849 = vsub.f32 %v2837, %v2842
      %v2850 = vsub.f32 %v2838, %v2845
      %v2851 = vsub.f32 %v2839, %v2848
      %v2852 = vmul.f32 %v2849, 1.442695
      %v2853 = vpow.pop %v2852
      %v2854 = vmul.f32 %v2850, 1.442695
      %v2855 = vpow.pop %v2854
      %v2856 = vmul.f32 %v2851, 1.442695
      %v2857 = vpow.pop %v2856
      %v2858 = vsel %vm931, %v2853, 0.0
      %2859 = vadd.xlane.f32.xlu0 %v2858
      %v2860 = vpop.xlane.xlu0 %2859
      %v2861 = vsel %vm931, %v2855, 0.0
      %2862 = vadd.xlane.f32.xlu0 %v2861
      %v2863 = vpop.xlane.xlu0 %2862
      %v2864 = vsel %vm938, %v2857, 0.0
      %2865 = vadd.xlane.f32.xlu0 %v2864
      %v2866 = vpop.xlane.xlu0 %2865
      %v2867 = vrcp.pop %v2860
      %v2868 = vrcp.pop %v2863
      %v2869 = vrcp.pop %v2866
      %v2870 = vmul.f32 %v2853, %v2867
      %v2871 = vmul.f32 %v2855, %v2868
      %v2872 = vmul.f32 %v2857, %v2869
      %v2873 = vpack.c.bf16 %v2871, %v2870
      %v2874 = vpack.c.bf16 %v2872, %v2872
      %2875 = vrot.lane.b32.xlu0 %v2601, 48
      %v2876 = vpop.permute.xlu0 %2875
      %2877 = vrot.lane.b32.xlu0 %v2602, 48
      %v2878 = vpop.permute.xlu0 %2877
      %v2881 = vsel %vm931, %v2873, 0
      %v2884 = vsel %vm931, %v2874, 0
      %v2887 = vand.u32 %v2878, %v981
      %2889 = vmatprep.subr.bf16.mxu0 0
      %2890 = vmatpush1.bf16.msra.mxu0 0
      %2891 = vmatprep.subr.bf16.mxu0 0
      %2892 = vmatpush1.bf16.msra.mxu0 0
      %2893 = vmatprep.subr.bf16.mxu0 0
      %2894 = vmatpush1.bf16.msra.mxu0 0
      %2895 = vmatprep.subr.bf16.mxu0 0
      %2896 = vmatpush1.bf16.msra.mxu0 0
      %2897 = vmatprep.subr.bf16.mxu0 0
      %2898 = vmatpush1.bf16.msra.mxu0 0
      %2899 = vmatprep.subr.bf16.mxu0 0
      %2900 = vmatpush1.bf16.msra.mxu0 0
      %2901 = vmatprep.subr.bf16.mxu0 0
      %2902 = vmatpush1.bf16.msra.mxu0 %v2887
      %2903 = vmatprep.subr.bf16.mxu0 0
      %2904 = vmatpush1.bf16.msra.mxu0 %v2876
      %2905 = vmatprep.subr.bf16.mxu0 0
      %2906 = vmatpush2.bf16.msra.mxu0 0
      %2907 = vmatprep.subr.bf16.mxu0 0
      %2908 = vmatpush2.bf16.msra.mxu0 0
      %2909 = vmatprep.subr.bf16.mxu0 0
      %2910 = vmatpush2.bf16.msra.mxu0 0
      %2911 = vmatprep.subr.bf16.mxu0 0
      %2912 = vmatpush2.bf16.msra.mxu0 0
      %2913 = vmatprep.subr.bf16.mxu0 0
      %2914 = vmatpush2.bf16.msra.mxu0 0
      %2915 = vmatprep.subr.bf16.mxu0 0
      %2916 = vmatpush2.bf16.msra.mxu0 0
      %2917 = vmatprep.subr.bf16.mxu0 0
      %2918 = vmatpush2.bf16.msra.mxu0 0
      %2919 = vmatprep.subr.bf16.mxu0 0
      %2920 = vmatpush2.bf16.msra.mxu0 0
      %2921 = vmatprep.mubr.bf16.mxu0 0
      %2922 = vmatmul.mubr.bf16.gmra.mxu0 %v2881
      %v2923 = vpop.f32.mrf.mxu0
      %v2924 = vadd.f32 0.0, %v2923
      %v2925 = vpop.f32.mrf.mxu0
      %v2926 = vpop.f32.mrf.mxu0
      %v2927 = vadd.f32 0.0, %v2926
      %v2928 = vpop.f32.mrf.mxu0
      %2929 = vmatprep.mubr.bf16.mxu0 0
      %2930 = vmatmul.mubr.bf16.gmra.mxu0 %v2884
      %v2931 = vpop.f32.mrf.mxu0
      %v2932 = vadd.f32 0.0, %v2931
      %v2933 = vpop.f32.mrf.mxu0
      %v2934 = vpop.f32.mrf.mxu0
      %v2935 = vpop.f32.mrf.mxu0
      %2936 = vdwg.mxu0
      %2940 = vrot.lane.b32.xlu0 %v2924, 16
      %v2941 = vpop.permute.xlu0 %2940
      %2942 = vrot.lane.b32.xlu0 %v2927, 16
      %v2943 = vpop.permute.xlu0 %2942
      %2944 = vrot.lane.b32.xlu0 %v2932, 16
      %v2945 = vpop.permute.xlu0 %2944
      %v2949 = vsel %vm867, %v2756, %v2941
      %v2950 = vsel %vm867, %v2759, %v2943
      %v2951 = vsel %vm867, %v2764, %v2945
      %v2952 = vpack.c.bf16 %v2950, %v2949
      %v2953 = vpack.c.bf16 %v2951, %v2951
      %s2954 = scalar_lea.vmem %s9, 32
      %v2955 = vld [vmem:[%s2954] sm:$0xf]
      %v2956 = vld [vmem:[%s2954 + $0x4] sm:$0xf]
      %v2957 = vld [vmem:[%s2954 + $0x8] sm:$0xf]
      %v2958 = vld [vmem:[%s2954 + $0xc] sm:$0xf]
      %s2959 = scalar_lea.vmem %s10, 2
      %v2960 = vld [vmem:[%s2959] sm:$0x1]
      %v2962 = vlaneseq
      %v2963 = vshrl.u32 %v2962, 7
      %v2964 = vsub.s32 0, %v2963
      %v2965 = vrot.slane %v2960, %v2964
      %v2971 = vunpack.c.l.b16 %v2955
      %v2972 = vunpack.c.l.b16 %v2956
      %v2973 = vunpack.c.l.b16 %v2957
      %v2974 = vunpack.c.l.b16 %v2958
      %v2975 = vpack.c.b16 %v2972, %v2971
      %v2976 = vpack.c.b16 %v2974, %v2973
      %v2980 = vsel %vm720, %v2952, 0
      %v2983 = vsel %vm720, %v2953, 0
      %2985 = vmatprep.subr.bf16.mxu0 0
      %2986 = vmatpush1.bf16.msra.mxu0 0
      %2987 = vmatprep.subr.bf16.mxu0 0
      %2988 = vmatpush1.bf16.msra.mxu0 0
      %2989 = vmatprep.subr.bf16.mxu0 0
      %2990 = vmatpush1.bf16.msra.mxu0 0
      %2991 = vmatprep.subr.bf16.mxu0 0
      %2992 = vmatpush1.bf16.msra.mxu0 0
      %2993 = vmatprep.subr.bf16.mxu0 0
      %2994 = vmatpush1.bf16.msra.mxu0 0
      %2995 = vmatprep.subr.bf16.mxu0 0
      %2996 = vmatpush1.bf16.msra.mxu0 0
      %2997 = vmatprep.subr.bf16.mxu0 0
      %2998 = vmatpush1.bf16.msra.mxu0 %v2976
      %2999 = vmatprep.subr.bf16.mxu0 0
      %3000 = vmatpush1.bf16.msra.mxu0 %v2975
      %3001 = vmatprep.subr.bf16.mxu0 0
      %3002 = vmatpush2.bf16.msra.mxu0 0
      %3003 = vmatprep.subr.bf16.mxu0 0
      %3004 = vmatpush2.bf16.msra.mxu0 0
      %3005 = vmatprep.subr.bf16.mxu0 0
      %3006 = vmatpush2.bf16.msra.mxu0 0
      %3007 = vmatprep.subr.bf16.mxu0 0
      %3008 = vmatpush2.bf16.msra.mxu0 0
      %3009 = vmatprep.subr.bf16.mxu0 0
      %3010 = vmatpush2.bf16.msra.mxu0 0
      %3011 = vmatprep.subr.bf16.mxu0 0
      %3012 = vmatpush2.bf16.msra.mxu0 0
      %3013 = vmatprep.subr.bf16.mxu0 0
      %3014 = vmatpush2.bf16.msra.mxu0 0
      %3015 = vmatprep.subr.bf16.mxu0 0
      %3016 = vmatpush2.bf16.msra.mxu0 0
      %3017 = vmatprep.mubr.bf16.mxu0 0
      %3018 = vmatmul.mubr.bf16.gmra.mxu0 %v2980
      %v3019 = vpop.f32.mrf.mxu0
      %v3020 = vadd.f32 %v2965, %v3019
      %v3021 = vpop.f32.mrf.mxu0
      %v3022 = vpop.f32.mrf.mxu0
      %v3023 = vadd.f32 %v2965, %v3022
      %v3024 = vpop.f32.mrf.mxu0
      %3025 = vmatprep.mubr.bf16.mxu0 0
      %3026 = vmatmul.mubr.bf16.gmra.mxu0 %v2983
      %v3027 = vpop.f32.mrf.mxu0
      %v3028 = vadd.f32 %v2965, %v3027
      %v3029 = vpop.f32.mrf.mxu0
      %v3030 = vpop.f32.mrf.mxu0
      %v3031 = vpop.f32.mrf.mxu0
      %3032 = vdwg.mxu0
      %v3033 = vadd.f32 %v2456, %v3020
      %v3034 = vadd.f32 %v2457, %v3023
      %v3035 = vadd.f32 %v2458, %v3028
      %s3036 = scalar_lea.vmem %s11, 2
      %v3037 = vld [vmem:[%s3036] sm:$0x1]
      %s3038 = scalar_lea.vmem %s12, 2
      %v3039 = vld [vmem:[%s3038] sm:$0x1]
      %v3040 = vsel %vm720, %v3033, 0.0
      %3041 = vadd.xlane.f32.xlu0 %v3040
      %v3042 = vpop.xlane.xlu0 %3041
      %v3043 = vsel %vm720, %v3034, 0.0
      %3044 = vadd.xlane.f32.xlu0 %v3043
      %v3045 = vpop.xlane.xlu0 %3044
      %v3046 = vsel %vm727, %v3035, 0.0
      %3047 = vadd.xlane.f32.xlu0 %v3046
      %v3048 = vpop.xlane.xlu0 %3047
      %v3049 = vmul.f32 %v3042, %v731
      %v3050 = vmul.f32 %v3045, %v731
      %v3051 = vmul.f32 %v3048, %v731
      %v3052 = vsub.f32 %v3033, %v3049
      %v3053 = vsub.f32 %v3034, %v3050
      %v3054 = vsub.f32 %v3035, %v3051
      %v3055 = vmul.f32 %v3052, %v3052
      %v3056 = vmul.f32 %v3053, %v3053
      %v3057 = vmul.f32 %v3054, %v3054
      %v3058 = vsel %vm720, %v3055, 0.0
      %3059 = vadd.xlane.f32.xlu0 %v3058
      %v3060 = vpop.xlane.xlu0 %3059
      %v3061 = vsel %vm720, %v3056, 0.0
      %3062 = vadd.xlane.f32.xlu0 %v3061
      %v3063 = vpop.xlane.xlu0 %3062
      %v3064 = vsel %vm727, %v3057, 0.0
      %3065 = vadd.xlane.f32.xlu0 %v3064
      %v3066 = vpop.xlane.xlu0 %3065
      %v3067 = vmul.f32 %v3060, %v731
      %v3068 = vmul.f32 %v3063, %v731
      %v3069 = vmul.f32 %v3066, %v731
      %v3070 = vadd.f32 %v3067, 1e-06
      %v3071 = vadd.f32 %v3068, 1e-06
      %v3072 = vadd.f32 %v3069, 1e-06
      %v3073 = vrsqrt.pop %v3070
      %v3074 = vrsqrt.pop %v3071
      %v3075 = vrsqrt.pop %v3072
      %v3076 = vmul.f32 %v3052, %v3073
      %v3077 = vmul.f32 %v3053, %v3074
      %v3078 = vmul.f32 %v3054, %v3075
      %v3080 = vlaneseq
      %v3081 = vshrl.u32 %v3080, 7
      %v3082 = vsub.s32 0, %v3081
      %v3083 = vrot.slane %v3037, %v3082
      %v3085 = vmul.f32 %v3076, %v3083
      %v3086 = vmul.f32 %v3077, %v3083
      %v3087 = vmul.f32 %v3078, %v3083
      %v3089 = vlaneseq
      %v3090 = vshrl.u32 %v3089, 7
      %v3091 = vsub.s32 0, %v3090
      %v3092 = vrot.slane %v3039, %v3091
      %v3094 = vadd.f32 %v3085, %v3092
      %v3095 = vadd.f32 %v3086, %v3092
      %v3096 = vadd.f32 %v3087, %v3092
      %v3097 = vpack.c.bf16 %v3095, %v3094
      %v3098 = vpack.c.bf16 %v3096, %v3096
      %s3099 = scalar_lea.vmem %s13, 32
      %v3100 = vld [vmem:[%s3099] sm:$0xf]
      %v3101 = vld [vmem:[%s3099 + $0x4] sm:$0xf]
      %v3102 = vld [vmem:[%s3099 + $0x8] sm:$0xf]
      %v3103 = vld [vmem:[%s3099 + $0xc] sm:$0xf]
      %s3104 = scalar_lea.vmem %s14, 2
      %v3105 = vld [vmem:[%s3104] sm:$0x1]
      %v3107 = vlaneseq
      %v3108 = vshrl.u32 %v3107, 7
      %v3109 = vsub.s32 0, %v3108
      %v3110 = vrot.slane %v3105, %v3109
      %v3116 = vunpack.c.l.b16 %v3100
      %v3117 = vunpack.c.l.b16 %v3101
      %v3118 = vunpack.c.l.b16 %v3102
      %v3119 = vunpack.c.l.b16 %v3103
      %v3120 = vpack.c.b16 %v3117, %v3116
      %v3121 = vpack.c.b16 %v3119, %v3118
      %v3125 = vsel %vm720, %v3097, 0
      %v3128 = vsel %vm720, %v3098, 0
      %3130 = vmatprep.subr.bf16.mxu0 0
      %3131 = vmatpush1.bf16.msra.mxu0 0
      %3132 = vmatprep.subr.bf16.mxu0 0
      %3133 = vmatpush1.bf16.msra.mxu0 0
      %3134 = vmatprep.subr.bf16.mxu0 0
      %3135 = vmatpush1.bf16.msra.mxu0 0
      %3136 = vmatprep.subr.bf16.mxu0 0
      %3137 = vmatpush1.bf16.msra.mxu0 0
      %3138 = vmatprep.subr.bf16.mxu0 0
      %3139 = vmatpush1.bf16.msra.mxu0 0
      %3140 = vmatprep.subr.bf16.mxu0 0
      %3141 = vmatpush1.bf16.msra.mxu0 0
      %3142 = vmatprep.subr.bf16.mxu0 0
      %3143 = vmatpush1.bf16.msra.mxu0 %v3121
      %3144 = vmatprep.subr.bf16.mxu0 0
      %3145 = vmatpush1.bf16.msra.mxu0 %v3120
      %3146 = vmatprep.subr.bf16.mxu0 0
      %3147 = vmatpush2.bf16.msra.mxu0 0
      %3148 = vmatprep.subr.bf16.mxu0 0
      %3149 = vmatpush2.bf16.msra.mxu0 0
      %3150 = vmatprep.subr.bf16.mxu0 0
      %3151 = vmatpush2.bf16.msra.mxu0 0
      %3152 = vmatprep.subr.bf16.mxu0 0
      %3153 = vmatpush2.bf16.msra.mxu0 0
      %3154 = vmatprep.subr.bf16.mxu0 0
      %3155 = vmatpush2.bf16.msra.mxu0 0
      %3156 = vmatprep.subr.bf16.mxu0 0
      %3157 = vmatpush2.bf16.msra.mxu0 0
      %3158 = vmatprep.subr.bf16.mxu0 0
      %3159 = vmatpush2.bf16.msra.mxu0 0
      %3160 = vmatprep.subr.bf16.mxu0 0
      %3161 = vmatpush2.bf16.msra.mxu0 0
      %3162 = vmatprep.mubr.bf16.mxu0 0
      %3163 = vmatmul.mubr.bf16.gmra.mxu0 %v3125
      %v3164 = vpop.f32.mrf.mxu0
      %v3165 = vadd.f32 %v3110, %v3164
      %v3166 = vpop.f32.mrf.mxu0
      %v3167 = vpop.f32.mrf.mxu0
      %v3168 = vadd.f32 %v3110, %v3167
      %v3169 = vpop.f32.mrf.mxu0
      %3170 = vmatprep.mubr.bf16.mxu0 0
      %3171 = vmatmul.mubr.bf16.gmra.mxu0 %v3128
      %v3172 = vpop.f32.mrf.mxu0
      %v3173 = vadd.f32 %v3110, %v3172
      %v3174 = vpop.f32.mrf.mxu0
      %v3175 = vpop.f32.mrf.mxu0
      %v3176 = vpop.f32.mrf.mxu0
      %3177 = vdwg.mxu0
      %v3178 = vmul.f32 %v3165, 0.5
      %v3179 = vmul.f32 %v3168, 0.5
      %v3180 = vmul.f32 %v3173, 0.5
      %v3181 = vmul.f32 %v3165, 0.044715
      %v3182 = vmul.f32 %v3168, 0.044715
      %v3183 = vmul.f32 %v3173, 0.044715
      %v3184 = vmul.f32 %v3181, %v3165
      %v3185 = vmul.f32 %v3182, %v3168
      %v3186 = vmul.f32 %v3183, %v3173
      %v3187 = vmul.f32 %v3184, %v3165
      %v3188 = vmul.f32 %v3185, %v3168
      %v3189 = vmul.f32 %v3186, %v3173
      %v3190 = vadd.f32 %v3165, %v3187
      %v3191 = vadd.f32 %v3168, %v3188
      %v3192 = vadd.f32 %v3173, %v3189
      %v3193 = vmul.f32 %v3190, 0.7978846
      %v3194 = vmul.f32 %v3191, 0.7978846
      %v3195 = vmul.f32 %v3192, 0.7978846
      %v3196 = vtanh.pop %v3193
      %v3197 = vtanh.pop %v3194
      %v3198 = vtanh.pop %v3195
      %v3199 = vadd.f32 %v3196, 1.0
      %v3200 = vadd.f32 %v3197, 1.0
      %v3201 = vadd.f32 %v3198, 1.0
      %v3202 = vmul.f32 %v3178, %v3199
      %v3203 = vmul.f32 %v3179, %v3200
      %v3204 = vmul.f32 %v3180, %v3201
      %v3205 = vpack.c.bf16 %v3203, %v3202
      %v3206 = vpack.c.bf16 %v3204, %v3204
      %s3207 = scalar_lea.vmem %s15, 128
      %v3208 = vld [vmem:[%s3207] sm:$0xf]
      %v3209 = vld [vmem:[%s3207 + $0x4] sm:$0xf]
      %v3210 = vld [vmem:[%s3207 + $0x8] sm:$0xf]
      %v3211 = vld [vmem:[%s3207 + $0xc] sm:$0xf]
      %v3212 = vld [vmem:[%s3207 + $0x10] sm:$0xf]
      %v3213 = vld [vmem:[%s3207 + $0x14] sm:$0xf]
      %v3214 = vld [vmem:[%s3207 + $0x18] sm:$0xf]
      %v3215 = vld [vmem:[%s3207 + $0x1c] sm:$0xf]
      %v3216 = vld [vmem:[%s3207 + $0x20] sm:$0xf]
      %v3217 = vld [vmem:[%s3207 + $0x24] sm:$0xf]
      %v3218 = vld [vmem:[%s3207 + $0x28] sm:$0xf]
      %v3219 = vld [vmem:[%s3207 + $0x2c] sm:$0xf]
      %v3220 = vld [vmem:[%s3207 + $0x30] sm:$0xf]
      %v3221 = vld [vmem:[%s3207 + $0x34] sm:$0xf]
      %v3222 = vld [vmem:[%s3207 + $0x38] sm:$0xf]
      %v3223 = vld [vmem:[%s3207 + $0x3c] sm:$0xf]
      %s3224 = scalar_lea.vmem %s16, 2
      %v3225 = vld [vmem:[%s3224] sm:$0x1]
      %v3227 = vlaneseq
      %v3228 = vshrl.u32 %v3227, 7
      %v3229 = vsub.s32 0, %v3228
      %v3230 = vrot.slane %v3225, %v3229
      %v3248 = vunpack.c.l.b16 %v3208
      %v3249 = vunpack.c.l.b16 %v3209
      %v3250 = vunpack.c.l.b16 %v3210
      %v3251 = vunpack.c.l.b16 %v3211
      %v3252 = vunpack.c.l.b16 %v3212
      %v3253 = vunpack.c.l.b16 %v3213
      %v3254 = vunpack.c.l.b16 %v3214
      %v3255 = vunpack.c.l.b16 %v3215
      %v3256 = vunpack.c.l.b16 %v3216
      %v3257 = vunpack.c.l.b16 %v3217
      %v3258 = vunpack.c.l.b16 %v3218
      %v3259 = vunpack.c.l.b16 %v3219
      %v3260 = vunpack.c.l.b16 %v3220
      %v3261 = vunpack.c.l.b16 %v3221
      %v3262 = vunpack.c.l.b16 %v3222
      %v3263 = vunpack.c.l.b16 %v3223
      %v3264 = vpack.c.b16 %v3249, %v3248
      %v3265 = vpack.c.b16 %v3251, %v3250
      %v3266 = vpack.c.b16 %v3253, %v3252
      %v3267 = vpack.c.b16 %v3255, %v3254
      %v3268 = vpack.c.b16 %v3257, %v3256
      %v3269 = vpack.c.b16 %v3259, %v3258
      %v3270 = vpack.c.b16 %v3261, %v3260
      %v3271 = vpack.c.b16 %v3263, %v3262
      %3280 = vmatprep.subr.bf16.mxu0 0
      %3281 = vmatpush1.bf16.msra.mxu0 %v3271
      %3282 = vmatprep.subr.bf16.mxu0 0
      %3283 = vmatpush1.bf16.msra.mxu0 %v3270
      %3284 = vmatprep.subr.bf16.mxu0 0
      %3285 = vmatpush1.bf16.msra.mxu0 %v3269
      %3286 = vmatprep.subr.bf16.mxu0 0
      %3287 = vmatpush1.bf16.msra.mxu0 %v3268
      %3288 = vmatprep.subr.bf16.mxu0 0
      %3289 = vmatpush1.bf16.msra.mxu0 %v3267
      %3290 = vmatprep.subr.bf16.mxu0 0
      %3291 = vmatpush1.bf16.msra.mxu0 %v3266
      %3292 = vmatprep.subr.bf16.mxu0 0
      %3293 = vmatpush1.bf16.msra.mxu0 %v3265
      %3294 = vmatprep.subr.bf16.mxu0 0
      %3295 = vmatpush1.bf16.msra.mxu0 %v3264
      %3296 = vmatprep.subr.bf16.mxu0 0
      %3297 = vmatpush2.bf16.msra.mxu0 0
      %3298 = vmatprep.subr.bf16.mxu0 0
      %3299 = vmatpush2.bf16.msra.mxu0 0
      %3300 = vmatprep.subr.bf16.mxu0 0
      %3301 = vmatpush2.bf16.msra.mxu0 0
      %3302 = vmatprep.subr.bf16.mxu0 0
      %3303 = vmatpush2.bf16.msra.mxu0 0
      %3304 = vmatprep.subr.bf16.mxu0 0
      %3305 = vmatpush2.bf16.msra.mxu0 0
      %3306 = vmatprep.subr.bf16.mxu0 0
      %3307 = vmatpush2.bf16.msra.mxu0 0
      %3308 = vmatprep.subr.bf16.mxu0 0
      %3309 = vmatpush2.bf16.msra.mxu0 0
      %3310 = vmatprep.subr.bf16.mxu0 0
      %3311 = vmatpush2.bf16.msra.mxu0 0
      %3312 = vmatprep.mubr.bf16.mxu0 0
      %3313 = vmatmul.mubr.bf16.gmra.mxu0 %v3205
      %v3314 = vpop.f32.mrf.mxu0
      %v3315 = vadd.f32 %v3230, %v3314
      %v3316 = vpop.f32.mrf.mxu0
      %v3317 = vpop.f32.mrf.mxu0
      %v3318 = vadd.f32 %v3230, %v3317
      %v3319 = vpop.f32.mrf.mxu0
      %3320 = vmatprep.mubr.bf16.mxu0 0
      %3321 = vmatmul.mubr.bf16.gmra.mxu0 %v3206
      %v3322 = vpop.f32.mrf.mxu0
      %v3323 = vadd.f32 %v3230, %v3322
      %v3324 = vpop.f32.mrf.mxu0
      %v3325 = vpop.f32.mrf.mxu0
      %v3326 = vpop.f32.mrf.mxu0
      %3327 = vdwg.mxu0
      %v3328 = vadd.f32 %v3033, %v3315
      %v3329 = vadd.f32 %v3034, %v3318
      %v3330 = vadd.f32 %v3035, %v3323
      %s3331 = scalar_lea.vmem %s5, 3
      %v3332 = vld [vmem:[%s3331] sm:$0x1]
      %s3333 = scalar_lea.vmem %s6, 3
      %v3334 = vld [vmem:[%s3333] sm:$0x1]
      %v3335 = vsel %vm720, %v3328, 0.0
      %3336 = vadd.xlane.f32.xlu0 %v3335
      %v3337 = vpop.xlane.xlu0 %3336
      %v3338 = vsel %vm720, %v3329, 0.0
      %3339 = vadd.xlane.f32.xlu0 %v3338
      %v3340 = vpop.xlane.xlu0 %3339
      %v3341 = vsel %vm727, %v3330, 0.0
      %3342 = vadd.xlane.f32.xlu0 %v3341
      %v3343 = vpop.xlane.xlu0 %3342
      %v3344 = vmul.f32 %v3337, %v731
      %v3345 = vmul.f32 %v3340, %v731
      %v3346 = vmul.f32 %v3343, %v731
      %v3347 = vsub.f32 %v3328, %v3344
      %v3348 = vsub.f32 %v3329, %v3345
      %v3349 = vsub.f32 %v3330, %v3346
      %v3350 = vmul.f32 %v3347, %v3347
      %v3351 = vmul.f32 %v3348, %v3348
      %v3352 = vmul.f32 %v3349, %v3349
      %v3353 = vsel %vm720, %v3350, 0.0
      %3354 = vadd.xlane.f32.xlu0 %v3353
      %v3355 = vpop.xlane.xlu0 %3354
      %v3356 = vsel %vm720, %v3351, 0.0
      %3357 = vadd.xlane.f32.xlu0 %v3356
      %v3358 = vpop.xlane.xlu0 %3357
      %v3359 = vsel %vm727, %v3352, 0.0
      %3360 = vadd.xlane.f32.xlu0 %v3359
      %v3361 = vpop.xlane.xlu0 %3360
      %v3362 = vmul.f32 %v3355, %v731
      %v3363 = vmul.f32 %v3358, %v731
      %v3364 = vmul.f32 %v3361, %v731
      %v3365 = vadd.f32 %v3362, 1e-06
      %v3366 = vadd.f32 %v3363, 1e-06
      %v3367 = vadd.f32 %v3364, 1e-06
      %v3368 = vrsqrt.pop %v3365
      %v3369 = vrsqrt.pop %v3366
      %v3370 = vrsqrt.pop %v3367
      %v3371 = vmul.f32 %v3347, %v3368
      %v3372 = vmul.f32 %v3348, %v3369
      %v3373 = vmul.f32 %v3349, %v3370
      %v3375 = vlaneseq
      %v3376 = vshrl.u32 %v3375, 7
      %v3377 = vsub.s32 0, %v3376
      %v3378 = vrot.slane %v3332, %v3377
      %v3380 = vmul.f32 %v3371, %v3378
      %v3381 = vmul.f32 %v3372, %v3378
      %v3382 = vmul.f32 %v3373, %v3378
      %v3384 = vlaneseq
      %v3385 = vshrl.u32 %v3384, 7
      %v3386 = vsub.s32 0, %v3385
      %v3387 = vrot.slane %v3334, %v3386
      %v3389 = vadd.f32 %v3380, %v3387
      %v3390 = vadd.f32 %v3381, %v3387
      %v3391 = vadd.f32 %v3382, %v3387
      %v3392 = vpack.c.bf16 %v3390, %v3389
      %v3393 = vpack.c.bf16 %v3391, %v3391
      %s3394 = scalar_lea.vmem %s7, 48
      %v3395 = vld [vmem:[%s3394] sm:$0xf]
      %v3396 = vld [vmem:[%s3394 + $0x4] sm:$0xf]
      %v3397 = vld [vmem:[%s3394 + $0x8] sm:$0xf]
      %v3398 = vld [vmem:[%s3394 + $0xc] sm:$0xf]
      %s3399 = scalar_lea.vmem %s8, 3
      %v3400 = vld [vmem:[%s3399] sm:$0x1]
      %v3402 = vlaneseq
      %v3403 = vshrl.u32 %v3402, 7
      %v3404 = vsub.s32 0, %v3403
      %v3405 = vrot.slane %v3400, %v3404
      %v3411 = vunpack.c.l.b16 %v3395
      %v3412 = vunpack.c.l.b16 %v3396
      %v3413 = vunpack.c.l.b16 %v3397
      %v3414 = vunpack.c.l.b16 %v3398
      %v3415 = vpack.c.b16 %v3412, %v3411
      %v3416 = vpack.c.b16 %v3414, %v3413
      %v3420 = vsel %vm720, %v3392, 0
      %v3423 = vsel %vm720, %v3393, 0
      %3425 = vmatprep.subr.bf16.mxu0 0
      %3426 = vmatpush1.bf16.msra.mxu0 0
      %3427 = vmatprep.subr.bf16.mxu0 0
      %3428 = vmatpush1.bf16.msra.mxu0 0
      %3429 = vmatprep.subr.bf16.mxu0 0
      %3430 = vmatpush1.bf16.msra.mxu0 0
      %3431 = vmatprep.subr.bf16.mxu0 0
      %3432 = vmatpush1.bf16.msra.mxu0 0
      %3433 = vmatprep.subr.bf16.mxu0 0
      %3434 = vmatpush1.bf16.msra.mxu0 0
      %3435 = vmatprep.subr.bf16.mxu0 0
      %3436 = vmatpush1.bf16.msra.mxu0 0
      %3437 = vmatprep.subr.bf16.mxu0 0
      %3438 = vmatpush1.bf16.msra.mxu0 %v3416
      %3439 = vmatprep.subr.bf16.mxu0 0
      %3440 = vmatpush1.bf16.msra.mxu0 %v3415
      %3441 = vmatprep.subr.bf16.mxu0 0
      %3442 = vmatpush2.bf16.msra.mxu0 0
      %3443 = vmatprep.subr.bf16.mxu0 0
      %3444 = vmatpush2.bf16.msra.mxu0 0
      %3445 = vmatprep.subr.bf16.mxu0 0
      %3446 = vmatpush2.bf16.msra.mxu0 0
      %3447 = vmatprep.subr.bf16.mxu0 0
      %3448 = vmatpush2.bf16.msra.mxu0 0
      %3449 = vmatprep.subr.bf16.mxu0 0
      %3450 = vmatpush2.bf16.msra.mxu0 0
      %3451 = vmatprep.subr.bf16.mxu0 0
      %3452 = vmatpush2.bf16.msra.mxu0 0
      %3453 = vmatprep.subr.bf16.mxu0 0
      %3454 = vmatpush2.bf16.msra.mxu0 0
      %3455 = vmatprep.subr.bf16.mxu0 0
      %3456 = vmatpush2.bf16.msra.mxu0 0
      %3457 = vmatprep.mubr.bf16.mxu0 0
      %3458 = vmatmul.mubr.bf16.gmra.mxu0 %v3420
      %v3459 = vpop.f32.mrf.mxu0
      %v3460 = vadd.f32 %v3405, %v3459
      %v3461 = vpop.f32.mrf.mxu0
      %v3462 = vpop.f32.mrf.mxu0
      %v3463 = vadd.f32 %v3405, %v3462
      %v3464 = vpop.f32.mrf.mxu0
      %3465 = vmatprep.mubr.bf16.mxu0 0
      %3466 = vmatmul.mubr.bf16.gmra.mxu0 %v3423
      %v3467 = vpop.f32.mrf.mxu0
      %v3468 = vadd.f32 %v3405, %v3467
      %v3469 = vpop.f32.mrf.mxu0
      %v3470 = vpop.f32.mrf.mxu0
      %v3471 = vpop.f32.mrf.mxu0
      %3472 = vdwg.mxu0
      %v3473 = vpack.c.bf16 %v3463, %v3460
      %v3474 = vpack.c.bf16 %v3468, %v3468
      %3477 = vrot.lane.b32.xlu0 %v3473, 96
      %v3478 = vpop.permute.xlu0 %3477
      %3479 = vrot.lane.b32.xlu0 %v3474, 96
      %v3480 = vpop.permute.xlu0 %3479
      %v3482 = vsel %vm867, %v3473, 0
      %v3485 = vsel %vm867, %v3474, 0
      %v3488 = vsel %vm867, %v3478, 0
      %v3491 = vsel %vm867, %v3480, 0
      %3493 = vmatprep.subr.bf16.mxu0 0
      %3494 = vmatpush1.bf16.xpose.msra.mxu0 0
      %3495 = vmatprep.subr.bf16.mxu0 0
      %3496 = vmatpush1.bf16.xpose.msra.mxu0 0
      %3497 = vmatprep.subr.bf16.mxu0 0
      %3498 = vmatpush1.bf16.xpose.msra.mxu0 0
      %3499 = vmatprep.subr.bf16.mxu0 0
      %3500 = vmatpush1.bf16.xpose.msra.mxu0 0
      %3501 = vmatprep.subr.bf16.mxu0 0
      %3502 = vmatpush1.bf16.xpose.msra.mxu0 0
      %3503 = vmatprep.subr.bf16.mxu0 0
      %3504 = vmatpush1.bf16.xpose.msra.mxu0 0
      %3505 = vmatprep.subr.bf16.mxu0 0
      %3506 = vmatpush1.bf16.xpose.msra.mxu0 %v3491
      %3507 = vmatprep.subr.bf16.mxu0 0
      %3508 = vmatpush1.bf16.xpose.msra.mxu0 %v3488
      %3509 = vmatprep.subr.bf16.mxu0 0
      %3510 = vmatpush2.bf16.xpose.msra.mxu0 0
      %3511 = vmatprep.subr.bf16.mxu0 0
      %3512 = vmatpush2.bf16.xpose.msra.mxu0 0
      %3513 = vmatprep.subr.bf16.mxu0 0
      %3514 = vmatpush2.bf16.xpose.msra.mxu0 0
      %3515 = vmatprep.subr.bf16.mxu0 0
      %3516 = vmatpush2.bf16.xpose.msra.mxu0 0
      %3517 = vmatprep.subr.bf16.mxu0 0
      %3518 = vmatpush2.bf16.xpose.msra.mxu0 0
      %3519 = vmatprep.subr.bf16.mxu0 0
      %3520 = vmatpush2.bf16.xpose.msra.mxu0 0
      %3521 = vmatprep.subr.bf16.mxu0 0
      %3522 = vmatpush2.bf16.xpose.msra.mxu0 0
      %3523 = vmatprep.subr.bf16.mxu0 0
      %3524 = vmatpush2.bf16.xpose.msra.mxu0 0
      %3525 = vmatprep.mubr.bf16.mxu0 0
      %3526 = vmatmul.mubr.bf16.gmra.mxu0 %v3482
      %v3527 = vpop.f32.mrf.mxu0
      %v3528 = vadd.f32 0.0, %v3527
      %v3529 = vpop.f32.mrf.mxu0
      %v3530 = vpop.f32.mrf.mxu0
      %v3531 = vadd.f32 0.0, %v3530
      %v3532 = vpop.f32.mrf.mxu0
      %3533 = vmatprep.mubr.bf16.mxu0 0
      %3534 = vmatmul.mubr.bf16.gmra.mxu0 %v3485
      %v3535 = vpop.f32.mrf.mxu0
      %v3536 = vadd.f32 0.0, %v3535
      %v3537 = vpop.f32.mrf.mxu0
      %v3538 = vpop.f32.mrf.mxu0
      %v3539 = vpop.f32.mrf.mxu0
      %3540 = vdwg.mxu0
      %v3541 = vmul.f32 %v3528, 0.25
      %v3542 = vmul.f32 %v3531, 0.25
      %v3543 = vmul.f32 %v3536, 0.25
      %v3544 = vsel %vm931, %v3541, -inf
      %3545 = vmax.xlane.f32.xlu0 %v3544
      %v3546 = vpop.xlane.xlu0 %3545
      %v3547 = vsel %vm931, %v3542, -inf
      %3548 = vmax.xlane.f32.xlu0 %v3547
      %v3549 = vpop.xlane.xlu0 %3548
      %v3550 = vsel %vm938, %v3543, -inf
      %3551 = vmax.xlane.f32.xlu0 %v3550
      %v3552 = vpop.xlane.xlu0 %3551
      %v3553 = vsub.f32 %v3541, %v3546
      %v3554 = vsub.f32 %v3542, %v3549
      %v3555 = vsub.f32 %v3543, %v3552
      %v3556 = vmul.f32 %v3553, 1.442695
      %v3557 = vpow.pop %v3556
      %v3558 = vmul.f32 %v3554, 1.442695
      %v3559 = vpow.pop %v3558
      %v3560 = vmul.f32 %v3555, 1.442695
      %v3561 = vpow.pop %v3560
      %v3562 = vsel %vm931, %v3557, 0.0
      %3563 = vadd.xlane.f32.xlu0 %v3562
      %v3564 = vpop.xlane.xlu0 %3563
      %v3565 = vsel %vm931, %v3559, 0.0
      %3566 = vadd.xlane.f32.xlu0 %v3565
      %v3567 = vpop.xlane.xlu0 %3566
      %v3568 = vsel %vm938, %v3561, 0.0
      %3569 = vadd.xlane.f32.xlu0 %v3568
      %v3570 = vpop.xlane.xlu0 %3569
      %v3571 = vrcp.pop %v3564
      %v3572 = vrcp.pop %v3567
      %v3573 = vrcp.pop %v3570
      %v3574 = vmul.f32 %v3557, %v3571
      %v3575 = vmul.f32 %v3559, %v3572
      %v3576 = vmul.f32 %v3561, %v3573
      %v3577 = vpack.c.bf16 %v3575, %v3574
      %v3578 = vpack.c.bf16 %v3576, %v3576
      %3579 = vrot.lane.b32.xlu0 %v3473, 64
      %v3580 = vpop.permute.xlu0 %3579
      %3581 = vrot.lane.b32.xlu0 %v3474, 64
      %v3582 = vpop.permute.xlu0 %3581
      %v3585 = vsel %vm931, %v3577, 0
      %v3588 = vsel %vm931, %v3578, 0
      %v3591 = vand.u32 %v3582, %v981
      %3593 = vmatprep.subr.bf16.mxu0 0
      %3594 = vmatpush1.bf16.msra.mxu0 0
      %3595 = vmatprep.subr.bf16.mxu0 0
      %3596 = vmatpush1.bf16.msra.mxu0 0
      %3597 = vmatprep.subr.bf16.mxu0 0
      %3598 = vmatpush1.bf16.msra.mxu0 0
      %3599 = vmatprep.subr.bf16.mxu0 0
      %3600 = vmatpush1.bf16.msra.mxu0 0
      %3601 = vmatprep.subr.bf16.mxu0 0
      %3602 = vmatpush1.bf16.msra.mxu0 0
      %3603 = vmatprep.subr.bf16.mxu0 0
      %3604 = vmatpush1.bf16.msra.mxu0 0
      %3605 = vmatprep.subr.bf16.mxu0 0
      %3606 = vmatpush1.bf16.msra.mxu0 %v3591
      %3607 = vmatprep.subr.bf16.mxu0 0
      %3608 = vmatpush1.bf16.msra.mxu0 %v3580
      %3609 = vmatprep.subr.bf16.mxu0 0
      %3610 = vmatpush2.bf16.msra.mxu0 0
      %3611 = vmatprep.subr.bf16.mxu0 0
      %3612 = vmatpush2.bf16.msra.mxu0 0
      %3613 = vmatprep.subr.bf16.mxu0 0
      %3614 = vmatpush2.bf16.msra.mxu0 0
      %3615 = vmatprep.subr.bf16.mxu0 0
      %3616 = vmatpush2.bf16.msra.mxu0 0
      %3617 = vmatprep.subr.bf16.mxu0 0
      %3618 = vmatpush2.bf16.msra.mxu0 0
      %3619 = vmatprep.subr.bf16.mxu0 0
      %3620 = vmatpush2.bf16.msra.mxu0 0
      %3621 = vmatprep.subr.bf16.mxu0 0
      %3622 = vmatpush2.bf16.msra.mxu0 0
      %3623 = vmatprep.subr.bf16.mxu0 0
      %3624 = vmatpush2.bf16.msra.mxu0 0
      %3625 = vmatprep.mubr.bf16.mxu0 0
      %3626 = vmatmul.mubr.bf16.gmra.mxu0 %v3585
      %v3627 = vpop.f32.mrf.mxu0
      %v3628 = vadd.f32 0.0, %v3627
      %v3629 = vpop.f32.mrf.mxu0
      %v3630 = vpop.f32.mrf.mxu0
      %v3631 = vadd.f32 0.0, %v3630
      %v3632 = vpop.f32.mrf.mxu0
      %3633 = vmatprep.mubr.bf16.mxu0 0
      %3634 = vmatmul.mubr.bf16.gmra.mxu0 %v3588
      %v3635 = vpop.f32.mrf.mxu0
      %v3636 = vadd.f32 0.0, %v3635
      %v3637 = vpop.f32.mrf.mxu0
      %v3638 = vpop.f32.mrf.mxu0
      %v3639 = vpop.f32.mrf.mxu0
      %3640 = vdwg.mxu0
      %3641 = vrot.lane.b32.xlu0 %v3473, 112
      %v3642 = vpop.permute.xlu0 %3641
      %3643 = vrot.lane.b32.xlu0 %v3474, 112
      %v3644 = vpop.permute.xlu0 %3643
      %3645 = vrot.lane.b32.xlu0 %v3473, 80
      %v3646 = vpop.permute.xlu0 %3645
      %3647 = vrot.lane.b32.xlu0 %v3474, 80
      %v3648 = vpop.permute.xlu0 %3647
      %v3650 = vsel %vm867, %v3642, 0
      %v3653 = vsel %vm867, %v3644, 0
      %v3656 = vsel %vm867, %v3646, 0
      %v3659 = vsel %vm867, %v3648, 0
      %3661 = vmatprep.subr.bf16.mxu0 0
      %3662 = vmatpush1.bf16.xpose.msra.mxu0 0
      %3663 = vmatprep.subr.bf16.mxu0 0
      %3664 = vmatpush1.bf16.xpose.msra.mxu0 0
      %3665 = vmatprep.subr.bf16.mxu0 0
      %3666 = vmatpush1.bf16.xpose.msra.mxu0 0
      %3667 = vmatprep.subr.bf16.mxu0 0
      %3668 = vmatpush1.bf16.xpose.msra.mxu0 0
      %3669 = vmatprep.subr.bf16.mxu0 0
      %3670 = vmatpush1.bf16.xpose.msra.mxu0 0
      %3671 = vmatprep.subr.bf16.mxu0 0
      %3672 = vmatpush1.bf16.xpose.msra.mxu0 0
      %3673 = vmatprep.subr.bf16.mxu0 0
      %3674 = vmatpush1.bf16.xpose.msra.mxu0 %v3659
      %3675 = vmatprep.subr.bf16.mxu0 0
      %3676 = vmatpush1.bf16.xpose.msra.mxu0 %v3656
      %3677 = vmatprep.subr.bf16.mxu0 0
      %3678 = vmatpush2.bf16.xpose.msra.mxu0 0
      %3679 = vmatprep.subr.bf16.mxu0 0
      %3680 = vmatpush2.bf16.xpose.msra.mxu0 0
      %3681 = vmatprep.subr.bf16.mxu0 0
      %3682 = vmatpush2.bf16.xpose.msra.mxu0 0
      %3683 = vmatprep.subr.bf16.mxu0 0
      %3684 = vmatpush2.bf16.xpose.msra.mxu0 0
      %3685 = vmatprep.subr.bf16.mxu0 0
      %3686 = vmatpush2.bf16.xpose.msra.mxu0 0
      %3687 = vmatprep.subr.bf16.mxu0 0
      %3688 = vmatpush2.bf16.xpose.msra.mxu0 0
      %3689 = vmatprep.subr.bf16.mxu0 0
      %3690 = vmatpush2.bf16.xpose.msra.mxu0 0
      %3691 = vmatprep.subr.bf16.mxu0 0
      %3692 = vmatpush2.bf16.xpose.msra.mxu0 0
      %3693 = vmatprep.mubr.bf16.mxu0 0
      %3694 = vmatmul.mubr.bf16.gmra.mxu0 %v3650
      %v3695 = vpop.f32.mrf.mxu0
      %v3696 = vadd.f32 0.0, %v3695
      %v3697 = vpop.f32.mrf.mxu0
      %v3698 = vpop.f32.mrf.mxu0
      %v3699 = vadd.f32 0.0, %v3698
      %v3700 = vpop.f32.mrf.mxu0
      %3701 = vmatprep.mubr.bf16.mxu0 0
      %3702 = vmatmul.mubr.bf16.gmra.mxu0 %v3653
      %v3703 = vpop.f32.mrf.mxu0
      %v3704 = vadd.f32 0.0, %v3703
      %v3705 = vpop.f32.mrf.mxu0
      %v3706 = vpop.f32.mrf.mxu0
      %v3707 = vpop.f32.mrf.mxu0
      %3708 = vdwg.mxu0
      %v3709 = vmul.f32 %v3696, 0.25
      %v3710 = vmul.f32 %v3699, 0.25
      %v3711 = vmul.f32 %v3704, 0.25
      %v3712 = vsel %vm931, %v3709, -inf
      %3713 = vmax.xlane.f32.xlu0 %v3712
      %v3714 = vpop.xlane.xlu0 %3713
      %v3715 = vsel %vm931, %v3710, -inf
      %3716 = vmax.xlane.f32.xlu0 %v3715
      %v3717 = vpop.xlane.xlu0 %3716
      %v3718 = vsel %vm938, %v3711, -inf
      %3719 = vmax.xlane.f32.xlu0 %v3718
      %v3720 = vpop.xlane.xlu0 %3719
      %v3721 = vsub.f32 %v3709, %v3714
      %v3722 = vsub.f32 %v3710, %v3717
      %v3723 = vsub.f32 %v3711, %v3720
      %v3724 = vmul.f32 %v3721, 1.442695
      %v3725 = vpow.pop %v3724
      %v3726 = vmul.f32 %v3722, 1.442695
      %v3727 = vpow.pop %v3726
      %v3728 = vmul.f32 %v3723, 1.442695
      %v3729 = vpow.pop %v3728
      %v3730 = vsel %vm931, %v3725, 0.0
      %3731 = vadd.xlane.f32.xlu0 %v3730
      %v3732 = vpop.xlane.xlu0 %3731
      %v3733 = vsel %vm931, %v3727, 0.0
      %3734 = vadd.xlane.f32.xlu0 %v3733
      %v3735 = vpop.xlane.xlu0 %3734
      %v3736 = vsel %vm938, %v3729, 0.0
      %3737 = vadd.xlane.f32.xlu0 %v3736
      %v3738 = vpop.xlane.xlu0 %3737
      %v3739 = vrcp.pop %v3732
      %v3740 = vrcp.pop %v3735
      %v3741 = vrcp.pop %v3738
      %v3742 = vmul.f32 %v3725, %v3739
      %v3743 = vmul.f32 %v3727, %v3740
      %v3744 = vmul.f32 %v3729, %v3741
      %v3745 = vpack.c.bf16 %v3743, %v3742
      %v3746 = vpack.c.bf16 %v3744, %v3744
      %3747 = vrot.lane.b32.xlu0 %v3473, 48
      %v3748 = vpop.permute.xlu0 %3747
      %3749 = vrot.lane.b32.xlu0 %v3474, 48
      %v3750 = vpop.permute.xlu0 %3749
      %v3753 = vsel %vm931, %v3745, 0
      %v3756 = vsel %vm931, %v3746, 0
      %v3759 = vand.u32 %v3750, %v981
      %3761 = vmatprep.subr.bf16.mxu0 0
      %3762 = vmatpush1.bf16.msra.mxu0 0
      %3763 = vmatprep.subr.bf16.mxu0 0
      %3764 = vmatpush1.bf16.msra.mxu0 0
      %3765 = vmatprep.subr.bf16.mxu0 0
      %3766 = vmatpush1.bf16.msra.mxu0 0
      %3767 = vmatprep.subr.bf16.mxu0 0
      %3768 = vmatpush1.bf16.msra.mxu0 0
      %3769 = vmatprep.subr.bf16.mxu0 0
      %3770 = vmatpush1.bf16.msra.mxu0 0
      %3771 = vmatprep.subr.bf16.mxu0 0
      %3772 = vmatpush1.bf16.msra.mxu0 0
      %3773 = vmatprep.subr.bf16.mxu0 0
      %3774 = vmatpush1.bf16.msra.mxu0 %v3759
      %3775 = vmatprep.subr.bf16.mxu0 0
      %3776 = vmatpush1.bf16.msra.mxu0 %v3748
      %3777 = vmatprep.subr.bf16.mxu0 0
      %3778 = vmatpush2.bf16.msra.mxu0 0
      %3779 = vmatprep.subr.bf16.mxu0 0
      %3780 = vmatpush2.bf16.msra.mxu0 0
      %3781 = vmatprep.subr.bf16.mxu0 0
      %3782 = vmatpush2.bf16.msra.mxu0 0
      %3783 = vmatprep.subr.bf16.mxu0 0
      %3784 = vmatpush2.bf16.msra.mxu0 0
      %3785 = vmatprep.subr.bf16.mxu0 0
      %3786 = vmatpush2.bf16.msra.mxu0 0
      %3787 = vmatprep.subr.bf16.mxu0 0
      %3788 = vmatpush2.bf16.msra.mxu0 0
      %3789 = vmatprep.subr.bf16.mxu0 0
      %3790 = vmatpush2.bf16.msra.mxu0 0
      %3791 = vmatprep.subr.bf16.mxu0 0
      %3792 = vmatpush2.bf16.msra.mxu0 0
      %3793 = vmatprep.mubr.bf16.mxu0 0
      %3794 = vmatmul.mubr.bf16.gmra.mxu0 %v3753
      %v3795 = vpop.f32.mrf.mxu0
      %v3796 = vadd.f32 0.0, %v3795
      %v3797 = vpop.f32.mrf.mxu0
      %v3798 = vpop.f32.mrf.mxu0
      %v3799 = vadd.f32 0.0, %v3798
      %v3800 = vpop.f32.mrf.mxu0
      %3801 = vmatprep.mubr.bf16.mxu0 0
      %3802 = vmatmul.mubr.bf16.gmra.mxu0 %v3756
      %v3803 = vpop.f32.mrf.mxu0
      %v3804 = vadd.f32 0.0, %v3803
      %v3805 = vpop.f32.mrf.mxu0
      %v3806 = vpop.f32.mrf.mxu0
      %v3807 = vpop.f32.mrf.mxu0
      %3808 = vdwg.mxu0
      %3812 = vrot.lane.b32.xlu0 %v3796, 16
      %v3813 = vpop.permute.xlu0 %3812
      %3814 = vrot.lane.b32.xlu0 %v3799, 16
      %v3815 = vpop.permute.xlu0 %3814
      %3816 = vrot.lane.b32.xlu0 %v3804, 16
      %v3817 = vpop.permute.xlu0 %3816
      %v3821 = vsel %vm867, %v3628, %v3813
      %v3822 = vsel %vm867, %v3631, %v3815
      %v3823 = vsel %vm867, %v3636, %v3817
      %v3824 = vpack.c.bf16 %v3822, %v3821
      %v3825 = vpack.c.bf16 %v3823, %v3823
      %s3826 = scalar_lea.vmem %s9, 48
      %v3827 = vld [vmem:[%s3826] sm:$0xf]
      %v3828 = vld [vmem:[%s3826 + $0x4] sm:$0xf]
      %v3829 = vld [vmem:[%s3826 + $0x8] sm:$0xf]
      %v3830 = vld [vmem:[%s3826 + $0xc] sm:$0xf]
      %s3831 = scalar_lea.vmem %s10, 3
      %v3832 = vld [vmem:[%s3831] sm:$0x1]
      %v3834 = vlaneseq
      %v3835 = vshrl.u32 %v3834, 7
      %v3836 = vsub.s32 0, %v3835
      %v3837 = vrot.slane %v3832, %v3836
      %v3843 = vunpack.c.l.b16 %v3827
      %v3844 = vunpack.c.l.b16 %v3828
      %v3845 = vunpack.c.l.b16 %v3829
      %v3846 = vunpack.c.l.b16 %v3830
      %v3847 = vpack.c.b16 %v3844, %v3843
      %v3848 = vpack.c.b16 %v3846, %v3845
      %v3852 = vsel %vm720, %v3824, 0
      %v3855 = vsel %vm720, %v3825, 0
      %3857 = vmatprep.subr.bf16.mxu0 0
      %3858 = vmatpush1.bf16.msra.mxu0 0
      %3859 = vmatprep.subr.bf16.mxu0 0
      %3860 = vmatpush1.bf16.msra.mxu0 0
      %3861 = vmatprep.subr.bf16.mxu0 0
      %3862 = vmatpush1.bf16.msra.mxu0 0
      %3863 = vmatprep.subr.bf16.mxu0 0
      %3864 = vmatpush1.bf16.msra.mxu0 0
      %3865 = vmatprep.subr.bf16.mxu0 0
      %3866 = vmatpush1.bf16.msra.mxu0 0
      %3867 = vmatprep.subr.bf16.mxu0 0
      %3868 = vmatpush1.bf16.msra.mxu0 0
      %3869 = vmatprep.subr.bf16.mxu0 0
      %3870 = vmatpush1.bf16.msra.mxu0 %v3848
      %3871 = vmatprep.subr.bf16.mxu0 0
      %3872 = vmatpush1.bf16.msra.mxu0 %v3847
      %3873 = vmatprep.subr.bf16.mxu0 0
      %3874 = vmatpush2.bf16.msra.mxu0 0
      %3875 = vmatprep.subr.bf16.mxu0 0
      %3876 = vmatpush2.bf16.msra.mxu0 0
      %3877 = vmatprep.subr.bf16.mxu0 0
      %3878 = vmatpush2.bf16.msra.mxu0 0
      %3879 = vmatprep.subr.bf16.mxu0 0
      %3880 = vmatpush2.bf16.msra.mxu0 0
      %3881 = vmatprep.subr.bf16.mxu0 0
      %3882 = vmatpush2.bf16.msra.mxu0 0
      %3883 = vmatprep.subr.bf16.mxu0 0
      %3884 = vmatpush2.bf16.msra.mxu0 0
      %3885 = vmatprep.subr.bf16.mxu0 0
      %3886 = vmatpush2.bf16.msra.mxu0 0
      %3887 = vmatprep.subr.bf16.mxu0 0
      %3888 = vmatpush2.bf16.msra.mxu0 0
      %3889 = vmatprep.mubr.bf16.mxu0 0
      %3890 = vmatmul.mubr.bf16.gmra.mxu0 %v3852
      %v3891 = vpop.f32.mrf.mxu0
      %v3892 = vadd.f32 %v3837, %v3891
      %v3893 = vpop.f32.mrf.mxu0
      %v3894 = vpop.f32.mrf.mxu0
      %v3895 = vadd.f32 %v3837, %v3894
      %v3896 = vpop.f32.mrf.mxu0
      %3897 = vmatprep.mubr.bf16.mxu0 0
      %3898 = vmatmul.mubr.bf16.gmra.mxu0 %v3855
      %v3899 = vpop.f32.mrf.mxu0
      %v3900 = vadd.f32 %v3837, %v3899
      %v3901 = vpop.f32.mrf.mxu0
      %v3902 = vpop.f32.mrf.mxu0
      %v3903 = vpop.f32.mrf.mxu0
      %3904 = vdwg.mxu0
      %v3905 = vadd.f32 %v3328, %v3892
      %v3906 = vadd.f32 %v3329, %v3895
      %v3907 = vadd.f32 %v3330, %v3900
      %s3908 = scalar_lea.vmem %s11, 3
      %v3909 = vld [vmem:[%s3908] sm:$0x1]
      %s3910 = scalar_lea.vmem %s12, 3
      %v3911 = vld [vmem:[%s3910] sm:$0x1]
      %v3912 = vsel %vm720, %v3905, 0.0
      %3913 = vadd.xlane.f32.xlu0 %v3912
      %v3914 = vpop.xlane.xlu0 %3913
      %v3915 = vsel %vm720, %v3906, 0.0
      %3916 = vadd.xlane.f32.xlu0 %v3915
      %v3917 = vpop.xlane.xlu0 %3916
      %v3918 = vsel %vm727, %v3907, 0.0
      %3919 = vadd.xlane.f32.xlu0 %v3918
      %v3920 = vpop.xlane.xlu0 %3919
      %v3921 = vmul.f32 %v3914, %v731
      %v3922 = vmul.f32 %v3917, %v731
      %v3923 = vmul.f32 %v3920, %v731
      %v3924 = vsub.f32 %v3905, %v3921
      %v3925 = vsub.f32 %v3906, %v3922
      %v3926 = vsub.f32 %v3907, %v3923
      %v3927 = vmul.f32 %v3924, %v3924
      %v3928 = vmul.f32 %v3925, %v3925
      %v3929 = vmul.f32 %v3926, %v3926
      %v3930 = vsel %vm720, %v3927, 0.0
      %3931 = vadd.xlane.f32.xlu0 %v3930
      %v3932 = vpop.xlane.xlu0 %3931
      %v3933 = vsel %vm720, %v3928, 0.0
      %3934 = vadd.xlane.f32.xlu0 %v3933
      %v3935 = vpop.xlane.xlu0 %3934
      %v3936 = vsel %vm727, %v3929, 0.0
      %3937 = vadd.xlane.f32.xlu0 %v3936
      %v3938 = vpop.xlane.xlu0 %3937
      %v3939 = vmul.f32 %v3932, %v731
      %v3940 = vmul.f32 %v3935, %v731
      %v3941 = vmul.f32 %v3938, %v731
      %v3942 = vadd.f32 %v3939, 1e-06
      %v3943 = vadd.f32 %v3940, 1e-06
      %v3944 = vadd.f32 %v3941, 1e-06
      %v3945 = vrsqrt.pop %v3942
      %v3946 = vrsqrt.pop %v3943
      %v3947 = vrsqrt.pop %v3944
      %v3948 = vmul.f32 %v3924, %v3945
      %v3949 = vmul.f32 %v3925, %v3946
      %v3950 = vmul.f32 %v3926, %v3947
      %v3952 = vlaneseq
      %v3953 = vshrl.u32 %v3952, 7
      %v3954 = vsub.s32 0, %v3953
      %v3955 = vrot.slane %v3909, %v3954
      %v3957 = vmul.f32 %v3948, %v3955
      %v3958 = vmul.f32 %v3949, %v3955
      %v3959 = vmul.f32 %v3950, %v3955
      %v3961 = vlaneseq
      %v3962 = vshrl.u32 %v3961, 7
      %v3963 = vsub.s32 0, %v3962
      %v3964 = vrot.slane %v3911, %v3963
      %v3966 = vadd.f32 %v3957, %v3964
      %v3967 = vadd.f32 %v3958, %v3964
      %v3968 = vadd.f32 %v3959, %v3964
      %v3969 = vpack.c.bf16 %v3967, %v3966
      %v3970 = vpack.c.bf16 %v3968, %v3968
      %s3971 = scalar_lea.vmem %s13, 48
      %v3972 = vld [vmem:[%s3971] sm:$0xf]
      %v3973 = vld [vmem:[%s3971 + $0x4] sm:$0xf]
      %v3974 = vld [vmem:[%s3971 + $0x8] sm:$0xf]
      %v3975 = vld [vmem:[%s3971 + $0xc] sm:$0xf]
      %s3976 = scalar_lea.vmem %s14, 3
      %v3977 = vld [vmem:[%s3976] sm:$0x1]
      %v3979 = vlaneseq
      %v3980 = vshrl.u32 %v3979, 7
      %v3981 = vsub.s32 0, %v3980
      %v3982 = vrot.slane %v3977, %v3981
      %v3988 = vunpack.c.l.b16 %v3972
      %v3989 = vunpack.c.l.b16 %v3973
      %v3990 = vunpack.c.l.b16 %v3974
      %v3991 = vunpack.c.l.b16 %v3975
      %v3992 = vpack.c.b16 %v3989, %v3988
      %v3993 = vpack.c.b16 %v3991, %v3990
      %v3997 = vsel %vm720, %v3969, 0
      %v4000 = vsel %vm720, %v3970, 0
      %4002 = vmatprep.subr.bf16.mxu0 0
      %4003 = vmatpush1.bf16.msra.mxu0 0
      %4004 = vmatprep.subr.bf16.mxu0 0
      %4005 = vmatpush1.bf16.msra.mxu0 0
      %4006 = vmatprep.subr.bf16.mxu0 0
      %4007 = vmatpush1.bf16.msra.mxu0 0
      %4008 = vmatprep.subr.bf16.mxu0 0
      %4009 = vmatpush1.bf16.msra.mxu0 0
      %4010 = vmatprep.subr.bf16.mxu0 0
      %4011 = vmatpush1.bf16.msra.mxu0 0
      %4012 = vmatprep.subr.bf16.mxu0 0
      %4013 = vmatpush1.bf16.msra.mxu0 0
      %4014 = vmatprep.subr.bf16.mxu0 0
      %4015 = vmatpush1.bf16.msra.mxu0 %v3993
      %4016 = vmatprep.subr.bf16.mxu0 0
      %4017 = vmatpush1.bf16.msra.mxu0 %v3992
      %4018 = vmatprep.subr.bf16.mxu0 0
      %4019 = vmatpush2.bf16.msra.mxu0 0
      %4020 = vmatprep.subr.bf16.mxu0 0
      %4021 = vmatpush2.bf16.msra.mxu0 0
      %4022 = vmatprep.subr.bf16.mxu0 0
      %4023 = vmatpush2.bf16.msra.mxu0 0
      %4024 = vmatprep.subr.bf16.mxu0 0
      %4025 = vmatpush2.bf16.msra.mxu0 0
      %4026 = vmatprep.subr.bf16.mxu0 0
      %4027 = vmatpush2.bf16.msra.mxu0 0
      %4028 = vmatprep.subr.bf16.mxu0 0
      %4029 = vmatpush2.bf16.msra.mxu0 0
      %4030 = vmatprep.subr.bf16.mxu0 0
      %4031 = vmatpush2.bf16.msra.mxu0 0
      %4032 = vmatprep.subr.bf16.mxu0 0
      %4033 = vmatpush2.bf16.msra.mxu0 0
      %4034 = vmatprep.mubr.bf16.mxu0 0
      %4035 = vmatmul.mubr.bf16.gmra.mxu0 %v3997
      %v4036 = vpop.f32.mrf.mxu0
      %v4037 = vadd.f32 %v3982, %v4036
      %v4038 = vpop.f32.mrf.mxu0
      %v4039 = vpop.f32.mrf.mxu0
      %v4040 = vadd.f32 %v3982, %v4039
      %v4041 = vpop.f32.mrf.mxu0
      %4042 = vmatprep.mubr.bf16.mxu0 0
      %4043 = vmatmul.mubr.bf16.gmra.mxu0 %v4000
      %v4044 = vpop.f32.mrf.mxu0
      %v4045 = vadd.f32 %v3982, %v4044
      %v4046 = vpop.f32.mrf.mxu0
      %v4047 = vpop.f32.mrf.mxu0
      %v4048 = vpop.f32.mrf.mxu0
      %4049 = vdwg.mxu0
      %v4050 = vmul.f32 %v4037, 0.5
      %v4051 = vmul.f32 %v4040, 0.5
      %v4052 = vmul.f32 %v4045, 0.5
      %v4053 = vmul.f32 %v4037, 0.044715
      %v4054 = vmul.f32 %v4040, 0.044715
      %v4055 = vmul.f32 %v4045, 0.044715
      %v4056 = vmul.f32 %v4053, %v4037
      %v4057 = vmul.f32 %v4054, %v4040
      %v4058 = vmul.f32 %v4055, %v4045
      %v4059 = vmul.f32 %v4056, %v4037
      %v4060 = vmul.f32 %v4057, %v4040
      %v4061 = vmul.f32 %v4058, %v4045
      %v4062 = vadd.f32 %v4037, %v4059
      %v4063 = vadd.f32 %v4040, %v4060
      %v4064 = vadd.f32 %v4045, %v4061
      %v4065 = vmul.f32 %v4062, 0.7978846
      %v4066 = vmul.f32 %v4063, 0.7978846
      %v4067 = vmul.f32 %v4064, 0.7978846
      %v4068 = vtanh.pop %v4065
      %v4069 = vtanh.pop %v4066
      %v4070 = vtanh.pop %v4067
      %v4071 = vadd.f32 %v4068, 1.0
      %v4072 = vadd.f32 %v4069, 1.0
      %v4073 = vadd.f32 %v4070, 1.0
      %v4074 = vmul.f32 %v4050, %v4071
      %v4075 = vmul.f32 %v4051, %v4072
      %v4076 = vmul.f32 %v4052, %v4073
      %v4077 = vpack.c.bf16 %v4075, %v4074
      %v4078 = vpack.c.bf16 %v4076, %v4076
      %s4079 = scalar_lea.vmem %s15, 192
      %v4080 = vld [vmem:[%s4079] sm:$0xf]
      %v4081 = vld [vmem:[%s4079 + $0x4] sm:$0xf]
      %v4082 = vld [vmem:[%s4079 + $0x8] sm:$0xf]
      %v4083 = vld [vmem:[%s4079 + $0xc] sm:$0xf]
      %v4084 = vld [vmem:[%s4079 + $0x10] sm:$0xf]
      %v4085 = vld [vmem:[%s4079 + $0x14] sm:$0xf]
      %v4086 = vld [vmem:[%s4079 + $0x18] sm:$0xf]
      %v4087 = vld [vmem:[%s4079 + $0x1c] sm:$0xf]
      %v4088 = vld [vmem:[%s4079 + $0x20] sm:$0xf]
      %v4089 = vld [vmem:[%s4079 + $0x24] sm:$0xf]
      %v4090 = vld [vmem:[%s4079 + $0x28] sm:$0xf]
      %v4091 = vld [vmem:[%s4079 + $0x2c] sm:$0xf]
      %v4092 = vld [vmem:[%s4079 + $0x30] sm:$0xf]
      %v4093 = vld [vmem:[%s4079 + $0x34] sm:$0xf]
      %v4094 = vld [vmem:[%s4079 + $0x38] sm:$0xf]
      %v4095 = vld [vmem:[%s4079 + $0x3c] sm:$0xf]
      %s4096 = scalar_lea.vmem %s16, 3
      %v4097 = vld [vmem:[%s4096] sm:$0x1]
      %v4099 = vlaneseq
      %v4100 = vshrl.u32 %v4099, 7
      %v4101 = vsub.s32 0, %v4100
      %v4102 = vrot.slane %v4097, %v4101
      %v4120 = vunpack.c.l.b16 %v4080
      %v4121 = vunpack.c.l.b16 %v4081
      %v4122 = vunpack.c.l.b16 %v4082
      %v4123 = vunpack.c.l.b16 %v4083
      %v4124 = vunpack.c.l.b16 %v4084
      %v4125 = vunpack.c.l.b16 %v4085
      %v4126 = vunpack.c.l.b16 %v4086
      %v4127 = vunpack.c.l.b16 %v4087
      %v4128 = vunpack.c.l.b16 %v4088
      %v4129 = vunpack.c.l.b16 %v4089
      %v4130 = vunpack.c.l.b16 %v4090
      %v4131 = vunpack.c.l.b16 %v4091
      %v4132 = vunpack.c.l.b16 %v4092
      %v4133 = vunpack.c.l.b16 %v4093
      %v4134 = vunpack.c.l.b16 %v4094
      %v4135 = vunpack.c.l.b16 %v4095
      %v4136 = vpack.c.b16 %v4121, %v4120
      %v4137 = vpack.c.b16 %v4123, %v4122
      %v4138 = vpack.c.b16 %v4125, %v4124
      %v4139 = vpack.c.b16 %v4127, %v4126
      %v4140 = vpack.c.b16 %v4129, %v4128
      %v4141 = vpack.c.b16 %v4131, %v4130
      %v4142 = vpack.c.b16 %v4133, %v4132
      %v4143 = vpack.c.b16 %v4135, %v4134
      %4152 = vmatprep.subr.bf16.mxu0 0
      %4153 = vmatpush1.bf16.msra.mxu0 %v4143
      %4154 = vmatprep.subr.bf16.mxu0 0
      %4155 = vmatpush1.bf16.msra.mxu0 %v4142
      %4156 = vmatprep.subr.bf16.mxu0 0
      %4157 = vmatpush1.bf16.msra.mxu0 %v4141
      %4158 = vmatprep.subr.bf16.mxu0 0
      %4159 = vmatpush1.bf16.msra.mxu0 %v4140
      %4160 = vmatprep.subr.bf16.mxu0 0
      %4161 = vmatpush1.bf16.msra.mxu0 %v4139
      %4162 = vmatprep.subr.bf16.mxu0 0
      %4163 = vmatpush1.bf16.msra.mxu0 %v4138
      %4164 = vmatprep.subr.bf16.mxu0 0
      %4165 = vmatpush1.bf16.msra.mxu0 %v4137
      %4166 = vmatprep.subr.bf16.mxu0 0
      %4167 = vmatpush1.bf16.msra.mxu0 %v4136
      %4168 = vmatprep.subr.bf16.mxu0 0
      %4169 = vmatpush2.bf16.msra.mxu0 0
      %4170 = vmatprep.subr.bf16.mxu0 0
      %4171 = vmatpush2.bf16.msra.mxu0 0
      %4172 = vmatprep.subr.bf16.mxu0 0
      %4173 = vmatpush2.bf16.msra.mxu0 0
      %4174 = vmatprep.subr.bf16.mxu0 0
      %4175 = vmatpush2.bf16.msra.mxu0 0
      %4176 = vmatprep.subr.bf16.mxu0 0
      %4177 = vmatpush2.bf16.msra.mxu0 0
      %4178 = vmatprep.subr.bf16.mxu0 0
      %4179 = vmatpush2.bf16.msra.mxu0 0
      %4180 = vmatprep.subr.bf16.mxu0 0
      %4181 = vmatpush2.bf16.msra.mxu0 0
      %4182 = vmatprep.subr.bf16.mxu0 0
      %4183 = vmatpush2.bf16.msra.mxu0 0
      %4184 = vmatprep.mubr.bf16.mxu0 0
      %4185 = vmatmul.mubr.bf16.gmra.mxu0 %v4077
      %v4186 = vpop.f32.mrf.mxu0
      %v4187 = vadd.f32 %v4102, %v4186
      %v4188 = vpop.f32.mrf.mxu0
      %v4189 = vpop.f32.mrf.mxu0
      %v4190 = vadd.f32 %v4102, %v4189
      %v4191 = vpop.f32.mrf.mxu0
      %4192 = vmatprep.mubr.bf16.mxu0 0
      %4193 = vmatmul.mubr.bf16.gmra.mxu0 %v4078
      %v4194 = vpop.f32.mrf.mxu0
      %v4195 = vadd.f32 %v4102, %v4194
      %v4196 = vpop.f32.mrf.mxu0
      %v4197 = vpop.f32.mrf.mxu0
      %v4198 = vpop.f32.mrf.mxu0
      %4199 = vdwg.mxu0
      %v4200 = vadd.f32 %v3905, %v4187
      %v4201 = vadd.f32 %v3906, %v4190
      %v4202 = vadd.f32 %v3907, %v4195
      %v4203 = vld [vmem:[%s17] sm:$0x1]
      %v4204 = vld [vmem:[%s18] sm:$0x1]
      %v4205 = vsel %vm720, %v4200, 0.0
      %4206 = vadd.xlane.f32.xlu0 %v4205
      %v4207 = vpop.xlane.xlu0 %4206
      %v4208 = vsel %vm720, %v4201, 0.0
      %4209 = vadd.xlane.f32.xlu0 %v4208
      %v4210 = vpop.xlane.xlu0 %4209
      %v4211 = vsel %vm727, %v4202, 0.0
      %4212 = vadd.xlane.f32.xlu0 %v4211
      %v4213 = vpop.xlane.xlu0 %4212
      %v4214 = vmul.f32 %v4207, %v731
      %v4215 = vmul.f32 %v4210, %v731
      %v4216 = vmul.f32 %v4213, %v731
      %v4217 = vsub.f32 %v4200, %v4214
      %v4218 = vsub.f32 %v4201, %v4215
      %v4219 = vsub.f32 %v4202, %v4216
      %v4220 = vmul.f32 %v4217, %v4217
      %v4221 = vmul.f32 %v4218, %v4218
      %v4222 = vmul.f32 %v4219, %v4219
      %v4223 = vsel %vm720, %v4220, 0.0
      %4224 = vadd.xlane.f32.xlu0 %v4223
      %v4225 = vpop.xlane.xlu0 %4224
      %v4226 = vsel %vm720, %v4221, 0.0
      %4227 = vadd.xlane.f32.xlu0 %v4226
      %v4228 = vpop.xlane.xlu0 %4227
      %v4229 = vsel %vm727, %v4222, 0.0
      %4230 = vadd.xlane.f32.xlu0 %v4229
      %v4231 = vpop.xlane.xlu0 %4230
      %v4232 = vmul.f32 %v4225, %v731
      %v4233 = vmul.f32 %v4228, %v731
      %v4234 = vmul.f32 %v4231, %v731
      %v4235 = vadd.f32 %v4232, 1e-06
      %v4236 = vadd.f32 %v4233, 1e-06
      %v4237 = vadd.f32 %v4234, 1e-06
      %v4238 = vrsqrt.pop %v4235
      %v4239 = vrsqrt.pop %v4236
      %v4240 = vrsqrt.pop %v4237
      %v4241 = vmul.f32 %v4217, %v4238
      %v4242 = vmul.f32 %v4218, %v4239
      %v4243 = vmul.f32 %v4219, %v4240
      %v4245 = vlaneseq
      %v4246 = vshrl.u32 %v4245, 7
      %v4247 = vsub.s32 0, %v4246
      %v4248 = vrot.slane %v4203, %v4247
      %v4250 = vmul.f32 %v4241, %v4248
      %v4251 = vmul.f32 %v4242, %v4248
      %v4252 = vmul.f32 %v4243, %v4248
      %v4254 = vlaneseq
      %v4255 = vshrl.u32 %v4254, 7
      %v4256 = vsub.s32 0, %v4255
      %v4257 = vrot.slane %v4204, %v4256
      %v4259 = vadd.f32 %v4250, %v4257
      %v4260 = vadd.f32 %v4251, %v4257
      %v4261 = vadd.f32 %v4252, %v4257
      %4262 = vst.msk [vmem:[%s602] sm:$0xff] %vm720, %v4259
      %4263 = vst.msk [vmem:[%s602 + $0x8] sm:$0xff] %vm720, %v4260
      %4264 = vst.msk [vmem:[%s602 + $0x10] sm:$0x1] %vm727, %v4261
      %p4265 = scmp.lt.s32.totalorder %s30, 1
      %s4266 = scalar_select %p4265, %s30, 1
      %s4267 = smul.addr %s4266, 3
      %s4268 = smul.addr %s4267, 8
      %s4269 = scalar_lea.vmem %s19, %s4268
      // Predicated region
      $region97: #{radio_forward.1} parent=95 // pred_check
        %p4270 = pneg %p452
      $region98: #{radio_forward.1} parent=95 // pred_check_branch
        %4272 = sbr.rel (%p4270) target = $region100
      $region99: #{radio_forward.1} parent=95 // pred_region
        _
      $region100: #{radio_forward.1} parent=95 // pred_fallthru
        _
    $region96: #{radio_forward.1} parent=5 // pred_fallthru
      _
    %p4273 = scmp.le.s32.totalorder 2, %s25
    // Predicated region
    $region101: #{radio_forward.1} parent=5 // pred_check
      %p4274 = pneg %p4273
    $region102: #{radio_forward.1} parent=5 // pred_check_branch
      %4276 = sbr.rel (%p4274) target = $region104
    $region103: #{radio_forward.1} parent=5 // pred_region
      %s4277 = ssub.s32 %s25, 2
      // Predicated region
      $region105: #{radio_forward.1} parent=103 // pred_check
        %p4278 = pneg %p458
      $region106: #{radio_forward.1} parent=103 // pred_check_branch
        %4280 = sbr.rel (%p4278) target = $region108
      $region107: #{radio_forward.1} parent=103 // pred_region
        %p4281 = scmp.lt.s32.totalorder %s31, 1
        %s4282 = scalar_select %p4281, %s31, 1
        %s4283 = smul.addr %s4282, 3
        %s4284 = smul.addr %s4283, 8
        %s4285 = scalar_lea.vmem %s19, %s4284
      $region108: #{radio_forward.1} parent=103 // pred_fallthru
        _
    $region104: #{radio_forward.1} parent=5 // pred_fallthru
      _
  $region6: #{radio_forward.1} parent=0 // loop_footer
    %s29 = sadd.s32 1, %s25
  $region7: #{radio_forward.1} parent=0 // loop_footer_branch
    %24 = sbr.rel target = $region3
  $region8: #{radio_forward.1} parent=0 // loop_exit
    _

</llo_original>
